<compile_context>
chip_gen: v7x
topology: tpu7x:2x2x1
jax: 0.10.0
libtpu: 0.0.40
codegen_flags: <defaults>
</compile_context>

<pallas_src>
import functools

import jax
import jax.numpy as jnp
from jax import lax
from jax.experimental import pallas as pl
from jax.experimental.pallas import tpu as pltpu


def _decoder_kernel(x_ref, wih_ref, whh_ref, b_ref, wlin_ref, blin_ref,
                    out_ref, xg_scr, hseq_scr, *, seq, batch, hidden):
    # x_ref    : (S*B, I)   f32   flattened input sequence (row t*B + b)
    # wih_ref  : (I, 4H)    f32   W_ih transposed
    # whh_ref  : (H, 4H)    f32   W_hh transposed
    # b_ref    : (1, 4H)    f32   b_ih + b_hh
    # wlin_ref : (H, O)     f32   W_lin transposed
    # blin_ref : (1, O)     f32
    # out_ref  : (S*B, O)   f32
    # scratch  : xg_scr (S*B, 4H), hseq_scr (S*B, H)
    H = hidden
    B = batch
    HI = lax.Precision.HIGHEST

    # 1) Input projection for ALL timesteps at once (one MXU matmul).
    xg_scr[...] = (
        jnp.dot(x_ref[...], wih_ref[...], precision=HI,
                preferred_element_type=jnp.float32)
        + b_ref[...])

    # Keep W_hh resident in vregs for the whole recurrence.
    whh = whh_ref[...]

    # Lane mask: lanes [2H, 3H) carry the g-gate (tanh); others are sigmoids.
    lane = lax.broadcasted_iota(jnp.int32, (B, 4 * H), 1)
    is_g = (lane >= 2 * H) & (lane < 3 * H)

    # 2) Zero initial state (PyTorch default when (h0, c0) is not supplied).
    #    h / c live purely in vregs across the unrolled recurrence.
    h = jnp.zeros((B, H), jnp.float32)
    c = jnp.zeros((B, H), jnp.float32)

    # 3) Sequential time recurrence (fully unrolled; seq is a static int).
    #    PyTorch LSTM gate order along the 4H axis: i, f, g, o.
    for t in range(seq):
        gates = xg_scr[pl.ds(t * B, B), :] + jnp.dot(
            h, whh, precision=HI, preferred_element_type=jnp.float32)
        # Two full-vreg EUP launches instead of 4 per-gate slices:
        #   sigmoid(z) = 0.5 * (tanh(0.5 * z) + 1)   (exact identity)
        sig_all = 0.5 * (jnp.tanh(0.5 * gates) + 1.0)
        tanh_all = jnp.tanh(gates)
        act = jnp.where(is_g, tanh_all, sig_all)
        i_g = act[:, 0 * H:1 * H]
        f_g = act[:, 1 * H:2 * H]
        g_g = act[:, 2 * H:3 * H]
        o_g = act[:, 3 * H:4 * H]
        c = f_g * c + i_g * g_g
        h = o_g * jnp.tanh(c)
        # Store of h_t for the output projection; off the critical path.
        hseq_scr[pl.ds(t * B, B), :] = h

    # 4) Output (Linear) projection for ALL timesteps at once (one MXU matmul),
    #    stored as a lane-dense 2-D slab.
    out_ref[...] = (
        jnp.dot(hseq_scr[...], wlin_ref[...], precision=HI,
                preferred_element_type=jnp.float32)
        + blin_ref[...])


def prepare_decoder_params(w_ih, w_hh, b_ih, b_hh, w_lin, b_lin):
    """One-time parameter repack (hoisted out of the per-call path)."""
    H = w_hh.shape[1]
    O = w_lin.shape[0]
    return (
        jnp.asarray(w_ih).T,                                   # (I, 4H)
        jnp.asarray(w_hh).T,                                   # (H, 4H)
        (jnp.asarray(b_ih) + jnp.asarray(b_hh)).reshape(1, 4 * H),
        jnp.asarray(w_lin).T,                                  # (H, O)
        jnp.asarray(b_lin).reshape(1, O),
    )


@jax.jit
def decoder_block_apply(x, params):
    """Pallas equivalent of DecoderBlock.forward for nlayers == 1.

    x: (S, B, out_dims) f32 -> returns (S, B, nuc_pair_size) f32.
    """
    # TODO(synk): nlayers > 1 stacked LSTM is not implemented; the reference
    # module's Linear(in_features=hidden_dims*nlayers) only matches the LSTM
    # output shape when nlayers == 1 anyway.
    wih_t, whh_t, bias, wlin_t, blin = params
    S, B, I = x.shape
    H = whh_t.shape[0]
    O = wlin_t.shape[1]

    x2d = x.reshape(S * B, I)                 # free layout plumbing
    kernel = functools.partial(_decoder_kernel, seq=S, batch=B, hidden=H)

    out2d = pl.pallas_call(
        kernel,
        out_shape=jax.ShapeDtypeStruct((S * B, O), jnp.float32),
        grid_spec=pltpu.PrefetchScalarGridSpec(
            num_scalar_prefetch=0,
            grid=(1,),                          # single invocation
            in_specs=[
                pl.BlockSpec((S * B, I), lambda i: (0, 0)),
                pl.BlockSpec((I, 4 * H), lambda i: (0, 0)),
                pl.BlockSpec((H, 4 * H), lambda i: (0, 0)),
                pl.BlockSpec((1, 4 * H), lambda i: (0, 0)),
                pl.BlockSpec((H, O), lambda i: (0, 0)),
                pl.BlockSpec((1, O), lambda i: (0, 0)),
            ],
            out_specs=pl.BlockSpec((S * B, O), lambda i: (0, 0)),
            scratch_shapes=[
                pltpu.VMEM((S * B, 4 * H), jnp.float32),   # x-gates for all t
                pltpu.VMEM((S * B, H), jnp.float32),       # all hidden outputs
            ],
        ),
        compiler_params=pltpu.CompilerParams(
            dimension_semantics=("arbitrary",)),
    )(x2d, wih_t, whh_t, bias, wlin_t, blin)
    return out2d.reshape(S, B, O)


def decoder_block(x, w_ih, w_hh, b_ih, b_hh, w_lin, b_lin):
    """Convenience wrapper matching the original signature."""
    return decoder_block_apply(
        x, prepare_decoder_params(w_ih, w_hh, b_ih, b_hh, w_lin, b_lin))


if __name__ == "__main__":
    # Small config consistent with DecoderBlock.__init__ / forward.
    nuc_pair_size = 16
    out_dims = 32          # LSTM input size
    hidden_dims = 32
    nlayers = 1            # forward only type-checks for nlayers == 1
    S, B = 8, 2

    key = jax.random.PRNGKey(0)
    ks = jax.random.split(key, 7)
    scale = 1.0 / float(jnp.sqrt(hidden_dims))

    x = jax.random.normal(ks[0], (S, B, out_dims), dtype=jnp.float32)
    w_ih = jax.random.uniform(ks[1], (4 * hidden_dims, out_dims), jnp.float32, -scale, scale)
    w_hh = jax.random.uniform(ks[2], (4 * hidden_dims, hidden_dims), jnp.float32, -scale, scale)
    b_ih = jax.random.uniform(ks[3], (4 * hidden_dims,), jnp.float32, -scale, scale)
    b_hh = jax.random.uniform(ks[4], (4 * hidden_dims,), jnp.float32, -scale, scale)
    w_lin = jax.random.uniform(ks[5], (nuc_pair_size, hidden_dims * nlayers), jnp.float32, -scale, scale)
    b_lin = jax.random.uniform(ks[6], (nuc_pair_size,), jnp.float32, -scale, scale)

    # Parameter repack done ONCE (not on the per-call path).
    params = prepare_decoder_params(w_ih, w_hh, b_ih, b_hh, w_lin, b_lin)
    params = jax.block_until_ready(params)

    out = decoder_block_apply(x, params)
    out = jax.block_until_ready(out)

    # Pure-JAX reference (same math as torch.nn.LSTM with zero init state + Linear).
    def ref_fn(x, w_ih, w_hh, b_ih, b_hh, w_lin, b_lin):
        H = hidden_dims
        h = jnp.zeros((B, H), jnp.float32)
        c = jnp.zeros((B, H), jnp.float32)
        hs = []
        for t in range(S):
            g = (jnp.dot(x[t], w_ih.T, precision="highest") + b_ih
                 + jnp.dot(h, w_hh.T, precision="highest") + b_hh)
            i_g = jax.nn.sigmoid(g[:, 0:H])
            f_g = jax.nn.sigmoid(g[:, H:2 * H])
            g_g = jnp.tanh(g[:, 2 * H:3 * H])
            o_g = jax.nn.sigmoid(g[:, 3 * H:4 * H])
            c = f_g * c + i_g * g_g
            h = o_g * jnp.tanh(c)
            hs.append(h)
        outs = jnp.stack(hs, axis=0)                      # (S, B, H)
        return jnp.dot(outs, w_lin.T, precision="highest") + b_lin

    ref = ref_fn(x, w_ih, w_hh, b_ih, b_hh, w_lin, b_lin)

    assert out.shape == (S, B, nuc_pair_size), out.shape
    # Tolerance: hardware tanh-based sigmoid vs exp-based reference (exact
    # identity mathematically; tiny EUP approximation differences only).
    assert jnp.allclose(out, ref, atol=5e-5, rtol=5e-5), \
        float(jnp.max(jnp.abs(out - ref)))
    print("KERNEL_OK")
</pallas_src>

<mosaic_0001>
module attributes {stable_mosaic.version = 11 : i64} {
  func.func @_decoder_kernel(%arg0: i32, %arg1: memref<16x32xf32, #tpu.memory_space<vmem>>, %arg2: memref<32x128xf32, #tpu.memory_space<vmem>>, %arg3: memref<32x128xf32, #tpu.memory_space<vmem>>, %arg4: memref<1x128xf32, #tpu.memory_space<vmem>>, %arg5: memref<32x16xf32, #tpu.memory_space<vmem>>, %arg6: memref<1x16xf32, #tpu.memory_space<vmem>>, %arg7: memref<16x16xf32, #tpu.memory_space<vmem>>, %arg8: memref<16x128xf32, #tpu.memory_space<vmem>>, %arg9: memref<16x32xf32, #tpu.memory_space<vmem>>) attributes {dimension_semantics = [#tpu.dimension_semantics<arbitrary>], iteration_bounds = array<i64: 1>, scalar_prefetch = 0 : i64, scratch_operands = 2 : i64, tpu.core_type = #tpu.core_type<tc>, window_params = [{pipeline_mode = #tpu.pipeline_mode<synchronous>, transform_indices = @transform_0, window_bounds = array<i64: 16, 32>}, {pipeline_mode = #tpu.pipeline_mode<synchronous>, transform_indices = @transform_1, window_bounds = array<i64: 32, 128>}, {pipeline_mode = #tpu.pipeline_mode<synchronous>, transform_indices = @transform_2, window_bounds = array<i64: 32, 128>}, {pipeline_mode = #tpu.pipeline_mode<synchronous>, transform_indices = @transform_3, window_bounds = array<i64: 1, 128>}, {pipeline_mode = #tpu.pipeline_mode<synchronous>, transform_indices = @transform_4, window_bounds = array<i64: 32, 16>}, {pipeline_mode = #tpu.pipeline_mode<synchronous>, transform_indices = @transform_5, window_bounds = array<i64: 1, 16>}, {pipeline_mode = #tpu.pipeline_mode<synchronous>, transform_indices = @transform_6, window_bounds = array<i64: 16, 16>}]} {
    %c0 = arith.constant 0 : index
    %c0_0 = arith.constant 0 : index
    %0 = vector.load %arg1[%c0, %c0_0] : memref<16x32xf32, #tpu.memory_space<vmem>>, vector<16x32xf32>
    %c0_1 = arith.constant 0 : index
    %c0_2 = arith.constant 0 : index
    %1 = vector.load %arg2[%c0_1, %c0_2] : memref<32x128xf32, #tpu.memory_space<vmem>>, vector<32x128xf32>
    %cst = arith.constant dense<0.000000e+00> : vector<16x128xf32>
    %2 = tpu.matmul %0, %1, %cst {dimension_numbers = #tpu.dot_dimension_numbers<[1], [0], [0], [1], [0, 0, 1, 1], [], []>, precision = #tpu.contract_precision<fp32>} : vector<16x32xf32>, vector<32x128xf32>, vector<16x128xf32> -> vector<16x128xf32>
    %c0_3 = arith.constant 0 : index
    %c0_4 = arith.constant 0 : index
    %3 = vector.load %arg4[%c0_3, %c0_4] : memref<1x128xf32, #tpu.memory_space<vmem>>, vector<1x128xf32>
    %4 = vector.broadcast %3 : vector<1x128xf32> to vector<16x128xf32>
    %5 = arith.addf %2, %4 : vector<16x128xf32>
    %c0_5 = arith.constant 0 : index
    %c0_6 = arith.constant 0 : index
    %6 = vector.load %arg8[%c0_5, %c0_6] : memref<16x128xf32, #tpu.memory_space<vmem>>, vector<16x128xf32>
    tpu.vector_store %arg8[%c0_5, %c0_6], %5 {strides = array<i32>} : memref<16x128xf32, #tpu.memory_space<vmem>>, vector<16x128xf32>,
    %c0_7 = arith.constant 0 : index
    %c0_8 = arith.constant 0 : index
    %7 = vector.load %arg3[%c0_7, %c0_8] : memref<32x128xf32, #tpu.memory_space<vmem>>, vector<32x128xf32>
    %8 = tpu.iota {dimensions = array<i32: 1>} : vector<2x128xi32>
    %c64_i32 = arith.constant 64 : i32
    %9 = vector.broadcast %c64_i32 : i32 to vector<2x128xi32>
    %10 = arith.cmpi sge, %8, %9 : vector<2x128xi32>
    %c96_i32 = arith.constant 96 : i32
    %11 = vector.broadcast %c96_i32 : i32 to vector<2x128xi32>
    %12 = arith.cmpi slt, %8, %11 : vector<2x128xi32>
    %13 = arith.andi %10, %12 : vector<2x128xi1>
    %cst_9 = arith.constant 0.000000e+00 : f32
    %14 = vector.broadcast %cst_9 : f32 to vector<2x32xf32>
    %cst_10 = arith.constant 0.000000e+00 : f32
    %15 = vector.broadcast %cst_10 : f32 to vector<2x32xf32>
    %c0_11 = arith.constant 0 : index
    %c0_12 = arith.constant 0 : index
    %16 = vector.load %arg8[%c0_11, %c0_12] : memref<16x128xf32, #tpu.memory_space<vmem>>, vector<2x128xf32>
    %cst_13 = arith.constant dense<0.000000e+00> : vector<2x128xf32>
    %17 = tpu.matmul %14, %7, %cst_13 {dimension_numbers = #tpu.dot_dimension_numbers<[1], [0], [0], [1], [0, 0, 1, 1], [], []>, precision = #tpu.contract_precision<fp32>} : vector<2x32xf32>, vector<32x128xf32>, vector<2x128xf32> -> vector<2x128xf32>
    %18 = arith.addf %16, %17 : vector<2x128xf32>
    %cst_14 = arith.constant 5.000000e-01 : f32
    %19 = vector.broadcast %cst_14 : f32 to vector<2x128xf32>
    %20 = arith.mulf %19, %18 : vector<2x128xf32>
    %21 = math.tanh %20 : vector<2x128xf32>
    %cst_15 = arith.constant 1.000000e+00 : f32
    %22 = vector.broadcast %cst_15 : f32 to vector<2x128xf32>
    %23 = arith.addf %21, %22 : vector<2x128xf32>
    %cst_16 = arith.constant 5.000000e-01 : f32
    %24 = vector.broadcast %cst_16 : f32 to vector<2x128xf32>
    %25 = arith.mulf %24, %23 : vector<2x128xf32>
    %26 = math.tanh %18 : vector<2x128xf32>
    %27 = arith.select %13, %26, %25 : vector<2x128xi1>, vector<2x128xf32>
    %28 = vector.extract_strided_slice %27 {offsets = [0, 0], sizes = [2, 32], strides = [1, 1]} : vector<2x128xf32> to vector<2x32xf32>
    %29 = vector.extract_strided_slice %27 {offsets = [0, 32], sizes = [2, 32], strides = [1, 1]} : vector<2x128xf32> to vector<2x32xf32>
    %30 = vector.extract_strided_slice %27 {offsets = [0, 64], sizes = [2, 32], strides = [1, 1]} : vector<2x128xf32> to vector<2x32xf32>
    %31 = vector.extract_strided_slice %27 {offsets = [0, 96], sizes = [2, 32], strides = [1, 1]} : vector<2x128xf32> to vector<2x32xf32>
    %32 = arith.mulf %29, %15 : vector<2x32xf32>
    %33 = arith.mulf %28, %30 : vector<2x32xf32>
    %34 = arith.addf %32, %33 : vector<2x32xf32>
    %35 = math.tanh %34 : vector<2x32xf32>
    %36 = arith.mulf %31, %35 : vector<2x32xf32>
    %c0_17 = arith.constant 0 : index
    %c0_18 = arith.constant 0 : index
    %37 = vector.load %arg9[%c0_17, %c0_18] : memref<16x32xf32, #tpu.memory_space<vmem>>, vector<2x32xf32>
    tpu.vector_store %arg9[%c0_17, %c0_18], %36 {strides = array<i32>} : memref<16x32xf32, #tpu.memory_space<vmem>>, vector<2x32xf32>,
    %c2 = arith.constant 2 : index
    %c0_19 = arith.constant 0 : index
    %38 = vector.load %arg8[%c2, %c0_19] : memref<16x128xf32, #tpu.memory_space<vmem>>, vector<2x128xf32>
    %cst_20 = arith.constant dense<0.000000e+00> : vector<2x128xf32>
    %39 = tpu.matmul %36, %7, %cst_20 {dimension_numbers = #tpu.dot_dimension_numbers<[1], [0], [0], [1], [0, 0, 1, 1], [], []>, precision = #tpu.contract_precision<fp32>} : vector<2x32xf32>, vector<32x128xf32>, vector<2x128xf32> -> vector<2x128xf32>
    %40 = arith.addf %38, %39 : vector<2x128xf32>
    %cst_21 = arith.constant 5.000000e-01 : f32
    %41 = vector.broadcast %cst_21 : f32 to vector<2x128xf32>
    %42 = arith.mulf %41, %40 : vector<2x128xf32>
    %43 = math.tanh %42 : vector<2x128xf32>
    %cst_22 = arith.constant 1.000000e+00 : f32
    %44 = vector.broadcast %cst_22 : f32 to vector<2x128xf32>
    %45 = arith.addf %43, %44 : vector<2x128xf32>
    %cst_23 = arith.constant 5.000000e-01 : f32
    %46 = vector.broadcast %cst_23 : f32 to vector<2x128xf32>
    %47 = arith.mulf %46, %45 : vector<2x128xf32>
    %48 = math.tanh %40 : vector<2x128xf32>
    %49 = arith.select %13, %48, %47 : vector<2x128xi1>, vector<2x128xf32>
    %50 = vector.extract_strided_slice %49 {offsets = [0, 0], sizes = [2, 32], strides = [1, 1]} : vector<2x128xf32> to vector<2x32xf32>
    %51 = vector.extract_strided_slice %49 {offsets = [0, 32], sizes = [2, 32], strides = [1, 1]} : vector<2x128xf32> to vector<2x32xf32>
    %52 = vector.extract_strided_slice %49 {offsets = [0, 64], sizes = [2, 32], strides = [1, 1]} : vector<2x128xf32> to vector<2x32xf32>
    %53 = vector.extract_strided_slice %49 {offsets = [0, 96], sizes = [2, 32], strides = [1, 1]} : vector<2x128xf32> to vector<2x32xf32>
    %54 = arith.mulf %51, %34 : vector<2x32xf32>
    %55 = arith.mulf %50, %52 : vector<2x32xf32>
    %56 = arith.addf %54, %55 : vector<2x32xf32>
    %57 = math.tanh %56 : vector<2x32xf32>
    %58 = arith.mulf %53, %57 : vector<2x32xf32>
    %c2_24 = arith.constant 2 : index
    %c0_25 = arith.constant 0 : index
    %59 = vector.load %arg9[%c2_24, %c0_25] : memref<16x32xf32, #tpu.memory_space<vmem>>, vector<2x32xf32>
    tpu.vector_store %arg9[%c2_24, %c0_25], %58 {strides = array<i32>} : memref<16x32xf32, #tpu.memory_space<vmem>>, vector<2x32xf32>,
    %c4 = arith.constant 4 : index
    %c0_26 = arith.constant 0 : index
    %60 = vector.load %arg8[%c4, %c0_26] : memref<16x128xf32, #tpu.memory_space<vmem>>, vector<2x128xf32>
    %cst_27 = arith.constant dense<0.000000e+00> : vector<2x128xf32>
    %61 = tpu.matmul %58, %7, %cst_27 {dimension_numbers = #tpu.dot_dimension_numbers<[1], [0], [0], [1], [0, 0, 1, 1], [], []>, precision = #tpu.contract_precision<fp32>} : vector<2x32xf32>, vector<32x128xf32>, vector<2x128xf32> -> vector<2x128xf32>
    %62 = arith.addf %60, %61 : vector<2x128xf32>
    %cst_28 = arith.constant 5.000000e-01 : f32
    %63 = vector.broadcast %cst_28 : f32 to vector<2x128xf32>
    %64 = arith.mulf %63, %62 : vector<2x128xf32>
    %65 = math.tanh %64 : vector<2x128xf32>
    %cst_29 = arith.constant 1.000000e+00 : f32
    %66 = vector.broadcast %cst_29 : f32 to vector<2x128xf32>
    %67 = arith.addf %65, %66 : vector<2x128xf32>
    %cst_30 = arith.constant 5.000000e-01 : f32
    %68 = vector.broadcast %cst_30 : f32 to vector<2x128xf32>
    %69 = arith.mulf %68, %67 : vector<2x128xf32>
    %70 = math.tanh %62 : vector<2x128xf32>
    %71 = arith.select %13, %70, %69 : vector<2x128xi1>, vector<2x128xf32>
    %72 = vector.extract_strided_slice %71 {offsets = [0, 0], sizes = [2, 32], strides = [1, 1]} : vector<2x128xf32> to vector<2x32xf32>
    %73 = vector.extract_strided_slice %71 {offsets = [0, 32], sizes = [2, 32], strides = [1, 1]} : vector<2x128xf32> to vector<2x32xf32>
    %74 = vector.extract_strided_slice %71 {offsets = [0, 64], sizes = [2, 32], strides = [1, 1]} : vector<2x128xf32> to vector<2x32xf32>
    %75 = vector.extract_strided_slice %71 {offsets = [0, 96], sizes = [2, 32], strides = [1, 1]} : vector<2x128xf32> to vector<2x32xf32>
    %76 = arith.mulf %73, %56 : vector<2x32xf32>
    %77 = arith.mulf %72, %74 : vector<2x32xf32>
    %78 = arith.addf %76, %77 : vector<2x32xf32>
    %79 = math.tanh %78 : vector<2x32xf32>
    %80 = arith.mulf %75, %79 : vector<2x32xf32>
    %c4_31 = arith.constant 4 : index
    %c0_32 = arith.constant 0 : index
    %81 = vector.load %arg9[%c4_31, %c0_32] : memref<16x32xf32, #tpu.memory_space<vmem>>, vector<2x32xf32>
    tpu.vector_store %arg9[%c4_31, %c0_32], %80 {strides = array<i32>} : memref<16x32xf32, #tpu.memory_space<vmem>>, vector<2x32xf32>,
    %c6 = arith.constant 6 : index
    %c0_33 = arith.constant 0 : index
    %82 = vector.load %arg8[%c6, %c0_33] : memref<16x128xf32, #tpu.memory_space<vmem>>, vector<2x128xf32>
    %cst_34 = arith.constant dense<0.000000e+00> : vector<2x128xf32>
    %83 = tpu.matmul %80, %7, %cst_34 {dimension_numbers = #tpu.dot_dimension_numbers<[1], [0], [0], [1], [0, 0, 1, 1], [], []>, precision = #tpu.contract_precision<fp32>} : vector<2x32xf32>, vector<32x128xf32>, vector<2x128xf32> -> vector<2x128xf32>
    %84 = arith.addf %82, %83 : vector<2x128xf32>
    %cst_35 = arith.constant 5.000000e-01 : f32
    %85 = vector.broadcast %cst_35 : f32 to vector<2x128xf32>
    %86 = arith.mulf %85, %84 : vector<2x128xf32>
    %87 = math.tanh %86 : vector<2x128xf32>
    %cst_36 = arith.constant 1.000000e+00 : f32
    %88 = vector.broadcast %cst_36 : f32 to vector<2x128xf32>
    %89 = arith.addf %87, %88 : vector<2x128xf32>
    %cst_37 = arith.constant 5.000000e-01 : f32
    %90 = vector.broadcast %cst_37 : f32 to vector<2x128xf32>
    %91 = arith.mulf %90, %89 : vector<2x128xf32>
    %92 = math.tanh %84 : vector<2x128xf32>
    %93 = arith.select %13, %92, %91 : vector<2x128xi1>, vector<2x128xf32>
    %94 = vector.extract_strided_slice %93 {offsets = [0, 0], sizes = [2, 32], strides = [1, 1]} : vector<2x128xf32> to vector<2x32xf32>
    %95 = vector.extract_strided_slice %93 {offsets = [0, 32], sizes = [2, 32], strides = [1, 1]} : vector<2x128xf32> to vector<2x32xf32>
    %96 = vector.extract_strided_slice %93 {offsets = [0, 64], sizes = [2, 32], strides = [1, 1]} : vector<2x128xf32> to vector<2x32xf32>
    %97 = vector.extract_strided_slice %93 {offsets = [0, 96], sizes = [2, 32], strides = [1, 1]} : vector<2x128xf32> to vector<2x32xf32>
    %98 = arith.mulf %95, %78 : vector<2x32xf32>
    %99 = arith.mulf %94, %96 : vector<2x32xf32>
    %100 = arith.addf %98, %99 : vector<2x32xf32>
    %101 = math.tanh %100 : vector<2x32xf32>
    %102 = arith.mulf %97, %101 : vector<2x32xf32>
    %c6_38 = arith.constant 6 : index
    %c0_39 = arith.constant 0 : index
    %103 = vector.load %arg9[%c6_38, %c0_39] : memref<16x32xf32, #tpu.memory_space<vmem>>, vector<2x32xf32>
    tpu.vector_store %arg9[%c6_38, %c0_39], %102 {strides = array<i32>} : memref<16x32xf32, #tpu.memory_space<vmem>>, vector<2x32xf32>,
    %c8 = arith.constant 8 : index
    %c0_40 = arith.constant 0 : index
    %104 = vector.load %arg8[%c8, %c0_40] : memref<16x128xf32, #tpu.memory_space<vmem>>, vector<2x128xf32>
    %cst_41 = arith.constant dense<0.000000e+00> : vector<2x128xf32>
    %105 = tpu.matmul %102, %7, %cst_41 {dimension_numbers = #tpu.dot_dimension_numbers<[1], [0], [0], [1], [0, 0, 1, 1], [], []>, precision = #tpu.contract_precision<fp32>} : vector<2x32xf32>, vector<32x128xf32>, vector<2x128xf32> -> vector<2x128xf32>
    %106 = arith.addf %104, %105 : vector<2x128xf32>
    %cst_42 = arith.constant 5.000000e-01 : f32
    %107 = vector.broadcast %cst_42 : f32 to vector<2x128xf32>
    %108 = arith.mulf %107, %106 : vector<2x128xf32>
    %109 = math.tanh %108 : vector<2x128xf32>
    %cst_43 = arith.constant 1.000000e+00 : f32
    %110 = vector.broadcast %cst_43 : f32 to vector<2x128xf32>
    %111 = arith.addf %109, %110 : vector<2x128xf32>
    %cst_44 = arith.constant 5.000000e-01 : f32
    %112 = vector.broadcast %cst_44 : f32 to vector<2x128xf32>
    %113 = arith.mulf %112, %111 : vector<2x128xf32>
    %114 = math.tanh %106 : vector<2x128xf32>
    %115 = arith.select %13, %114, %113 : vector<2x128xi1>, vector<2x128xf32>
    %116 = vector.extract_strided_slice %115 {offsets = [0, 0], sizes = [2, 32], strides = [1, 1]} : vector<2x128xf32> to vector<2x32xf32>
    %117 = vector.extract_strided_slice %115 {offsets = [0, 32], sizes = [2, 32], strides = [1, 1]} : vector<2x128xf32> to vector<2x32xf32>
    %118 = vector.extract_strided_slice %115 {offsets = [0, 64], sizes = [2, 32], strides = [1, 1]} : vector<2x128xf32> to vector<2x32xf32>
    %119 = vector.extract_strided_slice %115 {offsets = [0, 96], sizes = [2, 32], strides = [1, 1]} : vector<2x128xf32> to vector<2x32xf32>
    %120 = arith.mulf %117, %100 : vector<2x32xf32>
    %121 = arith.mulf %116, %118 : vector<2x32xf32>
    %122 = arith.addf %120, %121 : vector<2x32xf32>
    %123 = math.tanh %122 : vector<2x32xf32>
    %124 = arith.mulf %119, %123 : vector<2x32xf32>
    %c8_45 = arith.constant 8 : index
    %c0_46 = arith.constant 0 : index
    %125 = vector.load %arg9[%c8_45, %c0_46] : memref<16x32xf32, #tpu.memory_space<vmem>>, vector<2x32xf32>
    tpu.vector_store %arg9[%c8_45, %c0_46], %124 {strides = array<i32>} : memref<16x32xf32, #tpu.memory_space<vmem>>, vector<2x32xf32>,
    %c10 = arith.constant 10 : index
    %c0_47 = arith.constant 0 : index
    %126 = vector.load %arg8[%c10, %c0_47] : memref<16x128xf32, #tpu.memory_space<vmem>>, vector<2x128xf32>
    %cst_48 = arith.constant dense<0.000000e+00> : vector<2x128xf32>
    %127 = tpu.matmul %124, %7, %cst_48 {dimension_numbers = #tpu.dot_dimension_numbers<[1], [0], [0], [1], [0, 0, 1, 1], [], []>, precision = #tpu.contract_precision<fp32>} : vector<2x32xf32>, vector<32x128xf32>, vector<2x128xf32> -> vector<2x128xf32>
    %128 = arith.addf %126, %127 : vector<2x128xf32>
    %cst_49 = arith.constant 5.000000e-01 : f32
    %129 = vector.broadcast %cst_49 : f32 to vector<2x128xf32>
    %130 = arith.mulf %129, %128 : vector<2x128xf32>
    %131 = math.tanh %130 : vector<2x128xf32>
    %cst_50 = arith.constant 1.000000e+00 : f32
    %132 = vector.broadcast %cst_50 : f32 to vector<2x128xf32>
    %133 = arith.addf %131, %132 : vector<2x128xf32>
    %cst_51 = arith.constant 5.000000e-01 : f32
    %134 = vector.broadcast %cst_51 : f32 to vector<2x128xf32>
    %135 = arith.mulf %134, %133 : vector<2x128xf32>
    %136 = math.tanh %128 : vector<2x128xf32>
    %137 = arith.select %13, %136, %135 : vector<2x128xi1>, vector<2x128xf32>
    %138 = vector.extract_strided_slice %137 {offsets = [0, 0], sizes = [2, 32], strides = [1, 1]} : vector<2x128xf32> to vector<2x32xf32>
    %139 = vector.extract_strided_slice %137 {offsets = [0, 32], sizes = [2, 32], strides = [1, 1]} : vector<2x128xf32> to vector<2x32xf32>
    %140 = vector.extract_strided_slice %137 {offsets = [0, 64], sizes = [2, 32], strides = [1, 1]} : vector<2x128xf32> to vector<2x32xf32>
    %141 = vector.extract_strided_slice %137 {offsets = [0, 96], sizes = [2, 32], strides = [1, 1]} : vector<2x128xf32> to vector<2x32xf32>
    %142 = arith.mulf %139, %122 : vector<2x32xf32>
    %143 = arith.mulf %138, %140 : vector<2x32xf32>
    %144 = arith.addf %142, %143 : vector<2x32xf32>
    %145 = math.tanh %144 : vector<2x32xf32>
    %146 = arith.mulf %141, %145 : vector<2x32xf32>
    %c10_52 = arith.constant 10 : index
    %c0_53 = arith.constant 0 : index
    %147 = vector.load %arg9[%c10_52, %c0_53] : memref<16x32xf32, #tpu.memory_space<vmem>>, vector<2x32xf32>
    tpu.vector_store %arg9[%c10_52, %c0_53], %146 {strides = array<i32>} : memref<16x32xf32, #tpu.memory_space<vmem>>, vector<2x32xf32>,
    %c12 = arith.constant 12 : index
    %c0_54 = arith.constant 0 : index
    %148 = vector.load %arg8[%c12, %c0_54] : memref<16x128xf32, #tpu.memory_space<vmem>>, vector<2x128xf32>
    %cst_55 = arith.constant dense<0.000000e+00> : vector<2x128xf32>
    %149 = tpu.matmul %146, %7, %cst_55 {dimension_numbers = #tpu.dot_dimension_numbers<[1], [0], [0], [1], [0, 0, 1, 1], [], []>, precision = #tpu.contract_precision<fp32>} : vector<2x32xf32>, vector<32x128xf32>, vector<2x128xf32> -> vector<2x128xf32>
    %150 = arith.addf %148, %149 : vector<2x128xf32>
    %cst_56 = arith.constant 5.000000e-01 : f32
    %151 = vector.broadcast %cst_56 : f32 to vector<2x128xf32>
    %152 = arith.mulf %151, %150 : vector<2x128xf32>
    %153 = math.tanh %152 : vector<2x128xf32>
    %cst_57 = arith.constant 1.000000e+00 : f32
    %154 = vector.broadcast %cst_57 : f32 to vector<2x128xf32>
    %155 = arith.addf %153, %154 : vector<2x128xf32>
    %cst_58 = arith.constant 5.000000e-01 : f32
    %156 = vector.broadcast %cst_58 : f32 to vector<2x128xf32>
    %157 = arith.mulf %156, %155 : vector<2x128xf32>
    %158 = math.tanh %150 : vector<2x128xf32>
    %159 = arith.select %13, %158, %157 : vector<2x128xi1>, vector<2x128xf32>
    %160 = vector.extract_strided_slice %159 {offsets = [0, 0], sizes = [2, 32], strides = [1, 1]} : vector<2x128xf32> to vector<2x32xf32>
    %161 = vector.extract_strided_slice %159 {offsets = [0, 32], sizes = [2, 32], strides = [1, 1]} : vector<2x128xf32> to vector<2x32xf32>
    %162 = vector.extract_strided_slice %159 {offsets = [0, 64], sizes = [2, 32], strides = [1, 1]} : vector<2x128xf32> to vector<2x32xf32>
    %163 = vector.extract_strided_slice %159 {offsets = [0, 96], sizes = [2, 32], strides = [1, 1]} : vector<2x128xf32> to vector<2x32xf32>
    %164 = arith.mulf %161, %144 : vector<2x32xf32>
    %165 = arith.mulf %160, %162 : vector<2x32xf32>
    %166 = arith.addf %164, %165 : vector<2x32xf32>
    %167 = math.tanh %166 : vector<2x32xf32>
    %168 = arith.mulf %163, %167 : vector<2x32xf32>
    %c12_59 = arith.constant 12 : index
    %c0_60 = arith.constant 0 : index
    %169 = vector.load %arg9[%c12_59, %c0_60] : memref<16x32xf32, #tpu.memory_space<vmem>>, vector<2x32xf32>
    tpu.vector_store %arg9[%c12_59, %c0_60], %168 {strides = array<i32>} : memref<16x32xf32, #tpu.memory_space<vmem>>, vector<2x32xf32>,
    %c14 = arith.constant 14 : index
    %c0_61 = arith.constant 0 : index
    %170 = vector.load %arg8[%c14, %c0_61] : memref<16x128xf32, #tpu.memory_space<vmem>>, vector<2x128xf32>
    %cst_62 = arith.constant dense<0.000000e+00> : vector<2x128xf32>
    %171 = tpu.matmul %168, %7, %cst_62 {dimension_numbers = #tpu.dot_dimension_numbers<[1], [0], [0], [1], [0, 0, 1, 1], [], []>, precision = #tpu.contract_precision<fp32>} : vector<2x32xf32>, vector<32x128xf32>, vector<2x128xf32> -> vector<2x128xf32>
    %172 = arith.addf %170, %171 : vector<2x128xf32>
    %cst_63 = arith.constant 5.000000e-01 : f32
    %173 = vector.broadcast %cst_63 : f32 to vector<2x128xf32>
    %174 = arith.mulf %173, %172 : vector<2x128xf32>
    %175 = math.tanh %174 : vector<2x128xf32>
    %cst_64 = arith.constant 1.000000e+00 : f32
    %176 = vector.broadcast %cst_64 : f32 to vector<2x128xf32>
    %177 = arith.addf %175, %176 : vector<2x128xf32>
    %cst_65 = arith.constant 5.000000e-01 : f32
    %178 = vector.broadcast %cst_65 : f32 to vector<2x128xf32>
    %179 = arith.mulf %178, %177 : vector<2x128xf32>
    %180 = math.tanh %172 : vector<2x128xf32>
    %181 = arith.select %13, %180, %179 : vector<2x128xi1>, vector<2x128xf32>
    %182 = vector.extract_strided_slice %181 {offsets = [0, 0], sizes = [2, 32], strides = [1, 1]} : vector<2x128xf32> to vector<2x32xf32>
    %183 = vector.extract_strided_slice %181 {offsets = [0, 32], sizes = [2, 32], strides = [1, 1]} : vector<2x128xf32> to vector<2x32xf32>
    %184 = vector.extract_strided_slice %181 {offsets = [0, 64], sizes = [2, 32], strides = [1, 1]} : vector<2x128xf32> to vector<2x32xf32>
    %185 = vector.extract_strided_slice %181 {offsets = [0, 96], sizes = [2, 32], strides = [1, 1]} : vector<2x128xf32> to vector<2x32xf32>
    %186 = arith.mulf %183, %166 : vector<2x32xf32>
    %187 = arith.mulf %182, %184 : vector<2x32xf32>
    %188 = arith.addf %186, %187 : vector<2x32xf32>
    %189 = math.tanh %188 : vector<2x32xf32>
    %190 = arith.mulf %185, %189 : vector<2x32xf32>
    %c14_66 = arith.constant 14 : index
    %c0_67 = arith.constant 0 : index
    %191 = vector.load %arg9[%c14_66, %c0_67] : memref<16x32xf32, #tpu.memory_space<vmem>>, vector<2x32xf32>
    tpu.vector_store %arg9[%c14_66, %c0_67], %190 {strides = array<i32>} : memref<16x32xf32, #tpu.memory_space<vmem>>, vector<2x32xf32>,
    %c0_68 = arith.constant 0 : index
    %c0_69 = arith.constant 0 : index
    %192 = vector.load %arg9[%c0_68, %c0_69] : memref<16x32xf32, #tpu.memory_space<vmem>>, vector<16x32xf32>
    %c0_70 = arith.constant 0 : index
    %c0_71 = arith.constant 0 : index
    %193 = vector.load %arg5[%c0_70, %c0_71] : memref<32x16xf32, #tpu.memory_space<vmem>>, vector<32x16xf32>
    %cst_72 = arith.constant dense<0.000000e+00> : vector<16x16xf32>
    %194 = tpu.matmul %192, %193, %cst_72 {dimension_numbers = #tpu.dot_dimension_numbers<[1], [0], [0], [1], [0, 0, 1, 1], [], []>, precision = #tpu.contract_precision<fp32>} : vector<16x32xf32>, vector<32x16xf32>, vector<16x16xf32> -> vector<16x16xf32>
    %c0_73 = arith.constant 0 : index
    %c0_74 = arith.constant 0 : index
    %195 = vector.load %arg6[%c0_73, %c0_74] : memref<1x16xf32, #tpu.memory_space<vmem>>, vector<1x16xf32>
    %196 = vector.broadcast %195 : vector<1x16xf32> to vector<16x16xf32>
    %197 = arith.addf %194, %196 : vector<16x16xf32>
    %c0_75 = arith.constant 0 : index
    %c0_76 = arith.constant 0 : index
    %198 = vector.load %arg7[%c0_75, %c0_76] : memref<16x16xf32, #tpu.memory_space<vmem>>, vector<16x16xf32>
    tpu.vector_store %arg7[%c0_75, %c0_76], %197 {strides = array<i32>} : memref<16x16xf32, #tpu.memory_space<vmem>>, vector<16x16xf32>,
    return
  }
  func.func @transform_0(%arg0: i32) -> (i32, i32) {
    %c0_i32 = arith.constant 0 : i32
    %c0_i32_0 = arith.constant 0 : i32
    %c0_i32_1 = arith.constant 0 : i32
    return %c0_i32, %c0_i32_0 : i32, i32
  }
  func.func @transform_1(%arg0: i32) -> (i32, i32) {
    %c0_i32 = arith.constant 0 : i32
    %c0_i32_0 = arith.constant 0 : i32
    %c0_i32_1 = arith.constant 0 : i32
    return %c0_i32, %c0_i32_0 : i32, i32
  }
  func.func @transform_2(%arg0: i32) -> (i32, i32) {
    %c0_i32 = arith.constant 0 : i32
    %c0_i32_0 = arith.constant 0 : i32
    %c0_i32_1 = arith.constant 0 : i32
    return %c0_i32, %c0_i32_0 : i32, i32
  }
  func.func @transform_3(%arg0: i32) -> (i32, i32) {
    %c0_i32 = arith.constant 0 : i32
    %c0_i32_0 = arith.constant 0 : i32
    %c0_i32_1 = arith.constant 0 : i32
    return %c0_i32, %c0_i32_0 : i32, i32
  }
  func.func @transform_4(%arg0: i32) -> (i32, i32) {
    %c0_i32 = arith.constant 0 : i32
    %c0_i32_0 = arith.constant 0 : i32
    %c0_i32_1 = arith.constant 0 : i32
    return %c0_i32, %c0_i32_0 : i32, i32
  }
  func.func @transform_5(%arg0: i32) -> (i32, i32) {
    %c0_i32 = arith.constant 0 : i32
    %c0_i32_0 = arith.constant 0 : i32
    %c0_i32_1 = arith.constant 0 : i32
    return %c0_i32, %c0_i32_0 : i32, i32
  }
  func.func @transform_6(%arg0: i32) -> (i32, i32) {
    %c0_i32 = arith.constant 0 : i32
    %c0_i32_0 = arith.constant 0 : i32
    %c0_i32_1 = arith.constant 0 : i32
    return %c0_i32, %c0_i32_0 : i32, i32
  }
}

</mosaic_0001>

<llo_original>
// kernel: decoder_block_apply.1
$region0: #{decoder_block_apply.1}
  #allocation0 [shape = 'u32[]', space=smem, size = 0x4, offset = 0x4, fixed_abs, tag = 'smem constant byte address 0x4 - core index']
  #allocation1 [shape = 'u32[144,128]{1,0:T(1,128)}', space=vmem, size = 0x12000, scoped, tag = 'internal scratch']
  #allocation2 [shape = 'f32[16,128]{1,0:T(8,128)}', space=vmem, size = 0x2000, scoped, tag = 'scratch operand']
  #allocation3 [shape = 'f32[16,32]{1,0:T(8,128)}', space=vmem, size = 0x2000, scoped, tag = 'scratch operand']
  %s0 = inlined_call_operand.vmem [shape: f32[16,32], index: 0, kind: input, shape index: {}]
  %s1 = inlined_call_operand.vmem [shape: f32[32,128], index: 1, kind: input, shape index: {}]
  %s2 = inlined_call_operand.hbm [shape: f32[32,128], index: 2, kind: input, shape index: {}]
  %s3 = inlined_call_operand.vmem [shape: f32[1,128], index: 3, kind: input, shape index: {}]
  %s4 = inlined_call_operand.vmem [shape: f32[32,16], index: 4, kind: input, shape index: {}]
  %s5 = inlined_call_operand.vmem [shape: f32[1,16], index: 5, kind: input, shape index: {}]
  %s6 = inlined_call_operand.hbm [shape: f32[16,16], index: 6, kind: output, shape index: {}]
  %s7 = sld [smem:[#allocation0]]
  $region38: #{decoder_block_apply.1} parent=0
    _
  %s9 = ssub.s32 1, %s7
  %s10 = scalar_select 0, %s9, %s7
  $region1: #{decoder_block_apply.1} parent=0
    #allocation4 [shape = 'u8[16384]{0}', space=vmem, size = 0x4000, scoped, tag = 'input window, operand 2, single buffered']
    #allocation5 [shape = 's32[1]{0}', space=sflag, size = 0x4, scoped, tag = 'scoped memory for decoder_block_apply.1']
    #allocation6 [shape = 's32[1]{0}', space=sflag, size = 0x4, scoped, tag = 'scoped memory for decoder_block_apply.1']
    #allocation7 [shape = 'u8[8192]{0}', space=vmem, size = 0x2000, scoped, tag = 'output window, operand 0, single buffered']
    %11 = vsyncpa [#allocation5], 0
    %12 = vsyncpa [#allocation6], 0
    // Predicated region
    $region2: #{decoder_block_apply.1} parent=1 // pred_check
      _
    $region3: #{decoder_block_apply.1} parent=1 // pred_check_branch
      %14 = sbr.rel (0) target = $region5
    $region4: #{decoder_block_apply.1} parent=1 // pred_region
      _
    $region5: #{decoder_block_apply.1} parent=1 // pred_fallthru
      _
    // Predicated region
    $region6: #{decoder_block_apply.1} parent=1 // pred_check
      _
    $region7: #{decoder_block_apply.1} parent=1 // pred_check_branch
      %16 = sbr.rel (0) target = $region9
    $region8: #{decoder_block_apply.1} parent=1 // pred_region
      _
    $region9: #{decoder_block_apply.1} parent=1 // pred_fallthru
      _
    // Predicated region
    $region10: #{decoder_block_apply.1} parent=1 // pred_check
      _
    $region11: #{decoder_block_apply.1} parent=1 // pred_check_branch
      %18 = sbr.rel (0) target = $region13
    $region12: #{decoder_block_apply.1} parent=1 // pred_region
      %s20 = ssub.s32 512, 512
      %21 = vsyncadd [#allocation5], %s20
      %s22 = sshll.u32 [#allocation4], 4
      %s23 = int_to_ptr.vmem [resolvable:$true] %s22
      %28 = dma.hbm_to_vmem [thread:$0]  %s2, 512, %s23, [#allocation5], 128, 128, 8
    $region13: #{decoder_block_apply.1} parent=1 // pred_fallthru
      _
    // Predicated region
    $region14: #{decoder_block_apply.1} parent=1 // pred_check
      _
    $region15: #{decoder_block_apply.1} parent=1 // pred_check_branch
      %30 = sbr.rel (0) target = $region17
    $region16: #{decoder_block_apply.1} parent=1 // pred_region
      _
    $region17: #{decoder_block_apply.1} parent=1 // pred_fallthru
      _
    // Predicated region
    $region18: #{decoder_block_apply.1} parent=1 // pred_check
      _
    $region19: #{decoder_block_apply.1} parent=1 // pred_check_branch
      %32 = sbr.rel (0) target = $region21
    $region20: #{decoder_block_apply.1} parent=1 // pred_region
      _
    $region21: #{decoder_block_apply.1} parent=1 // pred_fallthru
      _
    // Predicated region
    $region22: #{decoder_block_apply.1} parent=1 // pred_check
      _
    $region23: #{decoder_block_apply.1} parent=1 // pred_check_branch
      %34 = sbr.rel (0) target = $region25
    $region24: #{decoder_block_apply.1} parent=1 // pred_region
      _
    $region25: #{decoder_block_apply.1} parent=1 // pred_fallthru
      _
    // Predicated region
    $region26: #{decoder_block_apply.1} parent=1 // pred_check
      _
    $region27: #{decoder_block_apply.1} parent=1 // pred_check_branch
      %36 = sbr.rel (0) target = $region29
    $region28: #{decoder_block_apply.1} parent=1 // pred_region
      %37 = dma.done [#allocation5], 512
    $region29: #{decoder_block_apply.1} parent=1 // pred_fallthru
      _
    %v38 = vld [vmem:[%s0] sm:$0xff]
    %v39 = vld [vmem:[%s0 + $0x8] sm:$0xff]
    %v40 = vld [vmem:[%s1] sm:$0xff]
    %v41 = vld [vmem:[%s1 + $0x8] sm:$0xff]
    %v42 = vld [vmem:[%s1 + $0x10] sm:$0xff]
    %v43 = vld [vmem:[%s1 + $0x18] sm:$0xff]
    %v44 = vld [vmem:[%s3] sm:$0x1]
    %v46 = vlaneseq
    %v47 = vshrl.u32 %v46, 7
    %v48 = vsub.s32 0, %v47
    %v49 = vrot.slane %v44, %v48
    %vm51 = vcmask 261120
    %v53 = vsel %vm51, %v38, 0
    %v56 = vsel %vm51, %v39, 0
    %58 = vmatprep.subr.mxu0 0.0
    %v59 = vand.u32 %v40, 4294901760
    %60 = vmatpush1.msra.mxu0 %v59
    %61 = vmatprep.subr.mxu0 0.0
    %v62 = vand.u32 %v41, 4294901760
    %63 = vmatpush1.msra.mxu0 %v62
    %64 = vmatprep.subr.mxu0 0.0
    %v65 = vand.u32 %v42, 4294901760
    %66 = vmatpush1.msra.mxu0 %v65
    %67 = vmatprep.subr.mxu0 0.0
    %v68 = vand.u32 %v43, 4294901760
    %69 = vmatpush1.msra.mxu0 %v68
    %70 = vmatprep.subr.mxu0 0.0
    %71 = vmatpush1.msra.mxu0 0.0
    %72 = vmatprep.subr.mxu0 0.0
    %73 = vmatpush1.msra.mxu0 0.0
    %74 = vmatprep.subr.mxu0 0.0
    %75 = vmatpush1.msra.mxu0 0.0
    %76 = vmatprep.subr.mxu0 0.0
    %77 = vmatpush1.msra.mxu0 0.0
    %78 = vmatprep.subr.mxu0 0.0
    %79 = vmatpush1.msra.mxu0 0.0
    %80 = vmatprep.subr.mxu0 0.0
    %81 = vmatpush1.msra.mxu0 0.0
    %82 = vmatprep.subr.mxu0 0.0
    %83 = vmatpush1.msra.mxu0 0.0
    %84 = vmatprep.subr.mxu0 0.0
    %85 = vmatpush1.msra.mxu0 0.0
    %86 = vmatprep.subr.mxu0 0.0
    %87 = vmatpush1.msra.mxu0 0.0
    %88 = vmatprep.subr.mxu0 0.0
    %89 = vmatpush1.msra.mxu0 0.0
    %90 = vmatprep.subr.mxu0 0.0
    %91 = vmatpush1.msra.mxu0 0.0
    %92 = vmatprep.subr.mxu0 0.0
    %93 = vmatpush1.msra.mxu0 0.0
    %94 = vmatprep.subr.mxu0 0.0
    %95 = vmatpush1.msra.mxu0 0.0
    %96 = vmatprep.subr.mxu0 0.0
    %97 = vmatpush1.msra.mxu0 0.0
    %98 = vmatprep.subr.mxu0 0.0
    %99 = vmatpush1.msra.mxu0 0.0
    %100 = vmatprep.subr.mxu0 0.0
    %101 = vmatpush1.msra.mxu0 0.0
    %102 = vmatprep.subr.mxu0 0.0
    %103 = vmatpush1.msra.mxu0 0.0
    %104 = vmatprep.subr.mxu0 0.0
    %105 = vmatpush1.msra.mxu0 0.0
    %106 = vmatprep.subr.mxu0 0.0
    %107 = vmatpush1.msra.mxu0 0.0
    %108 = vmatprep.subr.mxu0 0.0
    %109 = vmatpush1.msra.mxu0 0.0
    %110 = vmatprep.subr.mxu0 0.0
    %111 = vmatpush1.msra.mxu0 0.0
    %112 = vmatprep.subr.mxu0 0.0
    %113 = vmatpush1.msra.mxu0 0.0
    %114 = vmatprep.subr.mxu0 0.0
    %115 = vmatpush1.msra.mxu0 0.0
    %116 = vmatprep.subr.mxu0 0.0
    %117 = vmatpush1.msra.mxu0 0.0
    %118 = vmatprep.subr.mxu0 0.0
    %119 = vmatpush1.msra.mxu0 0.0
    %120 = vmatprep.subr.mxu0 0.0
    %121 = vmatpush1.msra.mxu0 0.0
    %122 = vmatprep.subr.mxu0 0.0
    %123 = vmatpush1.msra.mxu0 0.0
    %124 = vmatprep.subr.mxu0 0.0
    %125 = vmatpush1.msra.mxu0 0.0
    %126 = vmatprep.mubr.f32.mxu0 0.0
    %v127 = vand.u32 %v53, 4294901760
    %v128 = vsub.f32 %v53, %v127
    %v129 = vand.u32 %v128, 4294901760
    %v130 = vsub.f32 %v128, %v129
    %v131 = vand.u32 %v130, 4294901760
    %132 = vmatmul.mubr.f32.gmra.mrb[0].mxu0 %v131
    %v133 = vpop.f32.mrb[0].mxu0
    %v134 = vadd.f32 %v49, %v133
    %v135 = vpop.f32.mrb[0].mxu0
    %136 = vmatprep.mubr.f32.mxu0 0.0
    %v137 = vand.u32 %v56, 4294901760
    %v138 = vsub.f32 %v56, %v137
    %v139 = vand.u32 %v138, 4294901760
    %v140 = vsub.f32 %v138, %v139
    %v141 = vand.u32 %v140, 4294901760
    %142 = vmatmul.mubr.f32.gmra.mrb[0].mxu0 %v141
    %v143 = vpop.f32.mrb[0].mxu0
    %v144 = vadd.f32 %v49, %v143
    %v145 = vpop.f32.mrb[0].mxu0
    %146 = vdwg.mxu0
    %147 = vmatprep.subr.mxu0 0.0
    %v148 = vand.u32 %v40, 4294901760
    %v149 = vsub.f32 %v40, %v148
    %v150 = vand.u32 %v149, 4294901760
    %v151 = vsub.f32 %v149, %v150
    %v152 = vand.u32 %v151, 4294901760
    %153 = vmatpush1.msra.mxu0 %v152
    %154 = vmatprep.subr.mxu0 0.0
    %v155 = vand.u32 %v41, 4294901760
    %v156 = vsub.f32 %v41, %v155
    %v157 = vand.u32 %v156, 4294901760
    %v158 = vsub.f32 %v156, %v157
    %v159 = vand.u32 %v158, 4294901760
    %160 = vmatpush1.msra.mxu0 %v159
    %161 = vmatprep.subr.mxu0 0.0
    %v162 = vand.u32 %v42, 4294901760
    %v163 = vsub.f32 %v42, %v162
    %v164 = vand.u32 %v163, 4294901760
    %v165 = vsub.f32 %v163, %v164
    %v166 = vand.u32 %v165, 4294901760
    %167 = vmatpush1.msra.mxu0 %v166
    %168 = vmatprep.subr.mxu0 0.0
    %v169 = vand.u32 %v43, 4294901760
    %v170 = vsub.f32 %v43, %v169
    %v171 = vand.u32 %v170, 4294901760
    %v172 = vsub.f32 %v170, %v171
    %v173 = vand.u32 %v172, 4294901760
    %174 = vmatpush1.msra.mxu0 %v173
    %175 = vmatprep.subr.mxu0 0.0
    %176 = vmatpush1.msra.mxu0 0.0
    %177 = vmatprep.subr.mxu0 0.0
    %178 = vmatpush1.msra.mxu0 0.0
    %179 = vmatprep.subr.mxu0 0.0
    %180 = vmatpush1.msra.mxu0 0.0
    %181 = vmatprep.subr.mxu0 0.0
    %182 = vmatpush1.msra.mxu0 0.0
    %183 = vmatprep.subr.mxu0 0.0
    %184 = vmatpush1.msra.mxu0 0.0
    %185 = vmatprep.subr.mxu0 0.0
    %186 = vmatpush1.msra.mxu0 0.0
    %187 = vmatprep.subr.mxu0 0.0
    %188 = vmatpush1.msra.mxu0 0.0
    %189 = vmatprep.subr.mxu0 0.0
    %190 = vmatpush1.msra.mxu0 0.0
    %191 = vmatprep.subr.mxu0 0.0
    %192 = vmatpush1.msra.mxu0 0.0
    %193 = vmatprep.subr.mxu0 0.0
    %194 = vmatpush1.msra.mxu0 0.0
    %195 = vmatprep.subr.mxu0 0.0
    %196 = vmatpush1.msra.mxu0 0.0
    %197 = vmatprep.subr.mxu0 0.0
    %198 = vmatpush1.msra.mxu0 0.0
    %199 = vmatprep.subr.mxu0 0.0
    %200 = vmatpush1.msra.mxu0 0.0
    %201 = vmatprep.subr.mxu0 0.0
    %202 = vmatpush1.msra.mxu0 0.0
    %203 = vmatprep.subr.mxu0 0.0
    %204 = vmatpush1.msra.mxu0 0.0
    %205 = vmatprep.subr.mxu0 0.0
    %206 = vmatpush1.msra.mxu0 0.0
    %207 = vmatprep.subr.mxu0 0.0
    %208 = vmatpush1.msra.mxu0 0.0
    %209 = vmatprep.subr.mxu0 0.0
    %210 = vmatpush1.msra.mxu0 0.0
    %211 = vmatprep.subr.mxu0 0.0
    %212 = vmatpush1.msra.mxu0 0.0
    %213 = vmatprep.subr.mxu0 0.0
    %214 = vmatpush1.msra.mxu0 0.0
    %215 = vmatprep.subr.mxu0 0.0
    %216 = vmatpush1.msra.mxu0 0.0
    %217 = vmatprep.subr.mxu0 0.0
    %218 = vmatpush1.msra.mxu0 0.0
    %219 = vmatprep.subr.mxu0 0.0
    %220 = vmatpush1.msra.mxu0 0.0
    %221 = vmatprep.subr.mxu0 0.0
    %222 = vmatpush1.msra.mxu0 0.0
    %223 = vmatprep.subr.mxu0 0.0
    %224 = vmatpush1.msra.mxu0 0.0
    %225 = vmatprep.subr.mxu0 0.0
    %226 = vmatpush1.msra.mxu0 0.0
    %227 = vmatprep.subr.mxu0 0.0
    %228 = vmatpush1.msra.mxu0 0.0
    %229 = vmatprep.subr.mxu0 0.0
    %230 = vmatpush1.msra.mxu0 0.0
    %231 = vmatprep.mubr.f32.mxu0 0.0
    %v232 = vand.u32 %v53, 4294901760
    %233 = vmatmul.mubr.f32.gmra.mrb[0].mxu0 %v232
    %v234 = vpop.f32.mrb[0].mxu0
    %v235 = vadd.f32 %v134, %v234
    %v236 = vpop.f32.mrb[0].mxu0
    %237 = vmatprep.mubr.f32.mxu0 0.0
    %v238 = vand.u32 %v56, 4294901760
    %239 = vmatmul.mubr.f32.gmra.mrb[0].mxu0 %v238
    %v240 = vpop.f32.mrb[0].mxu0
    %v241 = vadd.f32 %v144, %v240
    %v242 = vpop.f32.mrb[0].mxu0
    %243 = vdwg.mxu0
    %244 = vmatprep.subr.mxu0 0.0
    %v245 = vand.u32 %v40, 4294901760
    %v246 = vsub.f32 %v40, %v245
    %247 = vmatpush1.msra.mxu0 %v246
    %248 = vmatprep.subr.mxu0 0.0
    %v249 = vand.u32 %v41, 4294901760
    %v250 = vsub.f32 %v41, %v249
    %251 = vmatpush1.msra.mxu0 %v250
    %252 = vmatprep.subr.mxu0 0.0
    %v253 = vand.u32 %v42, 4294901760
    %v254 = vsub.f32 %v42, %v253
    %255 = vmatpush1.msra.mxu0 %v254
    %256 = vmatprep.subr.mxu0 0.0
    %v257 = vand.u32 %v43, 4294901760
    %v258 = vsub.f32 %v43, %v257
    %259 = vmatpush1.msra.mxu0 %v258
    %260 = vmatprep.subr.mxu0 0.0
    %261 = vmatpush1.msra.mxu0 0.0
    %262 = vmatprep.subr.mxu0 0.0
    %263 = vmatpush1.msra.mxu0 0.0
    %264 = vmatprep.subr.mxu0 0.0
    %265 = vmatpush1.msra.mxu0 0.0
    %266 = vmatprep.subr.mxu0 0.0
    %267 = vmatpush1.msra.mxu0 0.0
    %268 = vmatprep.subr.mxu0 0.0
    %269 = vmatpush1.msra.mxu0 0.0
    %270 = vmatprep.subr.mxu0 0.0
    %271 = vmatpush1.msra.mxu0 0.0
    %272 = vmatprep.subr.mxu0 0.0
    %273 = vmatpush1.msra.mxu0 0.0
    %274 = vmatprep.subr.mxu0 0.0
    %275 = vmatpush1.msra.mxu0 0.0
    %276 = vmatprep.subr.mxu0 0.0
    %277 = vmatpush1.msra.mxu0 0.0
    %278 = vmatprep.subr.mxu0 0.0
    %279 = vmatpush1.msra.mxu0 0.0
    %280 = vmatprep.subr.mxu0 0.0
    %281 = vmatpush1.msra.mxu0 0.0
    %282 = vmatprep.subr.mxu0 0.0
    %283 = vmatpush1.msra.mxu0 0.0
    %284 = vmatprep.subr.mxu0 0.0
    %285 = vmatpush1.msra.mxu0 0.0
    %286 = vmatprep.subr.mxu0 0.0
    %287 = vmatpush1.msra.mxu0 0.0
    %288 = vmatprep.subr.mxu0 0.0
    %289 = vmatpush1.msra.mxu0 0.0
    %290 = vmatprep.subr.mxu0 0.0
    %291 = vmatpush1.msra.mxu0 0.0
    %292 = vmatprep.subr.mxu0 0.0
    %293 = vmatpush1.msra.mxu0 0.0
    %294 = vmatprep.subr.mxu0 0.0
    %295 = vmatpush1.msra.mxu0 0.0
    %296 = vmatprep.subr.mxu0 0.0
    %297 = vmatpush1.msra.mxu0 0.0
    %298 = vmatprep.subr.mxu0 0.0
    %299 = vmatpush1.msra.mxu0 0.0
    %300 = vmatprep.subr.mxu0 0.0
    %301 = vmatpush1.msra.mxu0 0.0
    %302 = vmatprep.subr.mxu0 0.0
    %303 = vmatpush1.msra.mxu0 0.0
    %304 = vmatprep.subr.mxu0 0.0
    %305 = vmatpush1.msra.mxu0 0.0
    %306 = vmatprep.subr.mxu0 0.0
    %307 = vmatpush1.msra.mxu0 0.0
    %308 = vmatprep.subr.mxu0 0.0
    %309 = vmatpush1.msra.mxu0 0.0
    %310 = vmatprep.subr.mxu0 0.0
    %311 = vmatpush1.msra.mxu0 0.0
    %312 = vmatprep.subr.mxu0 0.0
    %313 = vmatpush1.msra.mxu0 0.0
    %314 = vmatprep.subr.mxu0 0.0
    %315 = vmatpush1.msra.mxu0 0.0
    %316 = vmatprep.mubr.f32.mxu0 0.0
    %v317 = vand.u32 %v53, 4294901760
    %v318 = vsub.f32 %v53, %v317
    %319 = vmatmul.mubr.f32.gmra.mrb[0].mxu0 %v318
    %v320 = vpop.f32.mrb[0].mxu0
    %v321 = vadd.f32 %v235, %v320
    %v322 = vpop.f32.mrb[0].mxu0
    %323 = vmatprep.mubr.f32.mxu0 0.0
    %v324 = vand.u32 %v56, 4294901760
    %v325 = vsub.f32 %v56, %v324
    %326 = vmatmul.mubr.f32.gmra.mrb[0].mxu0 %v325
    %v327 = vpop.f32.mrb[0].mxu0
    %v328 = vadd.f32 %v241, %v327
    %v329 = vpop.f32.mrb[0].mxu0
    %330 = vdwg.mxu0
    %331 = vmatprep.subr.mxu0 0.0
    %v332 = vand.u32 %v40, 4294901760
    %333 = vmatpush1.msra.mxu0 %v332
    %334 = vmatprep.subr.mxu0 0.0
    %v335 = vand.u32 %v41, 4294901760
    %336 = vmatpush1.msra.mxu0 %v335
    %337 = vmatprep.subr.mxu0 0.0
    %v338 = vand.u32 %v42, 4294901760
    %339 = vmatpush1.msra.mxu0 %v338
    %340 = vmatprep.subr.mxu0 0.0
    %v341 = vand.u32 %v43, 4294901760
    %342 = vmatpush1.msra.mxu0 %v341
    %343 = vmatprep.subr.mxu0 0.0
    %344 = vmatpush1.msra.mxu0 0.0
    %345 = vmatprep.subr.mxu0 0.0
    %346 = vmatpush1.msra.mxu0 0.0
    %347 = vmatprep.subr.mxu0 0.0
    %348 = vmatpush1.msra.mxu0 0.0
    %349 = vmatprep.subr.mxu0 0.0
    %350 = vmatpush1.msra.mxu0 0.0
    %351 = vmatprep.subr.mxu0 0.0
    %352 = vmatpush1.msra.mxu0 0.0
    %353 = vmatprep.subr.mxu0 0.0
    %354 = vmatpush1.msra.mxu0 0.0
    %355 = vmatprep.subr.mxu0 0.0
    %356 = vmatpush1.msra.mxu0 0.0
    %357 = vmatprep.subr.mxu0 0.0
    %358 = vmatpush1.msra.mxu0 0.0
    %359 = vmatprep.subr.mxu0 0.0
    %360 = vmatpush1.msra.mxu0 0.0
    %361 = vmatprep.subr.mxu0 0.0
    %362 = vmatpush1.msra.mxu0 0.0
    %363 = vmatprep.subr.mxu0 0.0
    %364 = vmatpush1.msra.mxu0 0.0
    %365 = vmatprep.subr.mxu0 0.0
    %366 = vmatpush1.msra.mxu0 0.0
    %367 = vmatprep.subr.mxu0 0.0
    %368 = vmatpush1.msra.mxu0 0.0
    %369 = vmatprep.subr.mxu0 0.0
    %370 = vmatpush1.msra.mxu0 0.0
    %371 = vmatprep.subr.mxu0 0.0
    %372 = vmatpush1.msra.mxu0 0.0
    %373 = vmatprep.subr.mxu0 0.0
    %374 = vmatpush1.msra.mxu0 0.0
    %375 = vmatprep.subr.mxu0 0.0
    %376 = vmatpush1.msra.mxu0 0.0
    %377 = vmatprep.subr.mxu0 0.0
    %378 = vmatpush1.msra.mxu0 0.0
    %379 = vmatprep.subr.mxu0 0.0
    %380 = vmatpush1.msra.mxu0 0.0
    %381 = vmatprep.subr.mxu0 0.0
    %382 = vmatpush1.msra.mxu0 0.0
    %383 = vmatprep.subr.mxu0 0.0
    %384 = vmatpush1.msra.mxu0 0.0
    %385 = vmatprep.subr.mxu0 0.0
    %386 = vmatpush1.msra.mxu0 0.0
    %387 = vmatprep.subr.mxu0 0.0
    %388 = vmatpush1.msra.mxu0 0.0
    %389 = vmatprep.subr.mxu0 0.0
    %390 = vmatpush1.msra.mxu0 0.0
    %391 = vmatprep.subr.mxu0 0.0
    %392 = vmatpush1.msra.mxu0 0.0
    %393 = vmatprep.subr.mxu0 0.0
    %394 = vmatpush1.msra.mxu0 0.0
    %395 = vmatprep.subr.mxu0 0.0
    %396 = vmatpush1.msra.mxu0 0.0
    %397 = vmatprep.subr.mxu0 0.0
    %398 = vmatpush1.msra.mxu0 0.0
    %399 = vmatprep.mubr.f32.mxu0 0.0
    %v400 = vand.u32 %v53, 4294901760
    %v401 = vsub.f32 %v53, %v400
    %v402 = vand.u32 %v401, 4294901760
    %403 = vmatmul.mubr.f32.gmra.mrb[0].mxu0 %v402
    %v404 = vpop.f32.mrb[0].mxu0
    %v405 = vadd.f32 %v321, %v404
    %v406 = vpop.f32.mrb[0].mxu0
    %407 = vmatprep.mubr.f32.mxu0 0.0
    %v408 = vand.u32 %v56, 4294901760
    %v409 = vsub.f32 %v56, %v408
    %v410 = vand.u32 %v409, 4294901760
    %411 = vmatmul.mubr.f32.gmra.mrb[0].mxu0 %v410
    %v412 = vpop.f32.mrb[0].mxu0
    %v413 = vadd.f32 %v328, %v412
    %v414 = vpop.f32.mrb[0].mxu0
    %415 = vdwg.mxu0
    %416 = vmatprep.subr.mxu0 0.0
    %v417 = vand.u32 %v40, 4294901760
    %v418 = vsub.f32 %v40, %v417
    %v419 = vand.u32 %v418, 4294901760
    %420 = vmatpush1.msra.mxu0 %v419
    %421 = vmatprep.subr.mxu0 0.0
    %v422 = vand.u32 %v41, 4294901760
    %v423 = vsub.f32 %v41, %v422
    %v424 = vand.u32 %v423, 4294901760
    %425 = vmatpush1.msra.mxu0 %v424
    %426 = vmatprep.subr.mxu0 0.0
    %v427 = vand.u32 %v42, 4294901760
    %v428 = vsub.f32 %v42, %v427
    %v429 = vand.u32 %v428, 4294901760
    %430 = vmatpush1.msra.mxu0 %v429
    %431 = vmatprep.subr.mxu0 0.0
    %v432 = vand.u32 %v43, 4294901760
    %v433 = vsub.f32 %v43, %v432
    %v434 = vand.u32 %v433, 4294901760
    %435 = vmatpush1.msra.mxu0 %v434
    %436 = vmatprep.subr.mxu0 0.0
    %437 = vmatpush1.msra.mxu0 0.0
    %438 = vmatprep.subr.mxu0 0.0
    %439 = vmatpush1.msra.mxu0 0.0
    %440 = vmatprep.subr.mxu0 0.0
    %441 = vmatpush1.msra.mxu0 0.0
    %442 = vmatprep.subr.mxu0 0.0
    %443 = vmatpush1.msra.mxu0 0.0
    %444 = vmatprep.subr.mxu0 0.0
    %445 = vmatpush1.msra.mxu0 0.0
    %446 = vmatprep.subr.mxu0 0.0
    %447 = vmatpush1.msra.mxu0 0.0
    %448 = vmatprep.subr.mxu0 0.0
    %449 = vmatpush1.msra.mxu0 0.0
    %450 = vmatprep.subr.mxu0 0.0
    %451 = vmatpush1.msra.mxu0 0.0
    %452 = vmatprep.subr.mxu0 0.0
    %453 = vmatpush1.msra.mxu0 0.0
    %454 = vmatprep.subr.mxu0 0.0
    %455 = vmatpush1.msra.mxu0 0.0
    %456 = vmatprep.subr.mxu0 0.0
    %457 = vmatpush1.msra.mxu0 0.0
    %458 = vmatprep.subr.mxu0 0.0
    %459 = vmatpush1.msra.mxu0 0.0
    %460 = vmatprep.subr.mxu0 0.0
    %461 = vmatpush1.msra.mxu0 0.0
    %462 = vmatprep.subr.mxu0 0.0
    %463 = vmatpush1.msra.mxu0 0.0
    %464 = vmatprep.subr.mxu0 0.0
    %465 = vmatpush1.msra.mxu0 0.0
    %466 = vmatprep.subr.mxu0 0.0
    %467 = vmatpush1.msra.mxu0 0.0
    %468 = vmatprep.subr.mxu0 0.0
    %469 = vmatpush1.msra.mxu0 0.0
    %470 = vmatprep.subr.mxu0 0.0
    %471 = vmatpush1.msra.mxu0 0.0
    %472 = vmatprep.subr.mxu0 0.0
    %473 = vmatpush1.msra.mxu0 0.0
    %474 = vmatprep.subr.mxu0 0.0
    %475 = vmatpush1.msra.mxu0 0.0
    %476 = vmatprep.subr.mxu0 0.0
    %477 = vmatpush1.msra.mxu0 0.0
    %478 = vmatprep.subr.mxu0 0.0
    %479 = vmatpush1.msra.mxu0 0.0
    %480 = vmatprep.subr.mxu0 0.0
    %481 = vmatpush1.msra.mxu0 0.0
    %482 = vmatprep.subr.mxu0 0.0
    %483 = vmatpush1.msra.mxu0 0.0
    %484 = vmatprep.subr.mxu0 0.0
    %485 = vmatpush1.msra.mxu0 0.0
    %486 = vmatprep.subr.mxu0 0.0
    %487 = vmatpush1.msra.mxu0 0.0
    %488 = vmatprep.subr.mxu0 0.0
    %489 = vmatpush1.msra.mxu0 0.0
    %490 = vmatprep.subr.mxu0 0.0
    %491 = vmatpush1.msra.mxu0 0.0
    %492 = vmatprep.mubr.f32.mxu0 0.0
    %v493 = vand.u32 %v53, 4294901760
    %494 = vmatmul.mubr.f32.gmra.mrb[0].mxu0 %v493
    %v495 = vpop.f32.mrb[0].mxu0
    %v496 = vadd.f32 %v405, %v495
    %v497 = vpop.f32.mrb[0].mxu0
    %498 = vmatprep.mubr.f32.mxu0 0.0
    %v499 = vand.u32 %v56, 4294901760
    %500 = vmatmul.mubr.f32.gmra.mrb[0].mxu0 %v499
    %v501 = vpop.f32.mrb[0].mxu0
    %v502 = vadd.f32 %v413, %v501
    %v503 = vpop.f32.mrb[0].mxu0
    %504 = vdwg.mxu0
    %505 = vmatprep.subr.mxu0 0.0
    %v506 = vand.u32 %v40, 4294901760
    %507 = vmatpush1.msra.mxu0 %v506
    %508 = vmatprep.subr.mxu0 0.0
    %v509 = vand.u32 %v41, 4294901760
    %510 = vmatpush1.msra.mxu0 %v509
    %511 = vmatprep.subr.mxu0 0.0
    %v512 = vand.u32 %v42, 4294901760
    %513 = vmatpush1.msra.mxu0 %v512
    %514 = vmatprep.subr.mxu0 0.0
    %v515 = vand.u32 %v43, 4294901760
    %516 = vmatpush1.msra.mxu0 %v515
    %517 = vmatprep.subr.mxu0 0.0
    %518 = vmatpush1.msra.mxu0 0.0
    %519 = vmatprep.subr.mxu0 0.0
    %520 = vmatpush1.msra.mxu0 0.0
    %521 = vmatprep.subr.mxu0 0.0
    %522 = vmatpush1.msra.mxu0 0.0
    %523 = vmatprep.subr.mxu0 0.0
    %524 = vmatpush1.msra.mxu0 0.0
    %525 = vmatprep.subr.mxu0 0.0
    %526 = vmatpush1.msra.mxu0 0.0
    %527 = vmatprep.subr.mxu0 0.0
    %528 = vmatpush1.msra.mxu0 0.0
    %529 = vmatprep.subr.mxu0 0.0
    %530 = vmatpush1.msra.mxu0 0.0
    %531 = vmatprep.subr.mxu0 0.0
    %532 = vmatpush1.msra.mxu0 0.0
    %533 = vmatprep.subr.mxu0 0.0
    %534 = vmatpush1.msra.mxu0 0.0
    %535 = vmatprep.subr.mxu0 0.0
    %536 = vmatpush1.msra.mxu0 0.0
    %537 = vmatprep.subr.mxu0 0.0
    %538 = vmatpush1.msra.mxu0 0.0
    %539 = vmatprep.subr.mxu0 0.0
    %540 = vmatpush1.msra.mxu0 0.0
    %541 = vmatprep.subr.mxu0 0.0
    %542 = vmatpush1.msra.mxu0 0.0
    %543 = vmatprep.subr.mxu0 0.0
    %544 = vmatpush1.msra.mxu0 0.0
    %545 = vmatprep.subr.mxu0 0.0
    %546 = vmatpush1.msra.mxu0 0.0
    %547 = vmatprep.subr.mxu0 0.0
    %548 = vmatpush1.msra.mxu0 0.0
    %549 = vmatprep.subr.mxu0 0.0
    %550 = vmatpush1.msra.mxu0 0.0
    %551 = vmatprep.subr.mxu0 0.0
    %552 = vmatpush1.msra.mxu0 0.0
    %553 = vmatprep.subr.mxu0 0.0
    %554 = vmatpush1.msra.mxu0 0.0
    %555 = vmatprep.subr.mxu0 0.0
    %556 = vmatpush1.msra.mxu0 0.0
    %557 = vmatprep.subr.mxu0 0.0
    %558 = vmatpush1.msra.mxu0 0.0
    %559 = vmatprep.subr.mxu0 0.0
    %560 = vmatpush1.msra.mxu0 0.0
    %561 = vmatprep.subr.mxu0 0.0
    %562 = vmatpush1.msra.mxu0 0.0
    %563 = vmatprep.subr.mxu0 0.0
    %564 = vmatpush1.msra.mxu0 0.0
    %565 = vmatprep.subr.mxu0 0.0
    %566 = vmatpush1.msra.mxu0 0.0
    %567 = vmatprep.subr.mxu0 0.0
    %568 = vmatpush1.msra.mxu0 0.0
    %569 = vmatprep.subr.mxu0 0.0
    %570 = vmatpush1.msra.mxu0 0.0
    %571 = vmatprep.subr.mxu0 0.0
    %572 = vmatpush1.msra.mxu0 0.0
    %573 = vmatprep.mubr.f32.mxu0 0.0
    %v574 = vand.u32 %v53, 4294901760
    %575 = vmatmul.mubr.f32.gmra.mrb[0].mxu0 %v574
    %v576 = vpop.f32.mrb[0].mxu0
    %v577 = vadd.f32 %v496, %v576
    %v578 = vpop.f32.mrb[0].mxu0
    %579 = vmatprep.mubr.f32.mxu0 0.0
    %v580 = vand.u32 %v56, 4294901760
    %581 = vmatmul.mubr.f32.gmra.mrb[0].mxu0 %v580
    %v582 = vpop.f32.mrb[0].mxu0
    %v583 = vadd.f32 %v502, %v582
    %v584 = vpop.f32.mrb[0].mxu0
    %585 = vdwg.mxu0
    %586 = vst [vmem:[#allocation2] sm:$0xff] %v577
    %587 = vst [vmem:[#allocation2 + $0x8] sm:$0xff] %v583
    %v588 = vld [vmem:[#allocation4] sm:$0xff]
    %v589 = vld [vmem:[#allocation4 + $0x8] sm:$0xff]
    %v590 = vld [vmem:[#allocation4 + $0x10] sm:$0xff]
    %v591 = vld [vmem:[#allocation4 + $0x18] sm:$0xff]
    %v592 = vlaneseq
    %v593 = vand.u32 %v592, 127
    %vm594 = vcmp.ge.s32.totalorder %v593, 64
    %vm595 = vcmp.lt.s32.totalorder %v593, 96
    %vm596 = vmand %vm594, %vm595
    %v597 = vld [vmem:[#allocation2] sm:$0x3]
    %v599 = vsel %vm51, 0.0, 0
    %601 = vmatprep.subr.mxu0 0.0
    %v602 = vand.u32 %v588, 4294901760
    %603 = vmatpush1.msra.mxu0 %v602
    %604 = vmatprep.subr.mxu0 0.0
    %v605 = vand.u32 %v589, 4294901760
    %606 = vmatpush1.msra.mxu0 %v605
    %607 = vmatprep.subr.mxu0 0.0
    %v608 = vand.u32 %v590, 4294901760
    %609 = vmatpush1.msra.mxu0 %v608
    %610 = vmatprep.subr.mxu0 0.0
    %v611 = vand.u32 %v591, 4294901760
    %612 = vmatpush1.msra.mxu0 %v611
    %613 = vmatprep.subr.mxu0 0.0
    %614 = vmatpush1.msra.mxu0 0.0
    %615 = vmatprep.subr.mxu0 0.0
    %616 = vmatpush1.msra.mxu0 0.0
    %617 = vmatprep.subr.mxu0 0.0
    %618 = vmatpush1.msra.mxu0 0.0
    %619 = vmatprep.subr.mxu0 0.0
    %620 = vmatpush1.msra.mxu0 0.0
    %621 = vmatprep.subr.mxu0 0.0
    %622 = vmatpush1.msra.mxu0 0.0
    %623 = vmatprep.subr.mxu0 0.0
    %624 = vmatpush1.msra.mxu0 0.0
    %625 = vmatprep.subr.mxu0 0.0
    %626 = vmatpush1.msra.mxu0 0.0
    %627 = vmatprep.subr.mxu0 0.0
    %628 = vmatpush1.msra.mxu0 0.0
    %629 = vmatprep.subr.mxu0 0.0
    %630 = vmatpush1.msra.mxu0 0.0
    %631 = vmatprep.subr.mxu0 0.0
    %632 = vmatpush1.msra.mxu0 0.0
    %633 = vmatprep.subr.mxu0 0.0
    %634 = vmatpush1.msra.mxu0 0.0
    %635 = vmatprep.subr.mxu0 0.0
    %636 = vmatpush1.msra.mxu0 0.0
    %637 = vmatprep.subr.mxu0 0.0
    %638 = vmatpush1.msra.mxu0 0.0
    %639 = vmatprep.subr.mxu0 0.0
    %640 = vmatpush1.msra.mxu0 0.0
    %641 = vmatprep.subr.mxu0 0.0
    %642 = vmatpush1.msra.mxu0 0.0
    %643 = vmatprep.subr.mxu0 0.0
    %644 = vmatpush1.msra.mxu0 0.0
    %645 = vmatprep.subr.mxu0 0.0
    %646 = vmatpush1.msra.mxu0 0.0
    %647 = vmatprep.subr.mxu0 0.0
    %648 = vmatpush1.msra.mxu0 0.0
    %649 = vmatprep.subr.mxu0 0.0
    %650 = vmatpush1.msra.mxu0 0.0
    %651 = vmatprep.subr.mxu0 0.0
    %652 = vmatpush1.msra.mxu0 0.0
    %653 = vmatprep.subr.mxu0 0.0
    %654 = vmatpush1.msra.mxu0 0.0
    %655 = vmatprep.subr.mxu0 0.0
    %656 = vmatpush1.msra.mxu0 0.0
    %657 = vmatprep.subr.mxu0 0.0
    %658 = vmatpush1.msra.mxu0 0.0
    %659 = vmatprep.subr.mxu0 0.0
    %660 = vmatpush1.msra.mxu0 0.0
    %661 = vmatprep.subr.mxu0 0.0
    %662 = vmatpush1.msra.mxu0 0.0
    %663 = vmatprep.subr.mxu0 0.0
    %664 = vmatpush1.msra.mxu0 0.0
    %665 = vmatprep.subr.mxu0 0.0
    %666 = vmatpush1.msra.mxu0 0.0
    %667 = vmatprep.subr.mxu0 0.0
    %668 = vmatpush1.msra.mxu0 0.0
    %669 = vmatprep.mubr.f32.mxu0 0.0
    %v670 = vand.u32 %v599, 4294901760
    %v671 = vsub.f32 %v599, %v670
    %v672 = vand.u32 %v671, 4294901760
    %v673 = vsub.f32 %v671, %v672
    %v674 = vand.u32 %v673, 4294901760
    %675 = vmatmul.mubr.f32.gmra.mrb[0].mxu0 %v674
    %v676 = vpop.f32.mrb[0].mxu0
    %v677 = vadd.f32 0.0, %v676
    %v678 = vpop.f32.mrb[0].mxu0
    %679 = vdwg.mxu0
    %680 = vmatprep.subr.mxu0 0.0
    %v681 = vand.u32 %v588, 4294901760
    %v682 = vsub.f32 %v588, %v681
    %v683 = vand.u32 %v682, 4294901760
    %v684 = vsub.f32 %v682, %v683
    %v685 = vand.u32 %v684, 4294901760
    %686 = vmatpush1.msra.mxu0 %v685
    %687 = vmatprep.subr.mxu0 0.0
    %v688 = vand.u32 %v589, 4294901760
    %v689 = vsub.f32 %v589, %v688
    %v690 = vand.u32 %v689, 4294901760
    %v691 = vsub.f32 %v689, %v690
    %v692 = vand.u32 %v691, 4294901760
    %693 = vmatpush1.msra.mxu0 %v692
    %694 = vmatprep.subr.mxu0 0.0
    %v695 = vand.u32 %v590, 4294901760
    %v696 = vsub.f32 %v590, %v695
    %v697 = vand.u32 %v696, 4294901760
    %v698 = vsub.f32 %v696, %v697
    %v699 = vand.u32 %v698, 4294901760
    %700 = vmatpush1.msra.mxu0 %v699
    %701 = vmatprep.subr.mxu0 0.0
    %v702 = vand.u32 %v591, 4294901760
    %v703 = vsub.f32 %v591, %v702
    %v704 = vand.u32 %v703, 4294901760
    %v705 = vsub.f32 %v703, %v704
    %v706 = vand.u32 %v705, 4294901760
    %707 = vmatpush1.msra.mxu0 %v706
    %708 = vmatprep.subr.mxu0 0.0
    %709 = vmatpush1.msra.mxu0 0.0
    %710 = vmatprep.subr.mxu0 0.0
    %711 = vmatpush1.msra.mxu0 0.0
    %712 = vmatprep.subr.mxu0 0.0
    %713 = vmatpush1.msra.mxu0 0.0
    %714 = vmatprep.subr.mxu0 0.0
    %715 = vmatpush1.msra.mxu0 0.0
    %716 = vmatprep.subr.mxu0 0.0
    %717 = vmatpush1.msra.mxu0 0.0
    %718 = vmatprep.subr.mxu0 0.0
    %719 = vmatpush1.msra.mxu0 0.0
    %720 = vmatprep.subr.mxu0 0.0
    %721 = vmatpush1.msra.mxu0 0.0
    %722 = vmatprep.subr.mxu0 0.0
    %723 = vmatpush1.msra.mxu0 0.0
    %724 = vmatprep.subr.mxu0 0.0
    %725 = vmatpush1.msra.mxu0 0.0
    %726 = vmatprep.subr.mxu0 0.0
    %727 = vmatpush1.msra.mxu0 0.0
    %728 = vmatprep.subr.mxu0 0.0
    %729 = vmatpush1.msra.mxu0 0.0
    %730 = vmatprep.subr.mxu0 0.0
    %731 = vmatpush1.msra.mxu0 0.0
    %732 = vmatprep.subr.mxu0 0.0
    %733 = vmatpush1.msra.mxu0 0.0
    %734 = vmatprep.subr.mxu0 0.0
    %735 = vmatpush1.msra.mxu0 0.0
    %736 = vmatprep.subr.mxu0 0.0
    %737 = vmatpush1.msra.mxu0 0.0
    %738 = vmatprep.subr.mxu0 0.0
    %739 = vmatpush1.msra.mxu0 0.0
    %740 = vmatprep.subr.mxu0 0.0
    %741 = vmatpush1.msra.mxu0 0.0
    %742 = vmatprep.subr.mxu0 0.0
    %743 = vmatpush1.msra.mxu0 0.0
    %744 = vmatprep.subr.mxu0 0.0
    %745 = vmatpush1.msra.mxu0 0.0
    %746 = vmatprep.subr.mxu0 0.0
    %747 = vmatpush1.msra.mxu0 0.0
    %748 = vmatprep.subr.mxu0 0.0
    %749 = vmatpush1.msra.mxu0 0.0
    %750 = vmatprep.subr.mxu0 0.0
    %751 = vmatpush1.msra.mxu0 0.0
    %752 = vmatprep.subr.mxu0 0.0
    %753 = vmatpush1.msra.mxu0 0.0
    %754 = vmatprep.subr.mxu0 0.0
    %755 = vmatpush1.msra.mxu0 0.0
    %756 = vmatprep.subr.mxu0 0.0
    %757 = vmatpush1.msra.mxu0 0.0
    %758 = vmatprep.subr.mxu0 0.0
    %759 = vmatpush1.msra.mxu0 0.0
    %760 = vmatprep.subr.mxu0 0.0
    %761 = vmatpush1.msra.mxu0 0.0
    %762 = vmatprep.subr.mxu0 0.0
    %763 = vmatpush1.msra.mxu0 0.0
    %764 = vmatprep.mubr.f32.mxu0 0.0
    %v765 = vand.u32 %v599, 4294901760
    %766 = vmatmul.mubr.f32.gmra.mrb[0].mxu0 %v765
    %v767 = vpop.f32.mrb[0].mxu0
    %v768 = vadd.f32 %v677, %v767
    %v769 = vpop.f32.mrb[0].mxu0
    %770 = vdwg.mxu0
    %771 = vmatprep.subr.mxu0 0.0
    %v772 = vand.u32 %v588, 4294901760
    %v773 = vsub.f32 %v588, %v772
    %774 = vmatpush1.msra.mxu0 %v773
    %775 = vmatprep.subr.mxu0 0.0
    %v776 = vand.u32 %v589, 4294901760
    %v777 = vsub.f32 %v589, %v776
    %778 = vmatpush1.msra.mxu0 %v777
    %779 = vmatprep.subr.mxu0 0.0
    %v780 = vand.u32 %v590, 4294901760
    %v781 = vsub.f32 %v590, %v780
    %782 = vmatpush1.msra.mxu0 %v781
    %783 = vmatprep.subr.mxu0 0.0
    %v784 = vand.u32 %v591, 4294901760
    %v785 = vsub.f32 %v591, %v784
    %786 = vmatpush1.msra.mxu0 %v785
    %787 = vmatprep.subr.mxu0 0.0
    %788 = vmatpush1.msra.mxu0 0.0
    %789 = vmatprep.subr.mxu0 0.0
    %790 = vmatpush1.msra.mxu0 0.0
    %791 = vmatprep.subr.mxu0 0.0
    %792 = vmatpush1.msra.mxu0 0.0
    %793 = vmatprep.subr.mxu0 0.0
    %794 = vmatpush1.msra.mxu0 0.0
    %795 = vmatprep.subr.mxu0 0.0
    %796 = vmatpush1.msra.mxu0 0.0
    %797 = vmatprep.subr.mxu0 0.0
    %798 = vmatpush1.msra.mxu0 0.0
    %799 = vmatprep.subr.mxu0 0.0
    %800 = vmatpush1.msra.mxu0 0.0
    %801 = vmatprep.subr.mxu0 0.0
    %802 = vmatpush1.msra.mxu0 0.0
    %803 = vmatprep.subr.mxu0 0.0
    %804 = vmatpush1.msra.mxu0 0.0
    %805 = vmatprep.subr.mxu0 0.0
    %806 = vmatpush1.msra.mxu0 0.0
    %807 = vmatprep.subr.mxu0 0.0
    %808 = vmatpush1.msra.mxu0 0.0
    %809 = vmatprep.subr.mxu0 0.0
    %810 = vmatpush1.msra.mxu0 0.0
    %811 = vmatprep.subr.mxu0 0.0
    %812 = vmatpush1.msra.mxu0 0.0
    %813 = vmatprep.subr.mxu0 0.0
    %814 = vmatpush1.msra.mxu0 0.0
    %815 = vmatprep.subr.mxu0 0.0
    %816 = vmatpush1.msra.mxu0 0.0
    %817 = vmatprep.subr.mxu0 0.0
    %818 = vmatpush1.msra.mxu0 0.0
    %819 = vmatprep.subr.mxu0 0.0
    %820 = vmatpush1.msra.mxu0 0.0
    %821 = vmatprep.subr.mxu0 0.0
    %822 = vmatpush1.msra.mxu0 0.0
    %823 = vmatprep.subr.mxu0 0.0
    %824 = vmatpush1.msra.mxu0 0.0
    %825 = vmatprep.subr.mxu0 0.0
    %826 = vmatpush1.msra.mxu0 0.0
    %827 = vmatprep.subr.mxu0 0.0
    %828 = vmatpush1.msra.mxu0 0.0
    %829 = vmatprep.subr.mxu0 0.0
    %830 = vmatpush1.msra.mxu0 0.0
    %831 = vmatprep.subr.mxu0 0.0
    %832 = vmatpush1.msra.mxu0 0.0
    %833 = vmatprep.subr.mxu0 0.0
    %834 = vmatpush1.msra.mxu0 0.0
    %835 = vmatprep.subr.mxu0 0.0
    %836 = vmatpush1.msra.mxu0 0.0
    %837 = vmatprep.subr.mxu0 0.0
    %838 = vmatpush1.msra.mxu0 0.0
    %839 = vmatprep.subr.mxu0 0.0
    %840 = vmatpush1.msra.mxu0 0.0
    %841 = vmatprep.subr.mxu0 0.0
    %842 = vmatpush1.msra.mxu0 0.0
    %843 = vmatprep.mubr.f32.mxu0 0.0
    %v844 = vand.u32 %v599, 4294901760
    %v845 = vsub.f32 %v599, %v844
    %846 = vmatmul.mubr.f32.gmra.mrb[0].mxu0 %v845
    %v847 = vpop.f32.mrb[0].mxu0
    %v848 = vadd.f32 %v768, %v847
    %v849 = vpop.f32.mrb[0].mxu0
    %850 = vdwg.mxu0
    %851 = vmatprep.subr.mxu0 0.0
    %v852 = vand.u32 %v588, 4294901760
    %853 = vmatpush1.msra.mxu0 %v852
    %854 = vmatprep.subr.mxu0 0.0
    %v855 = vand.u32 %v589, 4294901760
    %856 = vmatpush1.msra.mxu0 %v855
    %857 = vmatprep.subr.mxu0 0.0
    %v858 = vand.u32 %v590, 4294901760
    %859 = vmatpush1.msra.mxu0 %v858
    %860 = vmatprep.subr.mxu0 0.0
    %v861 = vand.u32 %v591, 4294901760
    %862 = vmatpush1.msra.mxu0 %v861
    %863 = vmatprep.subr.mxu0 0.0
    %864 = vmatpush1.msra.mxu0 0.0
    %865 = vmatprep.subr.mxu0 0.0
    %866 = vmatpush1.msra.mxu0 0.0
    %867 = vmatprep.subr.mxu0 0.0
    %868 = vmatpush1.msra.mxu0 0.0
    %869 = vmatprep.subr.mxu0 0.0
    %870 = vmatpush1.msra.mxu0 0.0
    %871 = vmatprep.subr.mxu0 0.0
    %872 = vmatpush1.msra.mxu0 0.0
    %873 = vmatprep.subr.mxu0 0.0
    %874 = vmatpush1.msra.mxu0 0.0
    %875 = vmatprep.subr.mxu0 0.0
    %876 = vmatpush1.msra.mxu0 0.0
    %877 = vmatprep.subr.mxu0 0.0
    %878 = vmatpush1.msra.mxu0 0.0
    %879 = vmatprep.subr.mxu0 0.0
    %880 = vmatpush1.msra.mxu0 0.0
    %881 = vmatprep.subr.mxu0 0.0
    %882 = vmatpush1.msra.mxu0 0.0
    %883 = vmatprep.subr.mxu0 0.0
    %884 = vmatpush1.msra.mxu0 0.0
    %885 = vmatprep.subr.mxu0 0.0
    %886 = vmatpush1.msra.mxu0 0.0
    %887 = vmatprep.subr.mxu0 0.0
    %888 = vmatpush1.msra.mxu0 0.0
    %889 = vmatprep.subr.mxu0 0.0
    %890 = vmatpush1.msra.mxu0 0.0
    %891 = vmatprep.subr.mxu0 0.0
    %892 = vmatpush1.msra.mxu0 0.0
    %893 = vmatprep.subr.mxu0 0.0
    %894 = vmatpush1.msra.mxu0 0.0
    %895 = vmatprep.subr.mxu0 0.0
    %896 = vmatpush1.msra.mxu0 0.0
    %897 = vmatprep.subr.mxu0 0.0
    %898 = vmatpush1.msra.mxu0 0.0
    %899 = vmatprep.subr.mxu0 0.0
    %900 = vmatpush1.msra.mxu0 0.0
    %901 = vmatprep.subr.mxu0 0.0
    %902 = vmatpush1.msra.mxu0 0.0
    %903 = vmatprep.subr.mxu0 0.0
    %904 = vmatpush1.msra.mxu0 0.0
    %905 = vmatprep.subr.mxu0 0.0
    %906 = vmatpush1.msra.mxu0 0.0
    %907 = vmatprep.subr.mxu0 0.0
    %908 = vmatpush1.msra.mxu0 0.0
    %909 = vmatprep.subr.mxu0 0.0
    %910 = vmatpush1.msra.mxu0 0.0
    %911 = vmatprep.subr.mxu0 0.0
    %912 = vmatpush1.msra.mxu0 0.0
    %913 = vmatprep.subr.mxu0 0.0
    %914 = vmatpush1.msra.mxu0 0.0
    %915 = vmatprep.subr.mxu0 0.0
    %916 = vmatpush1.msra.mxu0 0.0
    %917 = vmatprep.subr.mxu0 0.0
    %918 = vmatpush1.msra.mxu0 0.0
    %919 = vmatprep.mubr.f32.mxu0 0.0
    %v920 = vand.u32 %v599, 4294901760
    %v921 = vsub.f32 %v599, %v920
    %v922 = vand.u32 %v921, 4294901760
    %923 = vmatmul.mubr.f32.gmra.mrb[0].mxu0 %v922
    %v924 = vpop.f32.mrb[0].mxu0
    %v925 = vadd.f32 %v848, %v924
    %v926 = vpop.f32.mrb[0].mxu0
    %927 = vdwg.mxu0
    %928 = vmatprep.subr.mxu0 0.0
    %v929 = vand.u32 %v588, 4294901760
    %v930 = vsub.f32 %v588, %v929
    %v931 = vand.u32 %v930, 4294901760
    %932 = vmatpush1.msra.mxu0 %v931
    %933 = vmatprep.subr.mxu0 0.0
    %v934 = vand.u32 %v589, 4294901760
    %v935 = vsub.f32 %v589, %v934
    %v936 = vand.u32 %v935, 4294901760
    %937 = vmatpush1.msra.mxu0 %v936
    %938 = vmatprep.subr.mxu0 0.0
    %v939 = vand.u32 %v590, 4294901760
    %v940 = vsub.f32 %v590, %v939
    %v941 = vand.u32 %v940, 4294901760
    %942 = vmatpush1.msra.mxu0 %v941
    %943 = vmatprep.subr.mxu0 0.0
    %v944 = vand.u32 %v591, 4294901760
    %v945 = vsub.f32 %v591, %v944
    %v946 = vand.u32 %v945, 4294901760
    %947 = vmatpush1.msra.mxu0 %v946
    %948 = vmatprep.subr.mxu0 0.0
    %949 = vmatpush1.msra.mxu0 0.0
    %950 = vmatprep.subr.mxu0 0.0
    %951 = vmatpush1.msra.mxu0 0.0
    %952 = vmatprep.subr.mxu0 0.0
    %953 = vmatpush1.msra.mxu0 0.0
    %954 = vmatprep.subr.mxu0 0.0
    %955 = vmatpush1.msra.mxu0 0.0
    %956 = vmatprep.subr.mxu0 0.0
    %957 = vmatpush1.msra.mxu0 0.0
    %958 = vmatprep.subr.mxu0 0.0
    %959 = vmatpush1.msra.mxu0 0.0
    %960 = vmatprep.subr.mxu0 0.0
    %961 = vmatpush1.msra.mxu0 0.0
    %962 = vmatprep.subr.mxu0 0.0
    %963 = vmatpush1.msra.mxu0 0.0
    %964 = vmatprep.subr.mxu0 0.0
    %965 = vmatpush1.msra.mxu0 0.0
    %966 = vmatprep.subr.mxu0 0.0
    %967 = vmatpush1.msra.mxu0 0.0
    %968 = vmatprep.subr.mxu0 0.0
    %969 = vmatpush1.msra.mxu0 0.0
    %970 = vmatprep.subr.mxu0 0.0
    %971 = vmatpush1.msra.mxu0 0.0
    %972 = vmatprep.subr.mxu0 0.0
    %973 = vmatpush1.msra.mxu0 0.0
    %974 = vmatprep.subr.mxu0 0.0
    %975 = vmatpush1.msra.mxu0 0.0
    %976 = vmatprep.subr.mxu0 0.0
    %977 = vmatpush1.msra.mxu0 0.0
    %978 = vmatprep.subr.mxu0 0.0
    %979 = vmatpush1.msra.mxu0 0.0
    %980 = vmatprep.subr.mxu0 0.0
    %981 = vmatpush1.msra.mxu0 0.0
    %982 = vmatprep.subr.mxu0 0.0
    %983 = vmatpush1.msra.mxu0 0.0
    %984 = vmatprep.subr.mxu0 0.0
    %985 = vmatpush1.msra.mxu0 0.0
    %986 = vmatprep.subr.mxu0 0.0
    %987 = vmatpush1.msra.mxu0 0.0
    %988 = vmatprep.subr.mxu0 0.0
    %989 = vmatpush1.msra.mxu0 0.0
    %990 = vmatprep.subr.mxu0 0.0
    %991 = vmatpush1.msra.mxu0 0.0
    %992 = vmatprep.subr.mxu0 0.0
    %993 = vmatpush1.msra.mxu0 0.0
    %994 = vmatprep.subr.mxu0 0.0
    %995 = vmatpush1.msra.mxu0 0.0
    %996 = vmatprep.subr.mxu0 0.0
    %997 = vmatpush1.msra.mxu0 0.0
    %998 = vmatprep.subr.mxu0 0.0
    %999 = vmatpush1.msra.mxu0 0.0
    %1000 = vmatprep.subr.mxu0 0.0
    %1001 = vmatpush1.msra.mxu0 0.0
    %1002 = vmatprep.subr.mxu0 0.0
    %1003 = vmatpush1.msra.mxu0 0.0
    %1004 = vmatprep.mubr.f32.mxu0 0.0
    %v1005 = vand.u32 %v599, 4294901760
    %1006 = vmatmul.mubr.f32.gmra.mrb[0].mxu0 %v1005
    %v1007 = vpop.f32.mrb[0].mxu0
    %v1008 = vadd.f32 %v925, %v1007
    %v1009 = vpop.f32.mrb[0].mxu0
    %1010 = vdwg.mxu0
    %1011 = vmatprep.subr.mxu0 0.0
    %v1012 = vand.u32 %v588, 4294901760
    %1013 = vmatpush1.msra.mxu0 %v1012
    %1014 = vmatprep.subr.mxu0 0.0
    %v1015 = vand.u32 %v589, 4294901760
    %1016 = vmatpush1.msra.mxu0 %v1015
    %1017 = vmatprep.subr.mxu0 0.0
    %v1018 = vand.u32 %v590, 4294901760
    %1019 = vmatpush1.msra.mxu0 %v1018
    %1020 = vmatprep.subr.mxu0 0.0
    %v1021 = vand.u32 %v591, 4294901760
    %1022 = vmatpush1.msra.mxu0 %v1021
    %1023 = vmatprep.subr.mxu0 0.0
    %1024 = vmatpush1.msra.mxu0 0.0
    %1025 = vmatprep.subr.mxu0 0.0
    %1026 = vmatpush1.msra.mxu0 0.0
    %1027 = vmatprep.subr.mxu0 0.0
    %1028 = vmatpush1.msra.mxu0 0.0
    %1029 = vmatprep.subr.mxu0 0.0
    %1030 = vmatpush1.msra.mxu0 0.0
    %1031 = vmatprep.subr.mxu0 0.0
    %1032 = vmatpush1.msra.mxu0 0.0
    %1033 = vmatprep.subr.mxu0 0.0
    %1034 = vmatpush1.msra.mxu0 0.0
    %1035 = vmatprep.subr.mxu0 0.0
    %1036 = vmatpush1.msra.mxu0 0.0
    %1037 = vmatprep.subr.mxu0 0.0
    %1038 = vmatpush1.msra.mxu0 0.0
    %1039 = vmatprep.subr.mxu0 0.0
    %1040 = vmatpush1.msra.mxu0 0.0
    %1041 = vmatprep.subr.mxu0 0.0
    %1042 = vmatpush1.msra.mxu0 0.0
    %1043 = vmatprep.subr.mxu0 0.0
    %1044 = vmatpush1.msra.mxu0 0.0
    %1045 = vmatprep.subr.mxu0 0.0
    %1046 = vmatpush1.msra.mxu0 0.0
    %1047 = vmatprep.subr.mxu0 0.0
    %1048 = vmatpush1.msra.mxu0 0.0
    %1049 = vmatprep.subr.mxu0 0.0
    %1050 = vmatpush1.msra.mxu0 0.0
    %1051 = vmatprep.subr.mxu0 0.0
    %1052 = vmatpush1.msra.mxu0 0.0
    %1053 = vmatprep.subr.mxu0 0.0
    %1054 = vmatpush1.msra.mxu0 0.0
    %1055 = vmatprep.subr.mxu0 0.0
    %1056 = vmatpush1.msra.mxu0 0.0
    %1057 = vmatprep.subr.mxu0 0.0
    %1058 = vmatpush1.msra.mxu0 0.0
    %1059 = vmatprep.subr.mxu0 0.0
    %1060 = vmatpush1.msra.mxu0 0.0
    %1061 = vmatprep.subr.mxu0 0.0
    %1062 = vmatpush1.msra.mxu0 0.0
    %1063 = vmatprep.subr.mxu0 0.0
    %1064 = vmatpush1.msra.mxu0 0.0
    %1065 = vmatprep.subr.mxu0 0.0
    %1066 = vmatpush1.msra.mxu0 0.0
    %1067 = vmatprep.subr.mxu0 0.0
    %1068 = vmatpush1.msra.mxu0 0.0
    %1069 = vmatprep.subr.mxu0 0.0
    %1070 = vmatpush1.msra.mxu0 0.0
    %1071 = vmatprep.subr.mxu0 0.0
    %1072 = vmatpush1.msra.mxu0 0.0
    %1073 = vmatprep.subr.mxu0 0.0
    %1074 = vmatpush1.msra.mxu0 0.0
    %1075 = vmatprep.subr.mxu0 0.0
    %1076 = vmatpush1.msra.mxu0 0.0
    %1077 = vmatprep.subr.mxu0 0.0
    %1078 = vmatpush1.msra.mxu0 0.0
    %1079 = vmatprep.mubr.f32.mxu0 0.0
    %v1080 = vand.u32 %v599, 4294901760
    %1081 = vmatmul.mubr.f32.gmra.mrb[0].mxu0 %v1080
    %v1082 = vpop.f32.mrb[0].mxu0
    %v1083 = vadd.f32 %v1008, %v1082
    %v1084 = vpop.f32.mrb[0].mxu0
    %1085 = vdwg.mxu0
    %v1086 = vadd.f32 %v597, %v1083
    %v1087 = vmul.f32 %v1086, 0.5
    %v1088 = vtanh.pop %v1087
    %v1089 = vadd.f32 %v1088, 1.0
    %v1090 = vmul.f32 %v1089, 0.5
    %v1091 = vtanh.pop %v1086
    %v1092 = vsel %vm596, %v1091, %v1090
    %v1093 = vmul.f32 %v1092, 0.0
    %1095 = vrot.lane.b32.xlu0 %v1092, 64
    %v1096 = vpop.permute.xlu0 %1095
    %v1098 = vmul.f32 %v1092, %v1096
    %1100 = vrot.lane.b32.xlu0 %v1098, 32
    %v1101 = vpop.permute.xlu0 %1100
    %v1103 = vadd.f32 %v1093, %v1101
    %v1104 = vtanh.pop %v1103
    %1106 = vrot.lane.b32.xlu0 %v1104, 64
    %v1107 = vpop.permute.xlu0 %1106
    %v1109 = vmul.f32 %v1092, %v1107
    %1111 = vrot.lane.b32.xlu0 %v1109, 32
    %v1112 = vpop.permute.xlu0 %1111
    %vm1114 = vcmask 254976
    %1115 = vst.msk [vmem:[#allocation3] sm:$0x3] %vm1114, %v1112
    %v1116 = vld [vmem:[#allocation2 + $0x2] sm:$0x3]
    %v1117 = vsel %vm51, %v1112, 0
    %1119 = vmatprep.subr.mxu0 0.0
    %v1120 = vand.u32 %v588, 4294901760
    %1121 = vmatpush1.msra.mxu0 %v1120
    %1122 = vmatprep.subr.mxu0 0.0
    %v1123 = vand.u32 %v589, 4294901760
    %1124 = vmatpush1.msra.mxu0 %v1123
    %1125 = vmatprep.subr.mxu0 0.0
    %v1126 = vand.u32 %v590, 4294901760
    %1127 = vmatpush1.msra.mxu0 %v1126
    %1128 = vmatprep.subr.mxu0 0.0
    %v1129 = vand.u32 %v591, 4294901760
    %1130 = vmatpush1.msra.mxu0 %v1129
    %1131 = vmatprep.subr.mxu0 0.0
    %1132 = vmatpush1.msra.mxu0 0.0
    %1133 = vmatprep.subr.mxu0 0.0
    %1134 = vmatpush1.msra.mxu0 0.0
    %1135 = vmatprep.subr.mxu0 0.0
    %1136 = vmatpush1.msra.mxu0 0.0
    %1137 = vmatprep.subr.mxu0 0.0
    %1138 = vmatpush1.msra.mxu0 0.0
    %1139 = vmatprep.subr.mxu0 0.0
    %1140 = vmatpush1.msra.mxu0 0.0
    %1141 = vmatprep.subr.mxu0 0.0
    %1142 = vmatpush1.msra.mxu0 0.0
    %1143 = vmatprep.subr.mxu0 0.0
    %1144 = vmatpush1.msra.mxu0 0.0
    %1145 = vmatprep.subr.mxu0 0.0
    %1146 = vmatpush1.msra.mxu0 0.0
    %1147 = vmatprep.subr.mxu0 0.0
    %1148 = vmatpush1.msra.mxu0 0.0
    %1149 = vmatprep.subr.mxu0 0.0
    %1150 = vmatpush1.msra.mxu0 0.0
    %1151 = vmatprep.subr.mxu0 0.0
    %1152 = vmatpush1.msra.mxu0 0.0
    %1153 = vmatprep.subr.mxu0 0.0
    %1154 = vmatpush1.msra.mxu0 0.0
    %1155 = vmatprep.subr.mxu0 0.0
    %1156 = vmatpush1.msra.mxu0 0.0
    %1157 = vmatprep.subr.mxu0 0.0
    %1158 = vmatpush1.msra.mxu0 0.0
    %1159 = vmatprep.subr.mxu0 0.0
    %1160 = vmatpush1.msra.mxu0 0.0
    %1161 = vmatprep.subr.mxu0 0.0
    %1162 = vmatpush1.msra.mxu0 0.0
    %1163 = vmatprep.subr.mxu0 0.0
    %1164 = vmatpush1.msra.mxu0 0.0
    %1165 = vmatprep.subr.mxu0 0.0
    %1166 = vmatpush1.msra.mxu0 0.0
    %1167 = vmatprep.subr.mxu0 0.0
    %1168 = vmatpush1.msra.mxu0 0.0
    %1169 = vmatprep.subr.mxu0 0.0
    %1170 = vmatpush1.msra.mxu0 0.0
    %1171 = vmatprep.subr.mxu0 0.0
    %1172 = vmatpush1.msra.mxu0 0.0
    %1173 = vmatprep.subr.mxu0 0.0
    %1174 = vmatpush1.msra.mxu0 0.0
    %1175 = vmatprep.subr.mxu0 0.0
    %1176 = vmatpush1.msra.mxu0 0.0
    %1177 = vmatprep.subr.mxu0 0.0
    %1178 = vmatpush1.msra.mxu0 0.0
    %1179 = vmatprep.subr.mxu0 0.0
    %1180 = vmatpush1.msra.mxu0 0.0
    %1181 = vmatprep.subr.mxu0 0.0
    %1182 = vmatpush1.msra.mxu0 0.0
    %1183 = vmatprep.subr.mxu0 0.0
    %1184 = vmatpush1.msra.mxu0 0.0
    %1185 = vmatprep.subr.mxu0 0.0
    %1186 = vmatpush1.msra.mxu0 0.0
    %1187 = vmatprep.mubr.f32.mxu0 0.0
    %v1188 = vand.u32 %v1117, 4294901760
    %v1189 = vsub.f32 %v1117, %v1188
    %v1190 = vand.u32 %v1189, 4294901760
    %v1191 = vsub.f32 %v1189, %v1190
    %v1192 = vand.u32 %v1191, 4294901760
    %1193 = vmatmul.mubr.f32.gmra.mrb[0].mxu0 %v1192
    %v1194 = vpop.f32.mrb[0].mxu0
    %v1195 = vadd.f32 0.0, %v1194
    %v1196 = vpop.f32.mrb[0].mxu0
    %1197 = vdwg.mxu0
    %1198 = vmatprep.subr.mxu0 0.0
    %v1199 = vand.u32 %v588, 4294901760
    %v1200 = vsub.f32 %v588, %v1199
    %v1201 = vand.u32 %v1200, 4294901760
    %v1202 = vsub.f32 %v1200, %v1201
    %v1203 = vand.u32 %v1202, 4294901760
    %1204 = vmatpush1.msra.mxu0 %v1203
    %1205 = vmatprep.subr.mxu0 0.0
    %v1206 = vand.u32 %v589, 4294901760
    %v1207 = vsub.f32 %v589, %v1206
    %v1208 = vand.u32 %v1207, 4294901760
    %v1209 = vsub.f32 %v1207, %v1208
    %v1210 = vand.u32 %v1209, 4294901760
    %1211 = vmatpush1.msra.mxu0 %v1210
    %1212 = vmatprep.subr.mxu0 0.0
    %v1213 = vand.u32 %v590, 4294901760
    %v1214 = vsub.f32 %v590, %v1213
    %v1215 = vand.u32 %v1214, 4294901760
    %v1216 = vsub.f32 %v1214, %v1215
    %v1217 = vand.u32 %v1216, 4294901760
    %1218 = vmatpush1.msra.mxu0 %v1217
    %1219 = vmatprep.subr.mxu0 0.0
    %v1220 = vand.u32 %v591, 4294901760
    %v1221 = vsub.f32 %v591, %v1220
    %v1222 = vand.u32 %v1221, 4294901760
    %v1223 = vsub.f32 %v1221, %v1222
    %v1224 = vand.u32 %v1223, 4294901760
    %1225 = vmatpush1.msra.mxu0 %v1224
    %1226 = vmatprep.subr.mxu0 0.0
    %1227 = vmatpush1.msra.mxu0 0.0
    %1228 = vmatprep.subr.mxu0 0.0
    %1229 = vmatpush1.msra.mxu0 0.0
    %1230 = vmatprep.subr.mxu0 0.0
    %1231 = vmatpush1.msra.mxu0 0.0
    %1232 = vmatprep.subr.mxu0 0.0
    %1233 = vmatpush1.msra.mxu0 0.0
    %1234 = vmatprep.subr.mxu0 0.0
    %1235 = vmatpush1.msra.mxu0 0.0
    %1236 = vmatprep.subr.mxu0 0.0
    %1237 = vmatpush1.msra.mxu0 0.0
    %1238 = vmatprep.subr.mxu0 0.0
    %1239 = vmatpush1.msra.mxu0 0.0
    %1240 = vmatprep.subr.mxu0 0.0
    %1241 = vmatpush1.msra.mxu0 0.0
    %1242 = vmatprep.subr.mxu0 0.0
    %1243 = vmatpush1.msra.mxu0 0.0
    %1244 = vmatprep.subr.mxu0 0.0
    %1245 = vmatpush1.msra.mxu0 0.0
    %1246 = vmatprep.subr.mxu0 0.0
    %1247 = vmatpush1.msra.mxu0 0.0
    %1248 = vmatprep.subr.mxu0 0.0
    %1249 = vmatpush1.msra.mxu0 0.0
    %1250 = vmatprep.subr.mxu0 0.0
    %1251 = vmatpush1.msra.mxu0 0.0
    %1252 = vmatprep.subr.mxu0 0.0
    %1253 = vmatpush1.msra.mxu0 0.0
    %1254 = vmatprep.subr.mxu0 0.0
    %1255 = vmatpush1.msra.mxu0 0.0
    %1256 = vmatprep.subr.mxu0 0.0
    %1257 = vmatpush1.msra.mxu0 0.0
    %1258 = vmatprep.subr.mxu0 0.0
    %1259 = vmatpush1.msra.mxu0 0.0
    %1260 = vmatprep.subr.mxu0 0.0
    %1261 = vmatpush1.msra.mxu0 0.0
    %1262 = vmatprep.subr.mxu0 0.0
    %1263 = vmatpush1.msra.mxu0 0.0
    %1264 = vmatprep.subr.mxu0 0.0
    %1265 = vmatpush1.msra.mxu0 0.0
    %1266 = vmatprep.subr.mxu0 0.0
    %1267 = vmatpush1.msra.mxu0 0.0
    %1268 = vmatprep.subr.mxu0 0.0
    %1269 = vmatpush1.msra.mxu0 0.0
    %1270 = vmatprep.subr.mxu0 0.0
    %1271 = vmatpush1.msra.mxu0 0.0
    %1272 = vmatprep.subr.mxu0 0.0
    %1273 = vmatpush1.msra.mxu0 0.0
    %1274 = vmatprep.subr.mxu0 0.0
    %1275 = vmatpush1.msra.mxu0 0.0
    %1276 = vmatprep.subr.mxu0 0.0
    %1277 = vmatpush1.msra.mxu0 0.0
    %1278 = vmatprep.subr.mxu0 0.0
    %1279 = vmatpush1.msra.mxu0 0.0
    %1280 = vmatprep.subr.mxu0 0.0
    %1281 = vmatpush1.msra.mxu0 0.0
    %1282 = vmatprep.mubr.f32.mxu0 0.0
    %v1283 = vand.u32 %v1117, 4294901760
    %1284 = vmatmul.mubr.f32.gmra.mrb[0].mxu0 %v1283
    %v1285 = vpop.f32.mrb[0].mxu0
    %v1286 = vadd.f32 %v1195, %v1285
    %v1287 = vpop.f32.mrb[0].mxu0
    %1288 = vdwg.mxu0
    %1289 = vmatprep.subr.mxu0 0.0
    %v1290 = vand.u32 %v588, 4294901760
    %v1291 = vsub.f32 %v588, %v1290
    %1292 = vmatpush1.msra.mxu0 %v1291
    %1293 = vmatprep.subr.mxu0 0.0
    %v1294 = vand.u32 %v589, 4294901760
    %v1295 = vsub.f32 %v589, %v1294
    %1296 = vmatpush1.msra.mxu0 %v1295
    %1297 = vmatprep.subr.mxu0 0.0
    %v1298 = vand.u32 %v590, 4294901760
    %v1299 = vsub.f32 %v590, %v1298
    %1300 = vmatpush1.msra.mxu0 %v1299
    %1301 = vmatprep.subr.mxu0 0.0
    %v1302 = vand.u32 %v591, 4294901760
    %v1303 = vsub.f32 %v591, %v1302
    %1304 = vmatpush1.msra.mxu0 %v1303
    %1305 = vmatprep.subr.mxu0 0.0
    %1306 = vmatpush1.msra.mxu0 0.0
    %1307 = vmatprep.subr.mxu0 0.0
    %1308 = vmatpush1.msra.mxu0 0.0
    %1309 = vmatprep.subr.mxu0 0.0
    %1310 = vmatpush1.msra.mxu0 0.0
    %1311 = vmatprep.subr.mxu0 0.0
    %1312 = vmatpush1.msra.mxu0 0.0
    %1313 = vmatprep.subr.mxu0 0.0
    %1314 = vmatpush1.msra.mxu0 0.0
    %1315 = vmatprep.subr.mxu0 0.0
    %1316 = vmatpush1.msra.mxu0 0.0
    %1317 = vmatprep.subr.mxu0 0.0
    %1318 = vmatpush1.msra.mxu0 0.0
    %1319 = vmatprep.subr.mxu0 0.0
    %1320 = vmatpush1.msra.mxu0 0.0
    %1321 = vmatprep.subr.mxu0 0.0
    %1322 = vmatpush1.msra.mxu0 0.0
    %1323 = vmatprep.subr.mxu0 0.0
    %1324 = vmatpush1.msra.mxu0 0.0
    %1325 = vmatprep.subr.mxu0 0.0
    %1326 = vmatpush1.msra.mxu0 0.0
    %1327 = vmatprep.subr.mxu0 0.0
    %1328 = vmatpush1.msra.mxu0 0.0
    %1329 = vmatprep.subr.mxu0 0.0
    %1330 = vmatpush1.msra.mxu0 0.0
    %1331 = vmatprep.subr.mxu0 0.0
    %1332 = vmatpush1.msra.mxu0 0.0
    %1333 = vmatprep.subr.mxu0 0.0
    %1334 = vmatpush1.msra.mxu0 0.0
    %1335 = vmatprep.subr.mxu0 0.0
    %1336 = vmatpush1.msra.mxu0 0.0
    %1337 = vmatprep.subr.mxu0 0.0
    %1338 = vmatpush1.msra.mxu0 0.0
    %1339 = vmatprep.subr.mxu0 0.0
    %1340 = vmatpush1.msra.mxu0 0.0
    %1341 = vmatprep.subr.mxu0 0.0
    %1342 = vmatpush1.msra.mxu0 0.0
    %1343 = vmatprep.subr.mxu0 0.0
    %1344 = vmatpush1.msra.mxu0 0.0
    %1345 = vmatprep.subr.mxu0 0.0
    %1346 = vmatpush1.msra.mxu0 0.0
    %1347 = vmatprep.subr.mxu0 0.0
    %1348 = vmatpush1.msra.mxu0 0.0
    %1349 = vmatprep.subr.mxu0 0.0
    %1350 = vmatpush1.msra.mxu0 0.0
    %1351 = vmatprep.subr.mxu0 0.0
    %1352 = vmatpush1.msra.mxu0 0.0
    %1353 = vmatprep.subr.mxu0 0.0
    %1354 = vmatpush1.msra.mxu0 0.0
    %1355 = vmatprep.subr.mxu0 0.0
    %1356 = vmatpush1.msra.mxu0 0.0
    %1357 = vmatprep.subr.mxu0 0.0
    %1358 = vmatpush1.msra.mxu0 0.0
    %1359 = vmatprep.subr.mxu0 0.0
    %1360 = vmatpush1.msra.mxu0 0.0
    %1361 = vmatprep.mubr.f32.mxu0 0.0
    %v1362 = vand.u32 %v1117, 4294901760
    %v1363 = vsub.f32 %v1117, %v1362
    %1364 = vmatmul.mubr.f32.gmra.mrb[0].mxu0 %v1363
    %v1365 = vpop.f32.mrb[0].mxu0
    %v1366 = vadd.f32 %v1286, %v1365
    %v1367 = vpop.f32.mrb[0].mxu0
    %1368 = vdwg.mxu0
    %1369 = vmatprep.subr.mxu0 0.0
    %v1370 = vand.u32 %v588, 4294901760
    %1371 = vmatpush1.msra.mxu0 %v1370
    %1372 = vmatprep.subr.mxu0 0.0
    %v1373 = vand.u32 %v589, 4294901760
    %1374 = vmatpush1.msra.mxu0 %v1373
    %1375 = vmatprep.subr.mxu0 0.0
    %v1376 = vand.u32 %v590, 4294901760
    %1377 = vmatpush1.msra.mxu0 %v1376
    %1378 = vmatprep.subr.mxu0 0.0
    %v1379 = vand.u32 %v591, 4294901760
    %1380 = vmatpush1.msra.mxu0 %v1379
    %1381 = vmatprep.subr.mxu0 0.0
    %1382 = vmatpush1.msra.mxu0 0.0
    %1383 = vmatprep.subr.mxu0 0.0
    %1384 = vmatpush1.msra.mxu0 0.0
    %1385 = vmatprep.subr.mxu0 0.0
    %1386 = vmatpush1.msra.mxu0 0.0
    %1387 = vmatprep.subr.mxu0 0.0
    %1388 = vmatpush1.msra.mxu0 0.0
    %1389 = vmatprep.subr.mxu0 0.0
    %1390 = vmatpush1.msra.mxu0 0.0
    %1391 = vmatprep.subr.mxu0 0.0
    %1392 = vmatpush1.msra.mxu0 0.0
    %1393 = vmatprep.subr.mxu0 0.0
    %1394 = vmatpush1.msra.mxu0 0.0
    %1395 = vmatprep.subr.mxu0 0.0
    %1396 = vmatpush1.msra.mxu0 0.0
    %1397 = vmatprep.subr.mxu0 0.0
    %1398 = vmatpush1.msra.mxu0 0.0
    %1399 = vmatprep.subr.mxu0 0.0
    %1400 = vmatpush1.msra.mxu0 0.0
    %1401 = vmatprep.subr.mxu0 0.0
    %1402 = vmatpush1.msra.mxu0 0.0
    %1403 = vmatprep.subr.mxu0 0.0
    %1404 = vmatpush1.msra.mxu0 0.0
    %1405 = vmatprep.subr.mxu0 0.0
    %1406 = vmatpush1.msra.mxu0 0.0
    %1407 = vmatprep.subr.mxu0 0.0
    %1408 = vmatpush1.msra.mxu0 0.0
    %1409 = vmatprep.subr.mxu0 0.0
    %1410 = vmatpush1.msra.mxu0 0.0
    %1411 = vmatprep.subr.mxu0 0.0
    %1412 = vmatpush1.msra.mxu0 0.0
    %1413 = vmatprep.subr.mxu0 0.0
    %1414 = vmatpush1.msra.mxu0 0.0
    %1415 = vmatprep.subr.mxu0 0.0
    %1416 = vmatpush1.msra.mxu0 0.0
    %1417 = vmatprep.subr.mxu0 0.0
    %1418 = vmatpush1.msra.mxu0 0.0
    %1419 = vmatprep.subr.mxu0 0.0
    %1420 = vmatpush1.msra.mxu0 0.0
    %1421 = vmatprep.subr.mxu0 0.0
    %1422 = vmatpush1.msra.mxu0 0.0
    %1423 = vmatprep.subr.mxu0 0.0
    %1424 = vmatpush1.msra.mxu0 0.0
    %1425 = vmatprep.subr.mxu0 0.0
    %1426 = vmatpush1.msra.mxu0 0.0
    %1427 = vmatprep.subr.mxu0 0.0
    %1428 = vmatpush1.msra.mxu0 0.0
    %1429 = vmatprep.subr.mxu0 0.0
    %1430 = vmatpush1.msra.mxu0 0.0
    %1431 = vmatprep.subr.mxu0 0.0
    %1432 = vmatpush1.msra.mxu0 0.0
    %1433 = vmatprep.subr.mxu0 0.0
    %1434 = vmatpush1.msra.mxu0 0.0
    %1435 = vmatprep.subr.mxu0 0.0
    %1436 = vmatpush1.msra.mxu0 0.0
    %1437 = vmatprep.mubr.f32.mxu0 0.0
    %v1438 = vand.u32 %v1117, 4294901760
    %v1439 = vsub.f32 %v1117, %v1438
    %v1440 = vand.u32 %v1439, 4294901760
    %1441 = vmatmul.mubr.f32.gmra.mrb[0].mxu0 %v1440
    %v1442 = vpop.f32.mrb[0].mxu0
    %v1443 = vadd.f32 %v1366, %v1442
    %v1444 = vpop.f32.mrb[0].mxu0
    %1445 = vdwg.mxu0
    %1446 = vmatprep.subr.mxu0 0.0
    %v1447 = vand.u32 %v588, 4294901760
    %v1448 = vsub.f32 %v588, %v1447
    %v1449 = vand.u32 %v1448, 4294901760
    %1450 = vmatpush1.msra.mxu0 %v1449
    %1451 = vmatprep.subr.mxu0 0.0
    %v1452 = vand.u32 %v589, 4294901760
    %v1453 = vsub.f32 %v589, %v1452
    %v1454 = vand.u32 %v1453, 4294901760
    %1455 = vmatpush1.msra.mxu0 %v1454
    %1456 = vmatprep.subr.mxu0 0.0
    %v1457 = vand.u32 %v590, 4294901760
    %v1458 = vsub.f32 %v590, %v1457
    %v1459 = vand.u32 %v1458, 4294901760
    %1460 = vmatpush1.msra.mxu0 %v1459
    %1461 = vmatprep.subr.mxu0 0.0
    %v1462 = vand.u32 %v591, 4294901760
    %v1463 = vsub.f32 %v591, %v1462
    %v1464 = vand.u32 %v1463, 4294901760
    %1465 = vmatpush1.msra.mxu0 %v1464
    %1466 = vmatprep.subr.mxu0 0.0
    %1467 = vmatpush1.msra.mxu0 0.0
    %1468 = vmatprep.subr.mxu0 0.0
    %1469 = vmatpush1.msra.mxu0 0.0
    %1470 = vmatprep.subr.mxu0 0.0
    %1471 = vmatpush1.msra.mxu0 0.0
    %1472 = vmatprep.subr.mxu0 0.0
    %1473 = vmatpush1.msra.mxu0 0.0
    %1474 = vmatprep.subr.mxu0 0.0
    %1475 = vmatpush1.msra.mxu0 0.0
    %1476 = vmatprep.subr.mxu0 0.0
    %1477 = vmatpush1.msra.mxu0 0.0
    %1478 = vmatprep.subr.mxu0 0.0
    %1479 = vmatpush1.msra.mxu0 0.0
    %1480 = vmatprep.subr.mxu0 0.0
    %1481 = vmatpush1.msra.mxu0 0.0
    %1482 = vmatprep.subr.mxu0 0.0
    %1483 = vmatpush1.msra.mxu0 0.0
    %1484 = vmatprep.subr.mxu0 0.0
    %1485 = vmatpush1.msra.mxu0 0.0
    %1486 = vmatprep.subr.mxu0 0.0
    %1487 = vmatpush1.msra.mxu0 0.0
    %1488 = vmatprep.subr.mxu0 0.0
    %1489 = vmatpush1.msra.mxu0 0.0
    %1490 = vmatprep.subr.mxu0 0.0
    %1491 = vmatpush1.msra.mxu0 0.0
    %1492 = vmatprep.subr.mxu0 0.0
    %1493 = vmatpush1.msra.mxu0 0.0
    %1494 = vmatprep.subr.mxu0 0.0
    %1495 = vmatpush1.msra.mxu0 0.0
    %1496 = vmatprep.subr.mxu0 0.0
    %1497 = vmatpush1.msra.mxu0 0.0
    %1498 = vmatprep.subr.mxu0 0.0
    %1499 = vmatpush1.msra.mxu0 0.0
    %1500 = vmatprep.subr.mxu0 0.0
    %1501 = vmatpush1.msra.mxu0 0.0
    %1502 = vmatprep.subr.mxu0 0.0
    %1503 = vmatpush1.msra.mxu0 0.0
    %1504 = vmatprep.subr.mxu0 0.0
    %1505 = vmatpush1.msra.mxu0 0.0
    %1506 = vmatprep.subr.mxu0 0.0
    %1507 = vmatpush1.msra.mxu0 0.0
    %1508 = vmatprep.subr.mxu0 0.0
    %1509 = vmatpush1.msra.mxu0 0.0
    %1510 = vmatprep.subr.mxu0 0.0
    %1511 = vmatpush1.msra.mxu0 0.0
    %1512 = vmatprep.subr.mxu0 0.0
    %1513 = vmatpush1.msra.mxu0 0.0
    %1514 = vmatprep.subr.mxu0 0.0
    %1515 = vmatpush1.msra.mxu0 0.0
    %1516 = vmatprep.subr.mxu0 0.0
    %1517 = vmatpush1.msra.mxu0 0.0
    %1518 = vmatprep.subr.mxu0 0.0
    %1519 = vmatpush1.msra.mxu0 0.0
    %1520 = vmatprep.subr.mxu0 0.0
    %1521 = vmatpush1.msra.mxu0 0.0
    %1522 = vmatprep.mubr.f32.mxu0 0.0
    %v1523 = vand.u32 %v1117, 4294901760
    %1524 = vmatmul.mubr.f32.gmra.mrb[0].mxu0 %v1523
    %v1525 = vpop.f32.mrb[0].mxu0
    %v1526 = vadd.f32 %v1443, %v1525
    %v1527 = vpop.f32.mrb[0].mxu0
    %1528 = vdwg.mxu0
    %1529 = vmatprep.subr.mxu0 0.0
    %v1530 = vand.u32 %v588, 4294901760
    %1531 = vmatpush1.msra.mxu0 %v1530
    %1532 = vmatprep.subr.mxu0 0.0
    %v1533 = vand.u32 %v589, 4294901760
    %1534 = vmatpush1.msra.mxu0 %v1533
    %1535 = vmatprep.subr.mxu0 0.0
    %v1536 = vand.u32 %v590, 4294901760
    %1537 = vmatpush1.msra.mxu0 %v1536
    %1538 = vmatprep.subr.mxu0 0.0
    %v1539 = vand.u32 %v591, 4294901760
    %1540 = vmatpush1.msra.mxu0 %v1539
    %1541 = vmatprep.subr.mxu0 0.0
    %1542 = vmatpush1.msra.mxu0 0.0
    %1543 = vmatprep.subr.mxu0 0.0
    %1544 = vmatpush1.msra.mxu0 0.0
    %1545 = vmatprep.subr.mxu0 0.0
    %1546 = vmatpush1.msra.mxu0 0.0
    %1547 = vmatprep.subr.mxu0 0.0
    %1548 = vmatpush1.msra.mxu0 0.0
    %1549 = vmatprep.subr.mxu0 0.0
    %1550 = vmatpush1.msra.mxu0 0.0
    %1551 = vmatprep.subr.mxu0 0.0
    %1552 = vmatpush1.msra.mxu0 0.0
    %1553 = vmatprep.subr.mxu0 0.0
    %1554 = vmatpush1.msra.mxu0 0.0
    %1555 = vmatprep.subr.mxu0 0.0
    %1556 = vmatpush1.msra.mxu0 0.0
    %1557 = vmatprep.subr.mxu0 0.0
    %1558 = vmatpush1.msra.mxu0 0.0
    %1559 = vmatprep.subr.mxu0 0.0
    %1560 = vmatpush1.msra.mxu0 0.0
    %1561 = vmatprep.subr.mxu0 0.0
    %1562 = vmatpush1.msra.mxu0 0.0
    %1563 = vmatprep.subr.mxu0 0.0
    %1564 = vmatpush1.msra.mxu0 0.0
    %1565 = vmatprep.subr.mxu0 0.0
    %1566 = vmatpush1.msra.mxu0 0.0
    %1567 = vmatprep.subr.mxu0 0.0
    %1568 = vmatpush1.msra.mxu0 0.0
    %1569 = vmatprep.subr.mxu0 0.0
    %1570 = vmatpush1.msra.mxu0 0.0
    %1571 = vmatprep.subr.mxu0 0.0
    %1572 = vmatpush1.msra.mxu0 0.0
    %1573 = vmatprep.subr.mxu0 0.0
    %1574 = vmatpush1.msra.mxu0 0.0
    %1575 = vmatprep.subr.mxu0 0.0
    %1576 = vmatpush1.msra.mxu0 0.0
    %1577 = vmatprep.subr.mxu0 0.0
    %1578 = vmatpush1.msra.mxu0 0.0
    %1579 = vmatprep.subr.mxu0 0.0
    %1580 = vmatpush1.msra.mxu0 0.0
    %1581 = vmatprep.subr.mxu0 0.0
    %1582 = vmatpush1.msra.mxu0 0.0
    %1583 = vmatprep.subr.mxu0 0.0
    %1584 = vmatpush1.msra.mxu0 0.0
    %1585 = vmatprep.subr.mxu0 0.0
    %1586 = vmatpush1.msra.mxu0 0.0
    %1587 = vmatprep.subr.mxu0 0.0
    %1588 = vmatpush1.msra.mxu0 0.0
    %1589 = vmatprep.subr.mxu0 0.0
    %1590 = vmatpush1.msra.mxu0 0.0
    %1591 = vmatprep.subr.mxu0 0.0
    %1592 = vmatpush1.msra.mxu0 0.0
    %1593 = vmatprep.subr.mxu0 0.0
    %1594 = vmatpush1.msra.mxu0 0.0
    %1595 = vmatprep.subr.mxu0 0.0
    %1596 = vmatpush1.msra.mxu0 0.0
    %1597 = vmatprep.mubr.f32.mxu0 0.0
    %v1598 = vand.u32 %v1117, 4294901760
    %1599 = vmatmul.mubr.f32.gmra.mrb[0].mxu0 %v1598
    %v1600 = vpop.f32.mrb[0].mxu0
    %v1601 = vadd.f32 %v1526, %v1600
    %v1602 = vpop.f32.mrb[0].mxu0
    %1603 = vdwg.mxu0
    %v1604 = vadd.f32 %v1116, %v1601
    %v1605 = vmul.f32 %v1604, 0.5
    %v1606 = vtanh.pop %v1605
    %v1607 = vadd.f32 %v1606, 1.0
    %v1608 = vmul.f32 %v1607, 0.5
    %v1609 = vtanh.pop %v1604
    %v1610 = vsel %vm596, %v1609, %v1608
    %v1611 = vmul.f32 %v1610, %v1103
    %1613 = vrot.lane.b32.xlu0 %v1610, 64
    %v1614 = vpop.permute.xlu0 %1613
    %v1616 = vmul.f32 %v1610, %v1614
    %1618 = vrot.lane.b32.xlu0 %v1616, 32
    %v1619 = vpop.permute.xlu0 %1618
    %v1621 = vadd.f32 %v1611, %v1619
    %v1622 = vtanh.pop %v1621
    %1624 = vrot.lane.b32.xlu0 %v1622, 64
    %v1625 = vpop.permute.xlu0 %1624
    %v1627 = vmul.f32 %v1610, %v1625
    %1629 = vrot.lane.b32.xlu0 %v1627, 32
    %v1630 = vpop.permute.xlu0 %1629
    %1632 = vst.msk [vmem:[#allocation3 + $0x2] sm:$0x3] %vm1114, %v1630
    %v1633 = vld [vmem:[#allocation2 + $0x4] sm:$0x3]
    %v1634 = vsel %vm51, %v1630, 0
    %1636 = vmatprep.subr.mxu0 0.0
    %v1637 = vand.u32 %v588, 4294901760
    %1638 = vmatpush1.msra.mxu0 %v1637
    %1639 = vmatprep.subr.mxu0 0.0
    %v1640 = vand.u32 %v589, 4294901760
    %1641 = vmatpush1.msra.mxu0 %v1640
    %1642 = vmatprep.subr.mxu0 0.0
    %v1643 = vand.u32 %v590, 4294901760
    %1644 = vmatpush1.msra.mxu0 %v1643
    %1645 = vmatprep.subr.mxu0 0.0
    %v1646 = vand.u32 %v591, 4294901760
    %1647 = vmatpush1.msra.mxu0 %v1646
    %1648 = vmatprep.subr.mxu0 0.0
    %1649 = vmatpush1.msra.mxu0 0.0
    %1650 = vmatprep.subr.mxu0 0.0
    %1651 = vmatpush1.msra.mxu0 0.0
    %1652 = vmatprep.subr.mxu0 0.0
    %1653 = vmatpush1.msra.mxu0 0.0
    %1654 = vmatprep.subr.mxu0 0.0
    %1655 = vmatpush1.msra.mxu0 0.0
    %1656 = vmatprep.subr.mxu0 0.0
    %1657 = vmatpush1.msra.mxu0 0.0
    %1658 = vmatprep.subr.mxu0 0.0
    %1659 = vmatpush1.msra.mxu0 0.0
    %1660 = vmatprep.subr.mxu0 0.0
    %1661 = vmatpush1.msra.mxu0 0.0
    %1662 = vmatprep.subr.mxu0 0.0
    %1663 = vmatpush1.msra.mxu0 0.0
    %1664 = vmatprep.subr.mxu0 0.0
    %1665 = vmatpush1.msra.mxu0 0.0
    %1666 = vmatprep.subr.mxu0 0.0
    %1667 = vmatpush1.msra.mxu0 0.0
    %1668 = vmatprep.subr.mxu0 0.0
    %1669 = vmatpush1.msra.mxu0 0.0
    %1670 = vmatprep.subr.mxu0 0.0
    %1671 = vmatpush1.msra.mxu0 0.0
    %1672 = vmatprep.subr.mxu0 0.0
    %1673 = vmatpush1.msra.mxu0 0.0
    %1674 = vmatprep.subr.mxu0 0.0
    %1675 = vmatpush1.msra.mxu0 0.0
    %1676 = vmatprep.subr.mxu0 0.0
    %1677 = vmatpush1.msra.mxu0 0.0
    %1678 = vmatprep.subr.mxu0 0.0
    %1679 = vmatpush1.msra.mxu0 0.0
    %1680 = vmatprep.subr.mxu0 0.0
    %1681 = vmatpush1.msra.mxu0 0.0
    %1682 = vmatprep.subr.mxu0 0.0
    %1683 = vmatpush1.msra.mxu0 0.0
    %1684 = vmatprep.subr.mxu0 0.0
    %1685 = vmatpush1.msra.mxu0 0.0
    %1686 = vmatprep.subr.mxu0 0.0
    %1687 = vmatpush1.msra.mxu0 0.0
    %1688 = vmatprep.subr.mxu0 0.0
    %1689 = vmatpush1.msra.mxu0 0.0
    %1690 = vmatprep.subr.mxu0 0.0
    %1691 = vmatpush1.msra.mxu0 0.0
    %1692 = vmatprep.subr.mxu0 0.0
    %1693 = vmatpush1.msra.mxu0 0.0
    %1694 = vmatprep.subr.mxu0 0.0
    %1695 = vmatpush1.msra.mxu0 0.0
    %1696 = vmatprep.subr.mxu0 0.0
    %1697 = vmatpush1.msra.mxu0 0.0
    %1698 = vmatprep.subr.mxu0 0.0
    %1699 = vmatpush1.msra.mxu0 0.0
    %1700 = vmatprep.subr.mxu0 0.0
    %1701 = vmatpush1.msra.mxu0 0.0
    %1702 = vmatprep.subr.mxu0 0.0
    %1703 = vmatpush1.msra.mxu0 0.0
    %1704 = vmatprep.mubr.f32.mxu0 0.0
    %v1705 = vand.u32 %v1634, 4294901760
    %v1706 = vsub.f32 %v1634, %v1705
    %v1707 = vand.u32 %v1706, 4294901760
    %v1708 = vsub.f32 %v1706, %v1707
    %v1709 = vand.u32 %v1708, 4294901760
    %1710 = vmatmul.mubr.f32.gmra.mrb[0].mxu0 %v1709
    %v1711 = vpop.f32.mrb[0].mxu0
    %v1712 = vadd.f32 0.0, %v1711
    %v1713 = vpop.f32.mrb[0].mxu0
    %1714 = vdwg.mxu0
    %1715 = vmatprep.subr.mxu0 0.0
    %v1716 = vand.u32 %v588, 4294901760
    %v1717 = vsub.f32 %v588, %v1716
    %v1718 = vand.u32 %v1717, 4294901760
    %v1719 = vsub.f32 %v1717, %v1718
    %v1720 = vand.u32 %v1719, 4294901760
    %1721 = vmatpush1.msra.mxu0 %v1720
    %1722 = vmatprep.subr.mxu0 0.0
    %v1723 = vand.u32 %v589, 4294901760
    %v1724 = vsub.f32 %v589, %v1723
    %v1725 = vand.u32 %v1724, 4294901760
    %v1726 = vsub.f32 %v1724, %v1725
    %v1727 = vand.u32 %v1726, 4294901760
    %1728 = vmatpush1.msra.mxu0 %v1727
    %1729 = vmatprep.subr.mxu0 0.0
    %v1730 = vand.u32 %v590, 4294901760
    %v1731 = vsub.f32 %v590, %v1730
    %v1732 = vand.u32 %v1731, 4294901760
    %v1733 = vsub.f32 %v1731, %v1732
    %v1734 = vand.u32 %v1733, 4294901760
    %1735 = vmatpush1.msra.mxu0 %v1734
    %1736 = vmatprep.subr.mxu0 0.0
    %v1737 = vand.u32 %v591, 4294901760
    %v1738 = vsub.f32 %v591, %v1737
    %v1739 = vand.u32 %v1738, 4294901760
    %v1740 = vsub.f32 %v1738, %v1739
    %v1741 = vand.u32 %v1740, 4294901760
    %1742 = vmatpush1.msra.mxu0 %v1741
    %1743 = vmatprep.subr.mxu0 0.0
    %1744 = vmatpush1.msra.mxu0 0.0
    %1745 = vmatprep.subr.mxu0 0.0
    %1746 = vmatpush1.msra.mxu0 0.0
    %1747 = vmatprep.subr.mxu0 0.0
    %1748 = vmatpush1.msra.mxu0 0.0
    %1749 = vmatprep.subr.mxu0 0.0
    %1750 = vmatpush1.msra.mxu0 0.0
    %1751 = vmatprep.subr.mxu0 0.0
    %1752 = vmatpush1.msra.mxu0 0.0
    %1753 = vmatprep.subr.mxu0 0.0
    %1754 = vmatpush1.msra.mxu0 0.0
    %1755 = vmatprep.subr.mxu0 0.0
    %1756 = vmatpush1.msra.mxu0 0.0
    %1757 = vmatprep.subr.mxu0 0.0
    %1758 = vmatpush1.msra.mxu0 0.0
    %1759 = vmatprep.subr.mxu0 0.0
    %1760 = vmatpush1.msra.mxu0 0.0
    %1761 = vmatprep.subr.mxu0 0.0
    %1762 = vmatpush1.msra.mxu0 0.0
    %1763 = vmatprep.subr.mxu0 0.0
    %1764 = vmatpush1.msra.mxu0 0.0
    %1765 = vmatprep.subr.mxu0 0.0
    %1766 = vmatpush1.msra.mxu0 0.0
    %1767 = vmatprep.subr.mxu0 0.0
    %1768 = vmatpush1.msra.mxu0 0.0
    %1769 = vmatprep.subr.mxu0 0.0
    %1770 = vmatpush1.msra.mxu0 0.0
    %1771 = vmatprep.subr.mxu0 0.0
    %1772 = vmatpush1.msra.mxu0 0.0
    %1773 = vmatprep.subr.mxu0 0.0
    %1774 = vmatpush1.msra.mxu0 0.0
    %1775 = vmatprep.subr.mxu0 0.0
    %1776 = vmatpush1.msra.mxu0 0.0
    %1777 = vmatprep.subr.mxu0 0.0
    %1778 = vmatpush1.msra.mxu0 0.0
    %1779 = vmatprep.subr.mxu0 0.0
    %1780 = vmatpush1.msra.mxu0 0.0
    %1781 = vmatprep.subr.mxu0 0.0
    %1782 = vmatpush1.msra.mxu0 0.0
    %1783 = vmatprep.subr.mxu0 0.0
    %1784 = vmatpush1.msra.mxu0 0.0
    %1785 = vmatprep.subr.mxu0 0.0
    %1786 = vmatpush1.msra.mxu0 0.0
    %1787 = vmatprep.subr.mxu0 0.0
    %1788 = vmatpush1.msra.mxu0 0.0
    %1789 = vmatprep.subr.mxu0 0.0
    %1790 = vmatpush1.msra.mxu0 0.0
    %1791 = vmatprep.subr.mxu0 0.0
    %1792 = vmatpush1.msra.mxu0 0.0
    %1793 = vmatprep.subr.mxu0 0.0
    %1794 = vmatpush1.msra.mxu0 0.0
    %1795 = vmatprep.subr.mxu0 0.0
    %1796 = vmatpush1.msra.mxu0 0.0
    %1797 = vmatprep.subr.mxu0 0.0
    %1798 = vmatpush1.msra.mxu0 0.0
    %1799 = vmatprep.mubr.f32.mxu0 0.0
    %v1800 = vand.u32 %v1634, 4294901760
    %1801 = vmatmul.mubr.f32.gmra.mrb[0].mxu0 %v1800
    %v1802 = vpop.f32.mrb[0].mxu0
    %v1803 = vadd.f32 %v1712, %v1802
    %v1804 = vpop.f32.mrb[0].mxu0
    %1805 = vdwg.mxu0
    %1806 = vmatprep.subr.mxu0 0.0
    %v1807 = vand.u32 %v588, 4294901760
    %v1808 = vsub.f32 %v588, %v1807
    %1809 = vmatpush1.msra.mxu0 %v1808
    %1810 = vmatprep.subr.mxu0 0.0
    %v1811 = vand.u32 %v589, 4294901760
    %v1812 = vsub.f32 %v589, %v1811
    %1813 = vmatpush1.msra.mxu0 %v1812
    %1814 = vmatprep.subr.mxu0 0.0
    %v1815 = vand.u32 %v590, 4294901760
    %v1816 = vsub.f32 %v590, %v1815
    %1817 = vmatpush1.msra.mxu0 %v1816
    %1818 = vmatprep.subr.mxu0 0.0
    %v1819 = vand.u32 %v591, 4294901760
    %v1820 = vsub.f32 %v591, %v1819
    %1821 = vmatpush1.msra.mxu0 %v1820
    %1822 = vmatprep.subr.mxu0 0.0
    %1823 = vmatpush1.msra.mxu0 0.0
    %1824 = vmatprep.subr.mxu0 0.0
    %1825 = vmatpush1.msra.mxu0 0.0
    %1826 = vmatprep.subr.mxu0 0.0
    %1827 = vmatpush1.msra.mxu0 0.0
    %1828 = vmatprep.subr.mxu0 0.0
    %1829 = vmatpush1.msra.mxu0 0.0
    %1830 = vmatprep.subr.mxu0 0.0
    %1831 = vmatpush1.msra.mxu0 0.0
    %1832 = vmatprep.subr.mxu0 0.0
    %1833 = vmatpush1.msra.mxu0 0.0
    %1834 = vmatprep.subr.mxu0 0.0
    %1835 = vmatpush1.msra.mxu0 0.0
    %1836 = vmatprep.subr.mxu0 0.0
    %1837 = vmatpush1.msra.mxu0 0.0
    %1838 = vmatprep.subr.mxu0 0.0
    %1839 = vmatpush1.msra.mxu0 0.0
    %1840 = vmatprep.subr.mxu0 0.0
    %1841 = vmatpush1.msra.mxu0 0.0
    %1842 = vmatprep.subr.mxu0 0.0
    %1843 = vmatpush1.msra.mxu0 0.0
    %1844 = vmatprep.subr.mxu0 0.0
    %1845 = vmatpush1.msra.mxu0 0.0
    %1846 = vmatprep.subr.mxu0 0.0
    %1847 = vmatpush1.msra.mxu0 0.0
    %1848 = vmatprep.subr.mxu0 0.0
    %1849 = vmatpush1.msra.mxu0 0.0
    %1850 = vmatprep.subr.mxu0 0.0
    %1851 = vmatpush1.msra.mxu0 0.0
    %1852 = vmatprep.subr.mxu0 0.0
    %1853 = vmatpush1.msra.mxu0 0.0
    %1854 = vmatprep.subr.mxu0 0.0
    %1855 = vmatpush1.msra.mxu0 0.0
    %1856 = vmatprep.subr.mxu0 0.0
    %1857 = vmatpush1.msra.mxu0 0.0
    %1858 = vmatprep.subr.mxu0 0.0
    %1859 = vmatpush1.msra.mxu0 0.0
    %1860 = vmatprep.subr.mxu0 0.0
    %1861 = vmatpush1.msra.mxu0 0.0
    %1862 = vmatprep.subr.mxu0 0.0
    %1863 = vmatpush1.msra.mxu0 0.0
    %1864 = vmatprep.subr.mxu0 0.0
    %1865 = vmatpush1.msra.mxu0 0.0
    %1866 = vmatprep.subr.mxu0 0.0
    %1867 = vmatpush1.msra.mxu0 0.0
    %1868 = vmatprep.subr.mxu0 0.0
    %1869 = vmatpush1.msra.mxu0 0.0
    %1870 = vmatprep.subr.mxu0 0.0
    %1871 = vmatpush1.msra.mxu0 0.0
    %1872 = vmatprep.subr.mxu0 0.0
    %1873 = vmatpush1.msra.mxu0 0.0
    %1874 = vmatprep.subr.mxu0 0.0
    %1875 = vmatpush1.msra.mxu0 0.0
    %1876 = vmatprep.subr.mxu0 0.0
    %1877 = vmatpush1.msra.mxu0 0.0
    %1878 = vmatprep.mubr.f32.mxu0 0.0
    %v1879 = vand.u32 %v1634, 4294901760
    %v1880 = vsub.f32 %v1634, %v1879
    %1881 = vmatmul.mubr.f32.gmra.mrb[0].mxu0 %v1880
    %v1882 = vpop.f32.mrb[0].mxu0
    %v1883 = vadd.f32 %v1803, %v1882
    %v1884 = vpop.f32.mrb[0].mxu0
    %1885 = vdwg.mxu0
    %1886 = vmatprep.subr.mxu0 0.0
    %v1887 = vand.u32 %v588, 4294901760
    %1888 = vmatpush1.msra.mxu0 %v1887
    %1889 = vmatprep.subr.mxu0 0.0
    %v1890 = vand.u32 %v589, 4294901760
    %1891 = vmatpush1.msra.mxu0 %v1890
    %1892 = vmatprep.subr.mxu0 0.0
    %v1893 = vand.u32 %v590, 4294901760
    %1894 = vmatpush1.msra.mxu0 %v1893
    %1895 = vmatprep.subr.mxu0 0.0
    %v1896 = vand.u32 %v591, 4294901760
    %1897 = vmatpush1.msra.mxu0 %v1896
    %1898 = vmatprep.subr.mxu0 0.0
    %1899 = vmatpush1.msra.mxu0 0.0
    %1900 = vmatprep.subr.mxu0 0.0
    %1901 = vmatpush1.msra.mxu0 0.0
    %1902 = vmatprep.subr.mxu0 0.0
    %1903 = vmatpush1.msra.mxu0 0.0
    %1904 = vmatprep.subr.mxu0 0.0
    %1905 = vmatpush1.msra.mxu0 0.0
    %1906 = vmatprep.subr.mxu0 0.0
    %1907 = vmatpush1.msra.mxu0 0.0
    %1908 = vmatprep.subr.mxu0 0.0
    %1909 = vmatpush1.msra.mxu0 0.0
    %1910 = vmatprep.subr.mxu0 0.0
    %1911 = vmatpush1.msra.mxu0 0.0
    %1912 = vmatprep.subr.mxu0 0.0
    %1913 = vmatpush1.msra.mxu0 0.0
    %1914 = vmatprep.subr.mxu0 0.0
    %1915 = vmatpush1.msra.mxu0 0.0
    %1916 = vmatprep.subr.mxu0 0.0
    %1917 = vmatpush1.msra.mxu0 0.0
    %1918 = vmatprep.subr.mxu0 0.0
    %1919 = vmatpush1.msra.mxu0 0.0
    %1920 = vmatprep.subr.mxu0 0.0
    %1921 = vmatpush1.msra.mxu0 0.0
    %1922 = vmatprep.subr.mxu0 0.0
    %1923 = vmatpush1.msra.mxu0 0.0
    %1924 = vmatprep.subr.mxu0 0.0
    %1925 = vmatpush1.msra.mxu0 0.0
    %1926 = vmatprep.subr.mxu0 0.0
    %1927 = vmatpush1.msra.mxu0 0.0
    %1928 = vmatprep.subr.mxu0 0.0
    %1929 = vmatpush1.msra.mxu0 0.0
    %1930 = vmatprep.subr.mxu0 0.0
    %1931 = vmatpush1.msra.mxu0 0.0
    %1932 = vmatprep.subr.mxu0 0.0
    %1933 = vmatpush1.msra.mxu0 0.0
    %1934 = vmatprep.subr.mxu0 0.0
    %1935 = vmatpush1.msra.mxu0 0.0
    %1936 = vmatprep.subr.mxu0 0.0
    %1937 = vmatpush1.msra.mxu0 0.0
    %1938 = vmatprep.subr.mxu0 0.0
    %1939 = vmatpush1.msra.mxu0 0.0
    %1940 = vmatprep.subr.mxu0 0.0
    %1941 = vmatpush1.msra.mxu0 0.0
    %1942 = vmatprep.subr.mxu0 0.0
    %1943 = vmatpush1.msra.mxu0 0.0
    %1944 = vmatprep.subr.mxu0 0.0
    %1945 = vmatpush1.msra.mxu0 0.0
    %1946 = vmatprep.subr.mxu0 0.0
    %1947 = vmatpush1.msra.mxu0 0.0
    %1948 = vmatprep.subr.mxu0 0.0
    %1949 = vmatpush1.msra.mxu0 0.0
    %1950 = vmatprep.subr.mxu0 0.0
    %1951 = vmatpush1.msra.mxu0 0.0
    %1952 = vmatprep.subr.mxu0 0.0
    %1953 = vmatpush1.msra.mxu0 0.0
    %1954 = vmatprep.mubr.f32.mxu0 0.0
    %v1955 = vand.u32 %v1634, 4294901760
    %v1956 = vsub.f32 %v1634, %v1955
    %v1957 = vand.u32 %v1956, 4294901760
    %1958 = vmatmul.mubr.f32.gmra.mrb[0].mxu0 %v1957
    %v1959 = vpop.f32.mrb[0].mxu0
    %v1960 = vadd.f32 %v1883, %v1959
    %v1961 = vpop.f32.mrb[0].mxu0
    %1962 = vdwg.mxu0
    %1963 = vmatprep.subr.mxu0 0.0
    %v1964 = vand.u32 %v588, 4294901760
    %v1965 = vsub.f32 %v588, %v1964
    %v1966 = vand.u32 %v1965, 4294901760
    %1967 = vmatpush1.msra.mxu0 %v1966
    %1968 = vmatprep.subr.mxu0 0.0
    %v1969 = vand.u32 %v589, 4294901760
    %v1970 = vsub.f32 %v589, %v1969
    %v1971 = vand.u32 %v1970, 4294901760
    %1972 = vmatpush1.msra.mxu0 %v1971
    %1973 = vmatprep.subr.mxu0 0.0
    %v1974 = vand.u32 %v590, 4294901760
    %v1975 = vsub.f32 %v590, %v1974
    %v1976 = vand.u32 %v1975, 4294901760
    %1977 = vmatpush1.msra.mxu0 %v1976
    %1978 = vmatprep.subr.mxu0 0.0
    %v1979 = vand.u32 %v591, 4294901760
    %v1980 = vsub.f32 %v591, %v1979
    %v1981 = vand.u32 %v1980, 4294901760
    %1982 = vmatpush1.msra.mxu0 %v1981
    %1983 = vmatprep.subr.mxu0 0.0
    %1984 = vmatpush1.msra.mxu0 0.0
    %1985 = vmatprep.subr.mxu0 0.0
    %1986 = vmatpush1.msra.mxu0 0.0
    %1987 = vmatprep.subr.mxu0 0.0
    %1988 = vmatpush1.msra.mxu0 0.0
    %1989 = vmatprep.subr.mxu0 0.0
    %1990 = vmatpush1.msra.mxu0 0.0
    %1991 = vmatprep.subr.mxu0 0.0
    %1992 = vmatpush1.msra.mxu0 0.0
    %1993 = vmatprep.subr.mxu0 0.0
    %1994 = vmatpush1.msra.mxu0 0.0
    %1995 = vmatprep.subr.mxu0 0.0
    %1996 = vmatpush1.msra.mxu0 0.0
    %1997 = vmatprep.subr.mxu0 0.0
    %1998 = vmatpush1.msra.mxu0 0.0
    %1999 = vmatprep.subr.mxu0 0.0
    %2000 = vmatpush1.msra.mxu0 0.0
    %2001 = vmatprep.subr.mxu0 0.0
    %2002 = vmatpush1.msra.mxu0 0.0
    %2003 = vmatprep.subr.mxu0 0.0
    %2004 = vmatpush1.msra.mxu0 0.0
    %2005 = vmatprep.subr.mxu0 0.0
    %2006 = vmatpush1.msra.mxu0 0.0
    %2007 = vmatprep.subr.mxu0 0.0
    %2008 = vmatpush1.msra.mxu0 0.0
    %2009 = vmatprep.subr.mxu0 0.0
    %2010 = vmatpush1.msra.mxu0 0.0
    %2011 = vmatprep.subr.mxu0 0.0
    %2012 = vmatpush1.msra.mxu0 0.0
    %2013 = vmatprep.subr.mxu0 0.0
    %2014 = vmatpush1.msra.mxu0 0.0
    %2015 = vmatprep.subr.mxu0 0.0
    %2016 = vmatpush1.msra.mxu0 0.0
    %2017 = vmatprep.subr.mxu0 0.0
    %2018 = vmatpush1.msra.mxu0 0.0
    %2019 = vmatprep.subr.mxu0 0.0
    %2020 = vmatpush1.msra.mxu0 0.0
    %2021 = vmatprep.subr.mxu0 0.0
    %2022 = vmatpush1.msra.mxu0 0.0
    %2023 = vmatprep.subr.mxu0 0.0
    %2024 = vmatpush1.msra.mxu0 0.0
    %2025 = vmatprep.subr.mxu0 0.0
    %2026 = vmatpush1.msra.mxu0 0.0
    %2027 = vmatprep.subr.mxu0 0.0
    %2028 = vmatpush1.msra.mxu0 0.0
    %2029 = vmatprep.subr.mxu0 0.0
    %2030 = vmatpush1.msra.mxu0 0.0
    %2031 = vmatprep.subr.mxu0 0.0
    %2032 = vmatpush1.msra.mxu0 0.0
    %2033 = vmatprep.subr.mxu0 0.0
    %2034 = vmatpush1.msra.mxu0 0.0
    %2035 = vmatprep.subr.mxu0 0.0
    %2036 = vmatpush1.msra.mxu0 0.0
    %2037 = vmatprep.subr.mxu0 0.0
    %2038 = vmatpush1.msra.mxu0 0.0
    %2039 = vmatprep.mubr.f32.mxu0 0.0
    %v2040 = vand.u32 %v1634, 4294901760
    %2041 = vmatmul.mubr.f32.gmra.mrb[0].mxu0 %v2040
    %v2042 = vpop.f32.mrb[0].mxu0
    %v2043 = vadd.f32 %v1960, %v2042
    %v2044 = vpop.f32.mrb[0].mxu0
    %2045 = vdwg.mxu0
    %2046 = vmatprep.subr.mxu0 0.0
    %v2047 = vand.u32 %v588, 4294901760
    %2048 = vmatpush1.msra.mxu0 %v2047
    %2049 = vmatprep.subr.mxu0 0.0
    %v2050 = vand.u32 %v589, 4294901760
    %2051 = vmatpush1.msra.mxu0 %v2050
    %2052 = vmatprep.subr.mxu0 0.0
    %v2053 = vand.u32 %v590, 4294901760
    %2054 = vmatpush1.msra.mxu0 %v2053
    %2055 = vmatprep.subr.mxu0 0.0
    %v2056 = vand.u32 %v591, 4294901760
    %2057 = vmatpush1.msra.mxu0 %v2056
    %2058 = vmatprep.subr.mxu0 0.0
    %2059 = vmatpush1.msra.mxu0 0.0
    %2060 = vmatprep.subr.mxu0 0.0
    %2061 = vmatpush1.msra.mxu0 0.0
    %2062 = vmatprep.subr.mxu0 0.0
    %2063 = vmatpush1.msra.mxu0 0.0
    %2064 = vmatprep.subr.mxu0 0.0
    %2065 = vmatpush1.msra.mxu0 0.0
    %2066 = vmatprep.subr.mxu0 0.0
    %2067 = vmatpush1.msra.mxu0 0.0
    %2068 = vmatprep.subr.mxu0 0.0
    %2069 = vmatpush1.msra.mxu0 0.0
    %2070 = vmatprep.subr.mxu0 0.0
    %2071 = vmatpush1.msra.mxu0 0.0
    %2072 = vmatprep.subr.mxu0 0.0
    %2073 = vmatpush1.msra.mxu0 0.0
    %2074 = vmatprep.subr.mxu0 0.0
    %2075 = vmatpush1.msra.mxu0 0.0
    %2076 = vmatprep.subr.mxu0 0.0
    %2077 = vmatpush1.msra.mxu0 0.0
    %2078 = vmatprep.subr.mxu0 0.0
    %2079 = vmatpush1.msra.mxu0 0.0
    %2080 = vmatprep.subr.mxu0 0.0
    %2081 = vmatpush1.msra.mxu0 0.0
    %2082 = vmatprep.subr.mxu0 0.0
    %2083 = vmatpush1.msra.mxu0 0.0
    %2084 = vmatprep.subr.mxu0 0.0
    %2085 = vmatpush1.msra.mxu0 0.0
    %2086 = vmatprep.subr.mxu0 0.0
    %2087 = vmatpush1.msra.mxu0 0.0
    %2088 = vmatprep.subr.mxu0 0.0
    %2089 = vmatpush1.msra.mxu0 0.0
    %2090 = vmatprep.subr.mxu0 0.0
    %2091 = vmatpush1.msra.mxu0 0.0
    %2092 = vmatprep.subr.mxu0 0.0
    %2093 = vmatpush1.msra.mxu0 0.0
    %2094 = vmatprep.subr.mxu0 0.0
    %2095 = vmatpush1.msra.mxu0 0.0
    %2096 = vmatprep.subr.mxu0 0.0
    %2097 = vmatpush1.msra.mxu0 0.0
    %2098 = vmatprep.subr.mxu0 0.0
    %2099 = vmatpush1.msra.mxu0 0.0
    %2100 = vmatprep.subr.mxu0 0.0
    %2101 = vmatpush1.msra.mxu0 0.0
    %2102 = vmatprep.subr.mxu0 0.0
    %2103 = vmatpush1.msra.mxu0 0.0
    %2104 = vmatprep.subr.mxu0 0.0
    %2105 = vmatpush1.msra.mxu0 0.0
    %2106 = vmatprep.subr.mxu0 0.0
    %2107 = vmatpush1.msra.mxu0 0.0
    %2108 = vmatprep.subr.mxu0 0.0
    %2109 = vmatpush1.msra.mxu0 0.0
    %2110 = vmatprep.subr.mxu0 0.0
    %2111 = vmatpush1.msra.mxu0 0.0
    %2112 = vmatprep.subr.mxu0 0.0
    %2113 = vmatpush1.msra.mxu0 0.0
    %2114 = vmatprep.mubr.f32.mxu0 0.0
    %v2115 = vand.u32 %v1634, 4294901760
    %2116 = vmatmul.mubr.f32.gmra.mrb[0].mxu0 %v2115
    %v2117 = vpop.f32.mrb[0].mxu0
    %v2118 = vadd.f32 %v2043, %v2117
    %v2119 = vpop.f32.mrb[0].mxu0
    %2120 = vdwg.mxu0
    %v2121 = vadd.f32 %v1633, %v2118
    %v2122 = vmul.f32 %v2121, 0.5
    %v2123 = vtanh.pop %v2122
    %v2124 = vadd.f32 %v2123, 1.0
    %v2125 = vmul.f32 %v2124, 0.5
    %v2126 = vtanh.pop %v2121
    %v2127 = vsel %vm596, %v2126, %v2125
    %v2128 = vmul.f32 %v2127, %v1621
    %2130 = vrot.lane.b32.xlu0 %v2127, 64
    %v2131 = vpop.permute.xlu0 %2130
    %v2133 = vmul.f32 %v2127, %v2131
    %2135 = vrot.lane.b32.xlu0 %v2133, 32
    %v2136 = vpop.permute.xlu0 %2135
    %v2138 = vadd.f32 %v2128, %v2136
    %v2139 = vtanh.pop %v2138
    %2141 = vrot.lane.b32.xlu0 %v2139, 64
    %v2142 = vpop.permute.xlu0 %2141
    %v2144 = vmul.f32 %v2127, %v2142
    %2146 = vrot.lane.b32.xlu0 %v2144, 32
    %v2147 = vpop.permute.xlu0 %2146
    %2149 = vst.msk [vmem:[#allocation3 + $0x4] sm:$0x3] %vm1114, %v2147
    %v2150 = vld [vmem:[#allocation2 + $0x6] sm:$0x3]
    %v2151 = vsel %vm51, %v2147, 0
    %2153 = vmatprep.subr.mxu0 0.0
    %v2154 = vand.u32 %v588, 4294901760
    %2155 = vmatpush1.msra.mxu0 %v2154
    %2156 = vmatprep.subr.mxu0 0.0
    %v2157 = vand.u32 %v589, 4294901760
    %2158 = vmatpush1.msra.mxu0 %v2157
    %2159 = vmatprep.subr.mxu0 0.0
    %v2160 = vand.u32 %v590, 4294901760
    %2161 = vmatpush1.msra.mxu0 %v2160
    %2162 = vmatprep.subr.mxu0 0.0
    %v2163 = vand.u32 %v591, 4294901760
    %2164 = vmatpush1.msra.mxu0 %v2163
    %2165 = vmatprep.subr.mxu0 0.0
    %2166 = vmatpush1.msra.mxu0 0.0
    %2167 = vmatprep.subr.mxu0 0.0
    %2168 = vmatpush1.msra.mxu0 0.0
    %2169 = vmatprep.subr.mxu0 0.0
    %2170 = vmatpush1.msra.mxu0 0.0
    %2171 = vmatprep.subr.mxu0 0.0
    %2172 = vmatpush1.msra.mxu0 0.0
    %2173 = vmatprep.subr.mxu0 0.0
    %2174 = vmatpush1.msra.mxu0 0.0
    %2175 = vmatprep.subr.mxu0 0.0
    %2176 = vmatpush1.msra.mxu0 0.0
    %2177 = vmatprep.subr.mxu0 0.0
    %2178 = vmatpush1.msra.mxu0 0.0
    %2179 = vmatprep.subr.mxu0 0.0
    %2180 = vmatpush1.msra.mxu0 0.0
    %2181 = vmatprep.subr.mxu0 0.0
    %2182 = vmatpush1.msra.mxu0 0.0
    %2183 = vmatprep.subr.mxu0 0.0
    %2184 = vmatpush1.msra.mxu0 0.0
    %2185 = vmatprep.subr.mxu0 0.0
    %2186 = vmatpush1.msra.mxu0 0.0
    %2187 = vmatprep.subr.mxu0 0.0
    %2188 = vmatpush1.msra.mxu0 0.0
    %2189 = vmatprep.subr.mxu0 0.0
    %2190 = vmatpush1.msra.mxu0 0.0
    %2191 = vmatprep.subr.mxu0 0.0
    %2192 = vmatpush1.msra.mxu0 0.0
    %2193 = vmatprep.subr.mxu0 0.0
    %2194 = vmatpush1.msra.mxu0 0.0
    %2195 = vmatprep.subr.mxu0 0.0
    %2196 = vmatpush1.msra.mxu0 0.0
    %2197 = vmatprep.subr.mxu0 0.0
    %2198 = vmatpush1.msra.mxu0 0.0
    %2199 = vmatprep.subr.mxu0 0.0
    %2200 = vmatpush1.msra.mxu0 0.0
    %2201 = vmatprep.subr.mxu0 0.0
    %2202 = vmatpush1.msra.mxu0 0.0
    %2203 = vmatprep.subr.mxu0 0.0
    %2204 = vmatpush1.msra.mxu0 0.0
    %2205 = vmatprep.subr.mxu0 0.0
    %2206 = vmatpush1.msra.mxu0 0.0
    %2207 = vmatprep.subr.mxu0 0.0
    %2208 = vmatpush1.msra.mxu0 0.0
    %2209 = vmatprep.subr.mxu0 0.0
    %2210 = vmatpush1.msra.mxu0 0.0
    %2211 = vmatprep.subr.mxu0 0.0
    %2212 = vmatpush1.msra.mxu0 0.0
    %2213 = vmatprep.subr.mxu0 0.0
    %2214 = vmatpush1.msra.mxu0 0.0
    %2215 = vmatprep.subr.mxu0 0.0
    %2216 = vmatpush1.msra.mxu0 0.0
    %2217 = vmatprep.subr.mxu0 0.0
    %2218 = vmatpush1.msra.mxu0 0.0
    %2219 = vmatprep.subr.mxu0 0.0
    %2220 = vmatpush1.msra.mxu0 0.0
    %2221 = vmatprep.mubr.f32.mxu0 0.0
    %v2222 = vand.u32 %v2151, 4294901760
    %v2223 = vsub.f32 %v2151, %v2222
    %v2224 = vand.u32 %v2223, 4294901760
    %v2225 = vsub.f32 %v2223, %v2224
    %v2226 = vand.u32 %v2225, 4294901760
    %2227 = vmatmul.mubr.f32.gmra.mrb[0].mxu0 %v2226
    %v2228 = vpop.f32.mrb[0].mxu0
    %v2229 = vadd.f32 0.0, %v2228
    %v2230 = vpop.f32.mrb[0].mxu0
    %2231 = vdwg.mxu0
    %2232 = vmatprep.subr.mxu0 0.0
    %v2233 = vand.u32 %v588, 4294901760
    %v2234 = vsub.f32 %v588, %v2233
    %v2235 = vand.u32 %v2234, 4294901760
    %v2236 = vsub.f32 %v2234, %v2235
    %v2237 = vand.u32 %v2236, 4294901760
    %2238 = vmatpush1.msra.mxu0 %v2237
    %2239 = vmatprep.subr.mxu0 0.0
    %v2240 = vand.u32 %v589, 4294901760
    %v2241 = vsub.f32 %v589, %v2240
    %v2242 = vand.u32 %v2241, 4294901760
    %v2243 = vsub.f32 %v2241, %v2242
    %v2244 = vand.u32 %v2243, 4294901760
    %2245 = vmatpush1.msra.mxu0 %v2244
    %2246 = vmatprep.subr.mxu0 0.0
    %v2247 = vand.u32 %v590, 4294901760
    %v2248 = vsub.f32 %v590, %v2247
    %v2249 = vand.u32 %v2248, 4294901760
    %v2250 = vsub.f32 %v2248, %v2249
    %v2251 = vand.u32 %v2250, 4294901760
    %2252 = vmatpush1.msra.mxu0 %v2251
    %2253 = vmatprep.subr.mxu0 0.0
    %v2254 = vand.u32 %v591, 4294901760
    %v2255 = vsub.f32 %v591, %v2254
    %v2256 = vand.u32 %v2255, 4294901760
    %v2257 = vsub.f32 %v2255, %v2256
    %v2258 = vand.u32 %v2257, 4294901760
    %2259 = vmatpush1.msra.mxu0 %v2258
    %2260 = vmatprep.subr.mxu0 0.0
    %2261 = vmatpush1.msra.mxu0 0.0
    %2262 = vmatprep.subr.mxu0 0.0
    %2263 = vmatpush1.msra.mxu0 0.0
    %2264 = vmatprep.subr.mxu0 0.0
    %2265 = vmatpush1.msra.mxu0 0.0
    %2266 = vmatprep.subr.mxu0 0.0
    %2267 = vmatpush1.msra.mxu0 0.0
    %2268 = vmatprep.subr.mxu0 0.0
    %2269 = vmatpush1.msra.mxu0 0.0
    %2270 = vmatprep.subr.mxu0 0.0
    %2271 = vmatpush1.msra.mxu0 0.0
    %2272 = vmatprep.subr.mxu0 0.0
    %2273 = vmatpush1.msra.mxu0 0.0
    %2274 = vmatprep.subr.mxu0 0.0
    %2275 = vmatpush1.msra.mxu0 0.0
    %2276 = vmatprep.subr.mxu0 0.0
    %2277 = vmatpush1.msra.mxu0 0.0
    %2278 = vmatprep.subr.mxu0 0.0
    %2279 = vmatpush1.msra.mxu0 0.0
    %2280 = vmatprep.subr.mxu0 0.0
    %2281 = vmatpush1.msra.mxu0 0.0
    %2282 = vmatprep.subr.mxu0 0.0
    %2283 = vmatpush1.msra.mxu0 0.0
    %2284 = vmatprep.subr.mxu0 0.0
    %2285 = vmatpush1.msra.mxu0 0.0
    %2286 = vmatprep.subr.mxu0 0.0
    %2287 = vmatpush1.msra.mxu0 0.0
    %2288 = vmatprep.subr.mxu0 0.0
    %2289 = vmatpush1.msra.mxu0 0.0
    %2290 = vmatprep.subr.mxu0 0.0
    %2291 = vmatpush1.msra.mxu0 0.0
    %2292 = vmatprep.subr.mxu0 0.0
    %2293 = vmatpush1.msra.mxu0 0.0
    %2294 = vmatprep.subr.mxu0 0.0
    %2295 = vmatpush1.msra.mxu0 0.0
    %2296 = vmatprep.subr.mxu0 0.0
    %2297 = vmatpush1.msra.mxu0 0.0
    %2298 = vmatprep.subr.mxu0 0.0
    %2299 = vmatpush1.msra.mxu0 0.0
    %2300 = vmatprep.subr.mxu0 0.0
    %2301 = vmatpush1.msra.mxu0 0.0
    %2302 = vmatprep.subr.mxu0 0.0
    %2303 = vmatpush1.msra.mxu0 0.0
    %2304 = vmatprep.subr.mxu0 0.0
    %2305 = vmatpush1.msra.mxu0 0.0
    %2306 = vmatprep.subr.mxu0 0.0
    %2307 = vmatpush1.msra.mxu0 0.0
    %2308 = vmatprep.subr.mxu0 0.0
    %2309 = vmatpush1.msra.mxu0 0.0
    %2310 = vmatprep.subr.mxu0 0.0
    %2311 = vmatpush1.msra.mxu0 0.0
    %2312 = vmatprep.subr.mxu0 0.0
    %2313 = vmatpush1.msra.mxu0 0.0
    %2314 = vmatprep.subr.mxu0 0.0
    %2315 = vmatpush1.msra.mxu0 0.0
    %2316 = vmatprep.mubr.f32.mxu0 0.0
    %v2317 = vand.u32 %v2151, 4294901760
    %2318 = vmatmul.mubr.f32.gmra.mrb[0].mxu0 %v2317
    %v2319 = vpop.f32.mrb[0].mxu0
    %v2320 = vadd.f32 %v2229, %v2319
    %v2321 = vpop.f32.mrb[0].mxu0
    %2322 = vdwg.mxu0
    %2323 = vmatprep.subr.mxu0 0.0
    %v2324 = vand.u32 %v588, 4294901760
    %v2325 = vsub.f32 %v588, %v2324
    %2326 = vmatpush1.msra.mxu0 %v2325
    %2327 = vmatprep.subr.mxu0 0.0
    %v2328 = vand.u32 %v589, 4294901760
    %v2329 = vsub.f32 %v589, %v2328
    %2330 = vmatpush1.msra.mxu0 %v2329
    %2331 = vmatprep.subr.mxu0 0.0
    %v2332 = vand.u32 %v590, 4294901760
    %v2333 = vsub.f32 %v590, %v2332
    %2334 = vmatpush1.msra.mxu0 %v2333
    %2335 = vmatprep.subr.mxu0 0.0
    %v2336 = vand.u32 %v591, 4294901760
    %v2337 = vsub.f32 %v591, %v2336
    %2338 = vmatpush1.msra.mxu0 %v2337
    %2339 = vmatprep.subr.mxu0 0.0
    %2340 = vmatpush1.msra.mxu0 0.0
    %2341 = vmatprep.subr.mxu0 0.0
    %2342 = vmatpush1.msra.mxu0 0.0
    %2343 = vmatprep.subr.mxu0 0.0
    %2344 = vmatpush1.msra.mxu0 0.0
    %2345 = vmatprep.subr.mxu0 0.0
    %2346 = vmatpush1.msra.mxu0 0.0
    %2347 = vmatprep.subr.mxu0 0.0
    %2348 = vmatpush1.msra.mxu0 0.0
    %2349 = vmatprep.subr.mxu0 0.0
    %2350 = vmatpush1.msra.mxu0 0.0
    %2351 = vmatprep.subr.mxu0 0.0
    %2352 = vmatpush1.msra.mxu0 0.0
    %2353 = vmatprep.subr.mxu0 0.0
    %2354 = vmatpush1.msra.mxu0 0.0
    %2355 = vmatprep.subr.mxu0 0.0
    %2356 = vmatpush1.msra.mxu0 0.0
    %2357 = vmatprep.subr.mxu0 0.0
    %2358 = vmatpush1.msra.mxu0 0.0
    %2359 = vmatprep.subr.mxu0 0.0
    %2360 = vmatpush1.msra.mxu0 0.0
    %2361 = vmatprep.subr.mxu0 0.0
    %2362 = vmatpush1.msra.mxu0 0.0
    %2363 = vmatprep.subr.mxu0 0.0
    %2364 = vmatpush1.msra.mxu0 0.0
    %2365 = vmatprep.subr.mxu0 0.0
    %2366 = vmatpush1.msra.mxu0 0.0
    %2367 = vmatprep.subr.mxu0 0.0
    %2368 = vmatpush1.msra.mxu0 0.0
    %2369 = vmatprep.subr.mxu0 0.0
    %2370 = vmatpush1.msra.mxu0 0.0
    %2371 = vmatprep.subr.mxu0 0.0
    %2372 = vmatpush1.msra.mxu0 0.0
    %2373 = vmatprep.subr.mxu0 0.0
    %2374 = vmatpush1.msra.mxu0 0.0
    %2375 = vmatprep.subr.mxu0 0.0
    %2376 = vmatpush1.msra.mxu0 0.0
    %2377 = vmatprep.subr.mxu0 0.0
    %2378 = vmatpush1.msra.mxu0 0.0
    %2379 = vmatprep.subr.mxu0 0.0
    %2380 = vmatpush1.msra.mxu0 0.0
    %2381 = vmatprep.subr.mxu0 0.0
    %2382 = vmatpush1.msra.mxu0 0.0
    %2383 = vmatprep.subr.mxu0 0.0
    %2384 = vmatpush1.msra.mxu0 0.0
    %2385 = vmatprep.subr.mxu0 0.0
    %2386 = vmatpush1.msra.mxu0 0.0
    %2387 = vmatprep.subr.mxu0 0.0
    %2388 = vmatpush1.msra.mxu0 0.0
    %2389 = vmatprep.subr.mxu0 0.0
    %2390 = vmatpush1.msra.mxu0 0.0
    %2391 = vmatprep.subr.mxu0 0.0
    %2392 = vmatpush1.msra.mxu0 0.0
    %2393 = vmatprep.subr.mxu0 0.0
    %2394 = vmatpush1.msra.mxu0 0.0
    %2395 = vmatprep.mubr.f32.mxu0 0.0
    %v2396 = vand.u32 %v2151, 4294901760
    %v2397 = vsub.f32 %v2151, %v2396
    %2398 = vmatmul.mubr.f32.gmra.mrb[0].mxu0 %v2397
    %v2399 = vpop.f32.mrb[0].mxu0
    %v2400 = vadd.f32 %v2320, %v2399
    %v2401 = vpop.f32.mrb[0].mxu0
    %2402 = vdwg.mxu0
    %2403 = vmatprep.subr.mxu0 0.0
    %v2404 = vand.u32 %v588, 4294901760
    %2405 = vmatpush1.msra.mxu0 %v2404
    %2406 = vmatprep.subr.mxu0 0.0
    %v2407 = vand.u32 %v589, 4294901760
    %2408 = vmatpush1.msra.mxu0 %v2407
    %2409 = vmatprep.subr.mxu0 0.0
    %v2410 = vand.u32 %v590, 4294901760
    %2411 = vmatpush1.msra.mxu0 %v2410
    %2412 = vmatprep.subr.mxu0 0.0
    %v2413 = vand.u32 %v591, 4294901760
    %2414 = vmatpush1.msra.mxu0 %v2413
    %2415 = vmatprep.subr.mxu0 0.0
    %2416 = vmatpush1.msra.mxu0 0.0
    %2417 = vmatprep.subr.mxu0 0.0
    %2418 = vmatpush1.msra.mxu0 0.0
    %2419 = vmatprep.subr.mxu0 0.0
    %2420 = vmatpush1.msra.mxu0 0.0
    %2421 = vmatprep.subr.mxu0 0.0
    %2422 = vmatpush1.msra.mxu0 0.0
    %2423 = vmatprep.subr.mxu0 0.0
    %2424 = vmatpush1.msra.mxu0 0.0
    %2425 = vmatprep.subr.mxu0 0.0
    %2426 = vmatpush1.msra.mxu0 0.0
    %2427 = vmatprep.subr.mxu0 0.0
    %2428 = vmatpush1.msra.mxu0 0.0
    %2429 = vmatprep.subr.mxu0 0.0
    %2430 = vmatpush1.msra.mxu0 0.0
    %2431 = vmatprep.subr.mxu0 0.0
    %2432 = vmatpush1.msra.mxu0 0.0
    %2433 = vmatprep.subr.mxu0 0.0
    %2434 = vmatpush1.msra.mxu0 0.0
    %2435 = vmatprep.subr.mxu0 0.0
    %2436 = vmatpush1.msra.mxu0 0.0
    %2437 = vmatprep.subr.mxu0 0.0
    %2438 = vmatpush1.msra.mxu0 0.0
    %2439 = vmatprep.subr.mxu0 0.0
    %2440 = vmatpush1.msra.mxu0 0.0
    %2441 = vmatprep.subr.mxu0 0.0
    %2442 = vmatpush1.msra.mxu0 0.0
    %2443 = vmatprep.subr.mxu0 0.0
    %2444 = vmatpush1.msra.mxu0 0.0
    %2445 = vmatprep.subr.mxu0 0.0
    %2446 = vmatpush1.msra.mxu0 0.0
    %2447 = vmatprep.subr.mxu0 0.0
    %2448 = vmatpush1.msra.mxu0 0.0
    %2449 = vmatprep.subr.mxu0 0.0
    %2450 = vmatpush1.msra.mxu0 0.0
    %2451 = vmatprep.subr.mxu0 0.0
    %2452 = vmatpush1.msra.mxu0 0.0
    %2453 = vmatprep.subr.mxu0 0.0
    %2454 = vmatpush1.msra.mxu0 0.0
    %2455 = vmatprep.subr.mxu0 0.0
    %2456 = vmatpush1.msra.mxu0 0.0
    %2457 = vmatprep.subr.mxu0 0.0
    %2458 = vmatpush1.msra.mxu0 0.0
    %2459 = vmatprep.subr.mxu0 0.0
    %2460 = vmatpush1.msra.mxu0 0.0
    %2461 = vmatprep.subr.mxu0 0.0
    %2462 = vmatpush1.msra.mxu0 0.0
    %2463 = vmatprep.subr.mxu0 0.0
    %2464 = vmatpush1.msra.mxu0 0.0
    %2465 = vmatprep.subr.mxu0 0.0
    %2466 = vmatpush1.msra.mxu0 0.0
    %2467 = vmatprep.subr.mxu0 0.0
    %2468 = vmatpush1.msra.mxu0 0.0
    %2469 = vmatprep.subr.mxu0 0.0
    %2470 = vmatpush1.msra.mxu0 0.0
    %2471 = vmatprep.mubr.f32.mxu0 0.0
    %v2472 = vand.u32 %v2151, 4294901760
    %v2473 = vsub.f32 %v2151, %v2472
    %v2474 = vand.u32 %v2473, 4294901760
    %2475 = vmatmul.mubr.f32.gmra.mrb[0].mxu0 %v2474
    %v2476 = vpop.f32.mrb[0].mxu0
    %v2477 = vadd.f32 %v2400, %v2476
    %v2478 = vpop.f32.mrb[0].mxu0
    %2479 = vdwg.mxu0
    %2480 = vmatprep.subr.mxu0 0.0
    %v2481 = vand.u32 %v588, 4294901760
    %v2482 = vsub.f32 %v588, %v2481
    %v2483 = vand.u32 %v2482, 4294901760
    %2484 = vmatpush1.msra.mxu0 %v2483
    %2485 = vmatprep.subr.mxu0 0.0
    %v2486 = vand.u32 %v589, 4294901760
    %v2487 = vsub.f32 %v589, %v2486
    %v2488 = vand.u32 %v2487, 4294901760
    %2489 = vmatpush1.msra.mxu0 %v2488
    %2490 = vmatprep.subr.mxu0 0.0
    %v2491 = vand.u32 %v590, 4294901760
    %v2492 = vsub.f32 %v590, %v2491
    %v2493 = vand.u32 %v2492, 4294901760
    %2494 = vmatpush1.msra.mxu0 %v2493
    %2495 = vmatprep.subr.mxu0 0.0
    %v2496 = vand.u32 %v591, 4294901760
    %v2497 = vsub.f32 %v591, %v2496
    %v2498 = vand.u32 %v2497, 4294901760
    %2499 = vmatpush1.msra.mxu0 %v2498
    %2500 = vmatprep.subr.mxu0 0.0
    %2501 = vmatpush1.msra.mxu0 0.0
    %2502 = vmatprep.subr.mxu0 0.0
    %2503 = vmatpush1.msra.mxu0 0.0
    %2504 = vmatprep.subr.mxu0 0.0
    %2505 = vmatpush1.msra.mxu0 0.0
    %2506 = vmatprep.subr.mxu0 0.0
    %2507 = vmatpush1.msra.mxu0 0.0
    %2508 = vmatprep.subr.mxu0 0.0
    %2509 = vmatpush1.msra.mxu0 0.0
    %2510 = vmatprep.subr.mxu0 0.0
    %2511 = vmatpush1.msra.mxu0 0.0
    %2512 = vmatprep.subr.mxu0 0.0
    %2513 = vmatpush1.msra.mxu0 0.0
    %2514 = vmatprep.subr.mxu0 0.0
    %2515 = vmatpush1.msra.mxu0 0.0
    %2516 = vmatprep.subr.mxu0 0.0
    %2517 = vmatpush1.msra.mxu0 0.0
    %2518 = vmatprep.subr.mxu0 0.0
    %2519 = vmatpush1.msra.mxu0 0.0
    %2520 = vmatprep.subr.mxu0 0.0
    %2521 = vmatpush1.msra.mxu0 0.0
    %2522 = vmatprep.subr.mxu0 0.0
    %2523 = vmatpush1.msra.mxu0 0.0
    %2524 = vmatprep.subr.mxu0 0.0
    %2525 = vmatpush1.msra.mxu0 0.0
    %2526 = vmatprep.subr.mxu0 0.0
    %2527 = vmatpush1.msra.mxu0 0.0
    %2528 = vmatprep.subr.mxu0 0.0
    %2529 = vmatpush1.msra.mxu0 0.0
    %2530 = vmatprep.subr.mxu0 0.0
    %2531 = vmatpush1.msra.mxu0 0.0
    %2532 = vmatprep.subr.mxu0 0.0
    %2533 = vmatpush1.msra.mxu0 0.0
    %2534 = vmatprep.subr.mxu0 0.0
    %2535 = vmatpush1.msra.mxu0 0.0
    %2536 = vmatprep.subr.mxu0 0.0
    %2537 = vmatpush1.msra.mxu0 0.0
    %2538 = vmatprep.subr.mxu0 0.0
    %2539 = vmatpush1.msra.mxu0 0.0
    %2540 = vmatprep.subr.mxu0 0.0
    %2541 = vmatpush1.msra.mxu0 0.0
    %2542 = vmatprep.subr.mxu0 0.0
    %2543 = vmatpush1.msra.mxu0 0.0
    %2544 = vmatprep.subr.mxu0 0.0
    %2545 = vmatpush1.msra.mxu0 0.0
    %2546 = vmatprep.subr.mxu0 0.0
    %2547 = vmatpush1.msra.mxu0 0.0
    %2548 = vmatprep.subr.mxu0 0.0
    %2549 = vmatpush1.msra.mxu0 0.0
    %2550 = vmatprep.subr.mxu0 0.0
    %2551 = vmatpush1.msra.mxu0 0.0
    %2552 = vmatprep.subr.mxu0 0.0
    %2553 = vmatpush1.msra.mxu0 0.0
    %2554 = vmatprep.subr.mxu0 0.0
    %2555 = vmatpush1.msra.mxu0 0.0
    %2556 = vmatprep.mubr.f32.mxu0 0.0
    %v2557 = vand.u32 %v2151, 4294901760
    %2558 = vmatmul.mubr.f32.gmra.mrb[0].mxu0 %v2557
    %v2559 = vpop.f32.mrb[0].mxu0
    %v2560 = vadd.f32 %v2477, %v2559
    %v2561 = vpop.f32.mrb[0].mxu0
    %2562 = vdwg.mxu0
    %2563 = vmatprep.subr.mxu0 0.0
    %v2564 = vand.u32 %v588, 4294901760
    %2565 = vmatpush1.msra.mxu0 %v2564
    %2566 = vmatprep.subr.mxu0 0.0
    %v2567 = vand.u32 %v589, 4294901760
    %2568 = vmatpush1.msra.mxu0 %v2567
    %2569 = vmatprep.subr.mxu0 0.0
    %v2570 = vand.u32 %v590, 4294901760
    %2571 = vmatpush1.msra.mxu0 %v2570
    %2572 = vmatprep.subr.mxu0 0.0
    %v2573 = vand.u32 %v591, 4294901760
    %2574 = vmatpush1.msra.mxu0 %v2573
    %2575 = vmatprep.subr.mxu0 0.0
    %2576 = vmatpush1.msra.mxu0 0.0
    %2577 = vmatprep.subr.mxu0 0.0
    %2578 = vmatpush1.msra.mxu0 0.0
    %2579 = vmatprep.subr.mxu0 0.0
    %2580 = vmatpush1.msra.mxu0 0.0
    %2581 = vmatprep.subr.mxu0 0.0
    %2582 = vmatpush1.msra.mxu0 0.0
    %2583 = vmatprep.subr.mxu0 0.0
    %2584 = vmatpush1.msra.mxu0 0.0
    %2585 = vmatprep.subr.mxu0 0.0
    %2586 = vmatpush1.msra.mxu0 0.0
    %2587 = vmatprep.subr.mxu0 0.0
    %2588 = vmatpush1.msra.mxu0 0.0
    %2589 = vmatprep.subr.mxu0 0.0
    %2590 = vmatpush1.msra.mxu0 0.0
    %2591 = vmatprep.subr.mxu0 0.0
    %2592 = vmatpush1.msra.mxu0 0.0
    %2593 = vmatprep.subr.mxu0 0.0
    %2594 = vmatpush1.msra.mxu0 0.0
    %2595 = vmatprep.subr.mxu0 0.0
    %2596 = vmatpush1.msra.mxu0 0.0
    %2597 = vmatprep.subr.mxu0 0.0
    %2598 = vmatpush1.msra.mxu0 0.0
    %2599 = vmatprep.subr.mxu0 0.0
    %2600 = vmatpush1.msra.mxu0 0.0
    %2601 = vmatprep.subr.mxu0 0.0
    %2602 = vmatpush1.msra.mxu0 0.0
    %2603 = vmatprep.subr.mxu0 0.0
    %2604 = vmatpush1.msra.mxu0 0.0
    %2605 = vmatprep.subr.mxu0 0.0
    %2606 = vmatpush1.msra.mxu0 0.0
    %2607 = vmatprep.subr.mxu0 0.0
    %2608 = vmatpush1.msra.mxu0 0.0
    %2609 = vmatprep.subr.mxu0 0.0
    %2610 = vmatpush1.msra.mxu0 0.0
    %2611 = vmatprep.subr.mxu0 0.0
    %2612 = vmatpush1.msra.mxu0 0.0
    %2613 = vmatprep.subr.mxu0 0.0
    %2614 = vmatpush1.msra.mxu0 0.0
    %2615 = vmatprep.subr.mxu0 0.0
    %2616 = vmatpush1.msra.mxu0 0.0
    %2617 = vmatprep.subr.mxu0 0.0
    %2618 = vmatpush1.msra.mxu0 0.0
    %2619 = vmatprep.subr.mxu0 0.0
    %2620 = vmatpush1.msra.mxu0 0.0
    %2621 = vmatprep.subr.mxu0 0.0
    %2622 = vmatpush1.msra.mxu0 0.0
    %2623 = vmatprep.subr.mxu0 0.0
    %2624 = vmatpush1.msra.mxu0 0.0
    %2625 = vmatprep.subr.mxu0 0.0
    %2626 = vmatpush1.msra.mxu0 0.0
    %2627 = vmatprep.subr.mxu0 0.0
    %2628 = vmatpush1.msra.mxu0 0.0
    %2629 = vmatprep.subr.mxu0 0.0
    %2630 = vmatpush1.msra.mxu0 0.0
    %2631 = vmatprep.mubr.f32.mxu0 0.0
    %v2632 = vand.u32 %v2151, 4294901760
    %2633 = vmatmul.mubr.f32.gmra.mrb[0].mxu0 %v2632
    %v2634 = vpop.f32.mrb[0].mxu0
    %v2635 = vadd.f32 %v2560, %v2634
    %v2636 = vpop.f32.mrb[0].mxu0
    %2637 = vdwg.mxu0
    %v2638 = vadd.f32 %v2150, %v2635
    %v2639 = vmul.f32 %v2638, 0.5
    %v2640 = vtanh.pop %v2639
    %v2641 = vadd.f32 %v2640, 1.0
    %v2642 = vmul.f32 %v2641, 0.5
    %v2643 = vtanh.pop %v2638
    %v2644 = vsel %vm596, %v2643, %v2642
    %v2645 = vmul.f32 %v2644, %v2138
    %2647 = vrot.lane.b32.xlu0 %v2644, 64
    %v2648 = vpop.permute.xlu0 %2647
    %v2650 = vmul.f32 %v2644, %v2648
    %2652 = vrot.lane.b32.xlu0 %v2650, 32
    %v2653 = vpop.permute.xlu0 %2652
    %v2655 = vadd.f32 %v2645, %v2653
    %v2656 = vtanh.pop %v2655
    %2658 = vrot.lane.b32.xlu0 %v2656, 64
    %v2659 = vpop.permute.xlu0 %2658
    %v2661 = vmul.f32 %v2644, %v2659
    %2663 = vrot.lane.b32.xlu0 %v2661, 32
    %v2664 = vpop.permute.xlu0 %2663
    %2666 = vst.msk [vmem:[#allocation3 + $0x6] sm:$0x3] %vm1114, %v2664
    %v2667 = vld [vmem:[#allocation2 + $0x8] sm:$0x3]
    %v2668 = vsel %vm51, %v2664, 0
    %2670 = vmatprep.subr.mxu0 0.0
    %v2671 = vand.u32 %v588, 4294901760
    %2672 = vmatpush1.msra.mxu0 %v2671
    %2673 = vmatprep.subr.mxu0 0.0
    %v2674 = vand.u32 %v589, 4294901760
    %2675 = vmatpush1.msra.mxu0 %v2674
    %2676 = vmatprep.subr.mxu0 0.0
    %v2677 = vand.u32 %v590, 4294901760
    %2678 = vmatpush1.msra.mxu0 %v2677
    %2679 = vmatprep.subr.mxu0 0.0
    %v2680 = vand.u32 %v591, 4294901760
    %2681 = vmatpush1.msra.mxu0 %v2680
    %2682 = vmatprep.subr.mxu0 0.0
    %2683 = vmatpush1.msra.mxu0 0.0
    %2684 = vmatprep.subr.mxu0 0.0
    %2685 = vmatpush1.msra.mxu0 0.0
    %2686 = vmatprep.subr.mxu0 0.0
    %2687 = vmatpush1.msra.mxu0 0.0
    %2688 = vmatprep.subr.mxu0 0.0
    %2689 = vmatpush1.msra.mxu0 0.0
    %2690 = vmatprep.subr.mxu0 0.0
    %2691 = vmatpush1.msra.mxu0 0.0
    %2692 = vmatprep.subr.mxu0 0.0
    %2693 = vmatpush1.msra.mxu0 0.0
    %2694 = vmatprep.subr.mxu0 0.0
    %2695 = vmatpush1.msra.mxu0 0.0
    %2696 = vmatprep.subr.mxu0 0.0
    %2697 = vmatpush1.msra.mxu0 0.0
    %2698 = vmatprep.subr.mxu0 0.0
    %2699 = vmatpush1.msra.mxu0 0.0
    %2700 = vmatprep.subr.mxu0 0.0
    %2701 = vmatpush1.msra.mxu0 0.0
    %2702 = vmatprep.subr.mxu0 0.0
    %2703 = vmatpush1.msra.mxu0 0.0
    %2704 = vmatprep.subr.mxu0 0.0
    %2705 = vmatpush1.msra.mxu0 0.0
    %2706 = vmatprep.subr.mxu0 0.0
    %2707 = vmatpush1.msra.mxu0 0.0
    %2708 = vmatprep.subr.mxu0 0.0
    %2709 = vmatpush1.msra.mxu0 0.0
    %2710 = vmatprep.subr.mxu0 0.0
    %2711 = vmatpush1.msra.mxu0 0.0
    %2712 = vmatprep.subr.mxu0 0.0
    %2713 = vmatpush1.msra.mxu0 0.0
    %2714 = vmatprep.subr.mxu0 0.0
    %2715 = vmatpush1.msra.mxu0 0.0
    %2716 = vmatprep.subr.mxu0 0.0
    %2717 = vmatpush1.msra.mxu0 0.0
    %2718 = vmatprep.subr.mxu0 0.0
    %2719 = vmatpush1.msra.mxu0 0.0
    %2720 = vmatprep.subr.mxu0 0.0
    %2721 = vmatpush1.msra.mxu0 0.0
    %2722 = vmatprep.subr.mxu0 0.0
    %2723 = vmatpush1.msra.mxu0 0.0
    %2724 = vmatprep.subr.mxu0 0.0
    %2725 = vmatpush1.msra.mxu0 0.0
    %2726 = vmatprep.subr.mxu0 0.0
    %2727 = vmatpush1.msra.mxu0 0.0
    %2728 = vmatprep.subr.mxu0 0.0
    %2729 = vmatpush1.msra.mxu0 0.0
    %2730 = vmatprep.subr.mxu0 0.0
    %2731 = vmatpush1.msra.mxu0 0.0
    %2732 = vmatprep.subr.mxu0 0.0
    %2733 = vmatpush1.msra.mxu0 0.0
    %2734 = vmatprep.subr.mxu0 0.0
    %2735 = vmatpush1.msra.mxu0 0.0
    %2736 = vmatprep.subr.mxu0 0.0
    %2737 = vmatpush1.msra.mxu0 0.0
    %2738 = vmatprep.mubr.f32.mxu0 0.0
    %v2739 = vand.u32 %v2668, 4294901760
    %v2740 = vsub.f32 %v2668, %v2739
    %v2741 = vand.u32 %v2740, 4294901760
    %v2742 = vsub.f32 %v2740, %v2741
    %v2743 = vand.u32 %v2742, 4294901760
    %2744 = vmatmul.mubr.f32.gmra.mrb[0].mxu0 %v2743
    %v2745 = vpop.f32.mrb[0].mxu0
    %v2746 = vadd.f32 0.0, %v2745
    %v2747 = vpop.f32.mrb[0].mxu0
    %2748 = vdwg.mxu0
    %2749 = vmatprep.subr.mxu0 0.0
    %v2750 = vand.u32 %v588, 4294901760
    %v2751 = vsub.f32 %v588, %v2750
    %v2752 = vand.u32 %v2751, 4294901760
    %v2753 = vsub.f32 %v2751, %v2752
    %v2754 = vand.u32 %v2753, 4294901760
    %2755 = vmatpush1.msra.mxu0 %v2754
    %2756 = vmatprep.subr.mxu0 0.0
    %v2757 = vand.u32 %v589, 4294901760
    %v2758 = vsub.f32 %v589, %v2757
    %v2759 = vand.u32 %v2758, 4294901760
    %v2760 = vsub.f32 %v2758, %v2759
    %v2761 = vand.u32 %v2760, 4294901760
    %2762 = vmatpush1.msra.mxu0 %v2761
    %2763 = vmatprep.subr.mxu0 0.0
    %v2764 = vand.u32 %v590, 4294901760
    %v2765 = vsub.f32 %v590, %v2764
    %v2766 = vand.u32 %v2765, 4294901760
    %v2767 = vsub.f32 %v2765, %v2766
    %v2768 = vand.u32 %v2767, 4294901760
    %2769 = vmatpush1.msra.mxu0 %v2768
    %2770 = vmatprep.subr.mxu0 0.0
    %v2771 = vand.u32 %v591, 4294901760
    %v2772 = vsub.f32 %v591, %v2771
    %v2773 = vand.u32 %v2772, 4294901760
    %v2774 = vsub.f32 %v2772, %v2773
    %v2775 = vand.u32 %v2774, 4294901760
    %2776 = vmatpush1.msra.mxu0 %v2775
    %2777 = vmatprep.subr.mxu0 0.0
    %2778 = vmatpush1.msra.mxu0 0.0
    %2779 = vmatprep.subr.mxu0 0.0
    %2780 = vmatpush1.msra.mxu0 0.0
    %2781 = vmatprep.subr.mxu0 0.0
    %2782 = vmatpush1.msra.mxu0 0.0
    %2783 = vmatprep.subr.mxu0 0.0
    %2784 = vmatpush1.msra.mxu0 0.0
    %2785 = vmatprep.subr.mxu0 0.0
    %2786 = vmatpush1.msra.mxu0 0.0
    %2787 = vmatprep.subr.mxu0 0.0
    %2788 = vmatpush1.msra.mxu0 0.0
    %2789 = vmatprep.subr.mxu0 0.0
    %2790 = vmatpush1.msra.mxu0 0.0
    %2791 = vmatprep.subr.mxu0 0.0
    %2792 = vmatpush1.msra.mxu0 0.0
    %2793 = vmatprep.subr.mxu0 0.0
    %2794 = vmatpush1.msra.mxu0 0.0
    %2795 = vmatprep.subr.mxu0 0.0
    %2796 = vmatpush1.msra.mxu0 0.0
    %2797 = vmatprep.subr.mxu0 0.0
    %2798 = vmatpush1.msra.mxu0 0.0
    %2799 = vmatprep.subr.mxu0 0.0
    %2800 = vmatpush1.msra.mxu0 0.0
    %2801 = vmatprep.subr.mxu0 0.0
    %2802 = vmatpush1.msra.mxu0 0.0
    %2803 = vmatprep.subr.mxu0 0.0
    %2804 = vmatpush1.msra.mxu0 0.0
    %2805 = vmatprep.subr.mxu0 0.0
    %2806 = vmatpush1.msra.mxu0 0.0
    %2807 = vmatprep.subr.mxu0 0.0
    %2808 = vmatpush1.msra.mxu0 0.0
    %2809 = vmatprep.subr.mxu0 0.0
    %2810 = vmatpush1.msra.mxu0 0.0
    %2811 = vmatprep.subr.mxu0 0.0
    %2812 = vmatpush1.msra.mxu0 0.0
    %2813 = vmatprep.subr.mxu0 0.0
    %2814 = vmatpush1.msra.mxu0 0.0
    %2815 = vmatprep.subr.mxu0 0.0
    %2816 = vmatpush1.msra.mxu0 0.0
    %2817 = vmatprep.subr.mxu0 0.0
    %2818 = vmatpush1.msra.mxu0 0.0
    %2819 = vmatprep.subr.mxu0 0.0
    %2820 = vmatpush1.msra.mxu0 0.0
    %2821 = vmatprep.subr.mxu0 0.0
    %2822 = vmatpush1.msra.mxu0 0.0
    %2823 = vmatprep.subr.mxu0 0.0
    %2824 = vmatpush1.msra.mxu0 0.0
    %2825 = vmatprep.subr.mxu0 0.0
    %2826 = vmatpush1.msra.mxu0 0.0
    %2827 = vmatprep.subr.mxu0 0.0
    %2828 = vmatpush1.msra.mxu0 0.0
    %2829 = vmatprep.subr.mxu0 0.0
    %2830 = vmatpush1.msra.mxu0 0.0
    %2831 = vmatprep.subr.mxu0 0.0
    %2832 = vmatpush1.msra.mxu0 0.0
    %2833 = vmatprep.mubr.f32.mxu0 0.0
    %v2834 = vand.u32 %v2668, 4294901760
    %2835 = vmatmul.mubr.f32.gmra.mrb[0].mxu0 %v2834
    %v2836 = vpop.f32.mrb[0].mxu0
    %v2837 = vadd.f32 %v2746, %v2836
    %v2838 = vpop.f32.mrb[0].mxu0
    %2839 = vdwg.mxu0
    %2840 = vmatprep.subr.mxu0 0.0
    %v2841 = vand.u32 %v588, 4294901760
    %v2842 = vsub.f32 %v588, %v2841
    %2843 = vmatpush1.msra.mxu0 %v2842
    %2844 = vmatprep.subr.mxu0 0.0
    %v2845 = vand.u32 %v589, 4294901760
    %v2846 = vsub.f32 %v589, %v2845
    %2847 = vmatpush1.msra.mxu0 %v2846
    %2848 = vmatprep.subr.mxu0 0.0
    %v2849 = vand.u32 %v590, 4294901760
    %v2850 = vsub.f32 %v590, %v2849
    %2851 = vmatpush1.msra.mxu0 %v2850
    %2852 = vmatprep.subr.mxu0 0.0
    %v2853 = vand.u32 %v591, 4294901760
    %v2854 = vsub.f32 %v591, %v2853
    %2855 = vmatpush1.msra.mxu0 %v2854
    %2856 = vmatprep.subr.mxu0 0.0
    %2857 = vmatpush1.msra.mxu0 0.0
    %2858 = vmatprep.subr.mxu0 0.0
    %2859 = vmatpush1.msra.mxu0 0.0
    %2860 = vmatprep.subr.mxu0 0.0
    %2861 = vmatpush1.msra.mxu0 0.0
    %2862 = vmatprep.subr.mxu0 0.0
    %2863 = vmatpush1.msra.mxu0 0.0
    %2864 = vmatprep.subr.mxu0 0.0
    %2865 = vmatpush1.msra.mxu0 0.0
    %2866 = vmatprep.subr.mxu0 0.0
    %2867 = vmatpush1.msra.mxu0 0.0
    %2868 = vmatprep.subr.mxu0 0.0
    %2869 = vmatpush1.msra.mxu0 0.0
    %2870 = vmatprep.subr.mxu0 0.0
    %2871 = vmatpush1.msra.mxu0 0.0
    %2872 = vmatprep.subr.mxu0 0.0
    %2873 = vmatpush1.msra.mxu0 0.0
    %2874 = vmatprep.subr.mxu0 0.0
    %2875 = vmatpush1.msra.mxu0 0.0
    %2876 = vmatprep.subr.mxu0 0.0
    %2877 = vmatpush1.msra.mxu0 0.0
    %2878 = vmatprep.subr.mxu0 0.0
    %2879 = vmatpush1.msra.mxu0 0.0
    %2880 = vmatprep.subr.mxu0 0.0
    %2881 = vmatpush1.msra.mxu0 0.0
    %2882 = vmatprep.subr.mxu0 0.0
    %2883 = vmatpush1.msra.mxu0 0.0
    %2884 = vmatprep.subr.mxu0 0.0
    %2885 = vmatpush1.msra.mxu0 0.0
    %2886 = vmatprep.subr.mxu0 0.0
    %2887 = vmatpush1.msra.mxu0 0.0
    %2888 = vmatprep.subr.mxu0 0.0
    %2889 = vmatpush1.msra.mxu0 0.0
    %2890 = vmatprep.subr.mxu0 0.0
    %2891 = vmatpush1.msra.mxu0 0.0
    %2892 = vmatprep.subr.mxu0 0.0
    %2893 = vmatpush1.msra.mxu0 0.0
    %2894 = vmatprep.subr.mxu0 0.0
    %2895 = vmatpush1.msra.mxu0 0.0
    %2896 = vmatprep.subr.mxu0 0.0
    %2897 = vmatpush1.msra.mxu0 0.0
    %2898 = vmatprep.subr.mxu0 0.0
    %2899 = vmatpush1.msra.mxu0 0.0
    %2900 = vmatprep.subr.mxu0 0.0
    %2901 = vmatpush1.msra.mxu0 0.0
    %2902 = vmatprep.subr.mxu0 0.0
    %2903 = vmatpush1.msra.mxu0 0.0
    %2904 = vmatprep.subr.mxu0 0.0
    %2905 = vmatpush1.msra.mxu0 0.0
    %2906 = vmatprep.subr.mxu0 0.0
    %2907 = vmatpush1.msra.mxu0 0.0
    %2908 = vmatprep.subr.mxu0 0.0
    %2909 = vmatpush1.msra.mxu0 0.0
    %2910 = vmatprep.subr.mxu0 0.0
    %2911 = vmatpush1.msra.mxu0 0.0
    %2912 = vmatprep.mubr.f32.mxu0 0.0
    %v2913 = vand.u32 %v2668, 4294901760
    %v2914 = vsub.f32 %v2668, %v2913
    %2915 = vmatmul.mubr.f32.gmra.mrb[0].mxu0 %v2914
    %v2916 = vpop.f32.mrb[0].mxu0
    %v2917 = vadd.f32 %v2837, %v2916
    %v2918 = vpop.f32.mrb[0].mxu0
    %2919 = vdwg.mxu0
    %2920 = vmatprep.subr.mxu0 0.0
    %v2921 = vand.u32 %v588, 4294901760
    %2922 = vmatpush1.msra.mxu0 %v2921
    %2923 = vmatprep.subr.mxu0 0.0
    %v2924 = vand.u32 %v589, 4294901760
    %2925 = vmatpush1.msra.mxu0 %v2924
    %2926 = vmatprep.subr.mxu0 0.0
    %v2927 = vand.u32 %v590, 4294901760
    %2928 = vmatpush1.msra.mxu0 %v2927
    %2929 = vmatprep.subr.mxu0 0.0
    %v2930 = vand.u32 %v591, 4294901760
    %2931 = vmatpush1.msra.mxu0 %v2930
    %2932 = vmatprep.subr.mxu0 0.0
    %2933 = vmatpush1.msra.mxu0 0.0
    %2934 = vmatprep.subr.mxu0 0.0
    %2935 = vmatpush1.msra.mxu0 0.0
    %2936 = vmatprep.subr.mxu0 0.0
    %2937 = vmatpush1.msra.mxu0 0.0
    %2938 = vmatprep.subr.mxu0 0.0
    %2939 = vmatpush1.msra.mxu0 0.0
    %2940 = vmatprep.subr.mxu0 0.0
    %2941 = vmatpush1.msra.mxu0 0.0
    %2942 = vmatprep.subr.mxu0 0.0
    %2943 = vmatpush1.msra.mxu0 0.0
    %2944 = vmatprep.subr.mxu0 0.0
    %2945 = vmatpush1.msra.mxu0 0.0
    %2946 = vmatprep.subr.mxu0 0.0
    %2947 = vmatpush1.msra.mxu0 0.0
    %2948 = vmatprep.subr.mxu0 0.0
    %2949 = vmatpush1.msra.mxu0 0.0
    %2950 = vmatprep.subr.mxu0 0.0
    %2951 = vmatpush1.msra.mxu0 0.0
    %2952 = vmatprep.subr.mxu0 0.0
    %2953 = vmatpush1.msra.mxu0 0.0
    %2954 = vmatprep.subr.mxu0 0.0
    %2955 = vmatpush1.msra.mxu0 0.0
    %2956 = vmatprep.subr.mxu0 0.0
    %2957 = vmatpush1.msra.mxu0 0.0
    %2958 = vmatprep.subr.mxu0 0.0
    %2959 = vmatpush1.msra.mxu0 0.0
    %2960 = vmatprep.subr.mxu0 0.0
    %2961 = vmatpush1.msra.mxu0 0.0
    %2962 = vmatprep.subr.mxu0 0.0
    %2963 = vmatpush1.msra.mxu0 0.0
    %2964 = vmatprep.subr.mxu0 0.0
    %2965 = vmatpush1.msra.mxu0 0.0
    %2966 = vmatprep.subr.mxu0 0.0
    %2967 = vmatpush1.msra.mxu0 0.0
    %2968 = vmatprep.subr.mxu0 0.0
    %2969 = vmatpush1.msra.mxu0 0.0
    %2970 = vmatprep.subr.mxu0 0.0
    %2971 = vmatpush1.msra.mxu0 0.0
    %2972 = vmatprep.subr.mxu0 0.0
    %2973 = vmatpush1.msra.mxu0 0.0
    %2974 = vmatprep.subr.mxu0 0.0
    %2975 = vmatpush1.msra.mxu0 0.0
    %2976 = vmatprep.subr.mxu0 0.0
    %2977 = vmatpush1.msra.mxu0 0.0
    %2978 = vmatprep.subr.mxu0 0.0
    %2979 = vmatpush1.msra.mxu0 0.0
    %2980 = vmatprep.subr.mxu0 0.0
    %2981 = vmatpush1.msra.mxu0 0.0
    %2982 = vmatprep.subr.mxu0 0.0
    %2983 = vmatpush1.msra.mxu0 0.0
    %2984 = vmatprep.subr.mxu0 0.0
    %2985 = vmatpush1.msra.mxu0 0.0
    %2986 = vmatprep.subr.mxu0 0.0
    %2987 = vmatpush1.msra.mxu0 0.0
    %2988 = vmatprep.mubr.f32.mxu0 0.0
    %v2989 = vand.u32 %v2668, 4294901760
    %v2990 = vsub.f32 %v2668, %v2989
    %v2991 = vand.u32 %v2990, 4294901760
    %2992 = vmatmul.mubr.f32.gmra.mrb[0].mxu0 %v2991
    %v2993 = vpop.f32.mrb[0].mxu0
    %v2994 = vadd.f32 %v2917, %v2993
    %v2995 = vpop.f32.mrb[0].mxu0
    %2996 = vdwg.mxu0
    %2997 = vmatprep.subr.mxu0 0.0
    %v2998 = vand.u32 %v588, 4294901760
    %v2999 = vsub.f32 %v588, %v2998
    %v3000 = vand.u32 %v2999, 4294901760
    %3001 = vmatpush1.msra.mxu0 %v3000
    %3002 = vmatprep.subr.mxu0 0.0
    %v3003 = vand.u32 %v589, 4294901760
    %v3004 = vsub.f32 %v589, %v3003
    %v3005 = vand.u32 %v3004, 4294901760
    %3006 = vmatpush1.msra.mxu0 %v3005
    %3007 = vmatprep.subr.mxu0 0.0
    %v3008 = vand.u32 %v590, 4294901760
    %v3009 = vsub.f32 %v590, %v3008
    %v3010 = vand.u32 %v3009, 4294901760
    %3011 = vmatpush1.msra.mxu0 %v3010
    %3012 = vmatprep.subr.mxu0 0.0
    %v3013 = vand.u32 %v591, 4294901760
    %v3014 = vsub.f32 %v591, %v3013
    %v3015 = vand.u32 %v3014, 4294901760
    %3016 = vmatpush1.msra.mxu0 %v3015
    %3017 = vmatprep.subr.mxu0 0.0
    %3018 = vmatpush1.msra.mxu0 0.0
    %3019 = vmatprep.subr.mxu0 0.0
    %3020 = vmatpush1.msra.mxu0 0.0
    %3021 = vmatprep.subr.mxu0 0.0
    %3022 = vmatpush1.msra.mxu0 0.0
    %3023 = vmatprep.subr.mxu0 0.0
    %3024 = vmatpush1.msra.mxu0 0.0
    %3025 = vmatprep.subr.mxu0 0.0
    %3026 = vmatpush1.msra.mxu0 0.0
    %3027 = vmatprep.subr.mxu0 0.0
    %3028 = vmatpush1.msra.mxu0 0.0
    %3029 = vmatprep.subr.mxu0 0.0
    %3030 = vmatpush1.msra.mxu0 0.0
    %3031 = vmatprep.subr.mxu0 0.0
    %3032 = vmatpush1.msra.mxu0 0.0
    %3033 = vmatprep.subr.mxu0 0.0
    %3034 = vmatpush1.msra.mxu0 0.0
    %3035 = vmatprep.subr.mxu0 0.0
    %3036 = vmatpush1.msra.mxu0 0.0
    %3037 = vmatprep.subr.mxu0 0.0
    %3038 = vmatpush1.msra.mxu0 0.0
    %3039 = vmatprep.subr.mxu0 0.0
    %3040 = vmatpush1.msra.mxu0 0.0
    %3041 = vmatprep.subr.mxu0 0.0
    %3042 = vmatpush1.msra.mxu0 0.0
    %3043 = vmatprep.subr.mxu0 0.0
    %3044 = vmatpush1.msra.mxu0 0.0
    %3045 = vmatprep.subr.mxu0 0.0
    %3046 = vmatpush1.msra.mxu0 0.0
    %3047 = vmatprep.subr.mxu0 0.0
    %3048 = vmatpush1.msra.mxu0 0.0
    %3049 = vmatprep.subr.mxu0 0.0
    %3050 = vmatpush1.msra.mxu0 0.0
    %3051 = vmatprep.subr.mxu0 0.0
    %3052 = vmatpush1.msra.mxu0 0.0
    %3053 = vmatprep.subr.mxu0 0.0
    %3054 = vmatpush1.msra.mxu0 0.0
    %3055 = vmatprep.subr.mxu0 0.0
    %3056 = vmatpush1.msra.mxu0 0.0
    %3057 = vmatprep.subr.mxu0 0.0
    %3058 = vmatpush1.msra.mxu0 0.0
    %3059 = vmatprep.subr.mxu0 0.0
    %3060 = vmatpush1.msra.mxu0 0.0
    %3061 = vmatprep.subr.mxu0 0.0
    %3062 = vmatpush1.msra.mxu0 0.0
    %3063 = vmatprep.subr.mxu0 0.0
    %3064 = vmatpush1.msra.mxu0 0.0
    %3065 = vmatprep.subr.mxu0 0.0
    %3066 = vmatpush1.msra.mxu0 0.0
    %3067 = vmatprep.subr.mxu0 0.0
    %3068 = vmatpush1.msra.mxu0 0.0
    %3069 = vmatprep.subr.mxu0 0.0
    %3070 = vmatpush1.msra.mxu0 0.0
    %3071 = vmatprep.subr.mxu0 0.0
    %3072 = vmatpush1.msra.mxu0 0.0
    %3073 = vmatprep.mubr.f32.mxu0 0.0
    %v3074 = vand.u32 %v2668, 4294901760
    %3075 = vmatmul.mubr.f32.gmra.mrb[0].mxu0 %v3074
    %v3076 = vpop.f32.mrb[0].mxu0
    %v3077 = vadd.f32 %v2994, %v3076
    %v3078 = vpop.f32.mrb[0].mxu0
    %3079 = vdwg.mxu0
    %3080 = vmatprep.subr.mxu0 0.0
    %v3081 = vand.u32 %v588, 4294901760
    %3082 = vmatpush1.msra.mxu0 %v3081
    %3083 = vmatprep.subr.mxu0 0.0
    %v3084 = vand.u32 %v589, 4294901760
    %3085 = vmatpush1.msra.mxu0 %v3084
    %3086 = vmatprep.subr.mxu0 0.0
    %v3087 = vand.u32 %v590, 4294901760
    %3088 = vmatpush1.msra.mxu0 %v3087
    %3089 = vmatprep.subr.mxu0 0.0
    %v3090 = vand.u32 %v591, 4294901760
    %3091 = vmatpush1.msra.mxu0 %v3090
    %3092 = vmatprep.subr.mxu0 0.0
    %3093 = vmatpush1.msra.mxu0 0.0
    %3094 = vmatprep.subr.mxu0 0.0
    %3095 = vmatpush1.msra.mxu0 0.0
    %3096 = vmatprep.subr.mxu0 0.0
    %3097 = vmatpush1.msra.mxu0 0.0
    %3098 = vmatprep.subr.mxu0 0.0
    %3099 = vmatpush1.msra.mxu0 0.0
    %3100 = vmatprep.subr.mxu0 0.0
    %3101 = vmatpush1.msra.mxu0 0.0
    %3102 = vmatprep.subr.mxu0 0.0
    %3103 = vmatpush1.msra.mxu0 0.0
    %3104 = vmatprep.subr.mxu0 0.0
    %3105 = vmatpush1.msra.mxu0 0.0
    %3106 = vmatprep.subr.mxu0 0.0
    %3107 = vmatpush1.msra.mxu0 0.0
    %3108 = vmatprep.subr.mxu0 0.0
    %3109 = vmatpush1.msra.mxu0 0.0
    %3110 = vmatprep.subr.mxu0 0.0
    %3111 = vmatpush1.msra.mxu0 0.0
    %3112 = vmatprep.subr.mxu0 0.0
    %3113 = vmatpush1.msra.mxu0 0.0
    %3114 = vmatprep.subr.mxu0 0.0
    %3115 = vmatpush1.msra.mxu0 0.0
    %3116 = vmatprep.subr.mxu0 0.0
    %3117 = vmatpush1.msra.mxu0 0.0
    %3118 = vmatprep.subr.mxu0 0.0
    %3119 = vmatpush1.msra.mxu0 0.0
    %3120 = vmatprep.subr.mxu0 0.0
    %3121 = vmatpush1.msra.mxu0 0.0
    %3122 = vmatprep.subr.mxu0 0.0
    %3123 = vmatpush1.msra.mxu0 0.0
    %3124 = vmatprep.subr.mxu0 0.0
    %3125 = vmatpush1.msra.mxu0 0.0
    %3126 = vmatprep.subr.mxu0 0.0
    %3127 = vmatpush1.msra.mxu0 0.0
    %3128 = vmatprep.subr.mxu0 0.0
    %3129 = vmatpush1.msra.mxu0 0.0
    %3130 = vmatprep.subr.mxu0 0.0
    %3131 = vmatpush1.msra.mxu0 0.0
    %3132 = vmatprep.subr.mxu0 0.0
    %3133 = vmatpush1.msra.mxu0 0.0
    %3134 = vmatprep.subr.mxu0 0.0
    %3135 = vmatpush1.msra.mxu0 0.0
    %3136 = vmatprep.subr.mxu0 0.0
    %3137 = vmatpush1.msra.mxu0 0.0
    %3138 = vmatprep.subr.mxu0 0.0
    %3139 = vmatpush1.msra.mxu0 0.0
    %3140 = vmatprep.subr.mxu0 0.0
    %3141 = vmatpush1.msra.mxu0 0.0
    %3142 = vmatprep.subr.mxu0 0.0
    %3143 = vmatpush1.msra.mxu0 0.0
    %3144 = vmatprep.subr.mxu0 0.0
    %3145 = vmatpush1.msra.mxu0 0.0
    %3146 = vmatprep.subr.mxu0 0.0
    %3147 = vmatpush1.msra.mxu0 0.0
    %3148 = vmatprep.mubr.f32.mxu0 0.0
    %v3149 = vand.u32 %v2668, 4294901760
    %3150 = vmatmul.mubr.f32.gmra.mrb[0].mxu0 %v3149
    %v3151 = vpop.f32.mrb[0].mxu0
    %v3152 = vadd.f32 %v3077, %v3151
    %v3153 = vpop.f32.mrb[0].mxu0
    %3154 = vdwg.mxu0
    %v3155 = vadd.f32 %v2667, %v3152
    %v3156 = vmul.f32 %v3155, 0.5
    %v3157 = vtanh.pop %v3156
    %v3158 = vadd.f32 %v3157, 1.0
    %v3159 = vmul.f32 %v3158, 0.5
    %v3160 = vtanh.pop %v3155
    %v3161 = vsel %vm596, %v3160, %v3159
    %v3162 = vmul.f32 %v3161, %v2655
    %3164 = vrot.lane.b32.xlu0 %v3161, 64
    %v3165 = vpop.permute.xlu0 %3164
    %v3167 = vmul.f32 %v3161, %v3165
    %3169 = vrot.lane.b32.xlu0 %v3167, 32
    %v3170 = vpop.permute.xlu0 %3169
    %v3172 = vadd.f32 %v3162, %v3170
    %v3173 = vtanh.pop %v3172
    %3175 = vrot.lane.b32.xlu0 %v3173, 64
    %v3176 = vpop.permute.xlu0 %3175
    %v3178 = vmul.f32 %v3161, %v3176
    %3180 = vrot.lane.b32.xlu0 %v3178, 32
    %v3181 = vpop.permute.xlu0 %3180
    %3183 = vst.msk [vmem:[#allocation3 + $0x8] sm:$0x3] %vm1114, %v3181
    %v3184 = vld [vmem:[#allocation2 + $0xa] sm:$0x3]
    %v3185 = vsel %vm51, %v3181, 0
    %3187 = vmatprep.subr.mxu0 0.0
    %v3188 = vand.u32 %v588, 4294901760
    %3189 = vmatpush1.msra.mxu0 %v3188
    %3190 = vmatprep.subr.mxu0 0.0
    %v3191 = vand.u32 %v589, 4294901760
    %3192 = vmatpush1.msra.mxu0 %v3191
    %3193 = vmatprep.subr.mxu0 0.0
    %v3194 = vand.u32 %v590, 4294901760
    %3195 = vmatpush1.msra.mxu0 %v3194
    %3196 = vmatprep.subr.mxu0 0.0
    %v3197 = vand.u32 %v591, 4294901760
    %3198 = vmatpush1.msra.mxu0 %v3197
    %3199 = vmatprep.subr.mxu0 0.0
    %3200 = vmatpush1.msra.mxu0 0.0
    %3201 = vmatprep.subr.mxu0 0.0
    %3202 = vmatpush1.msra.mxu0 0.0
    %3203 = vmatprep.subr.mxu0 0.0
    %3204 = vmatpush1.msra.mxu0 0.0
    %3205 = vmatprep.subr.mxu0 0.0
    %3206 = vmatpush1.msra.mxu0 0.0
    %3207 = vmatprep.subr.mxu0 0.0
    %3208 = vmatpush1.msra.mxu0 0.0
    %3209 = vmatprep.subr.mxu0 0.0
    %3210 = vmatpush1.msra.mxu0 0.0
    %3211 = vmatprep.subr.mxu0 0.0
    %3212 = vmatpush1.msra.mxu0 0.0
    %3213 = vmatprep.subr.mxu0 0.0
    %3214 = vmatpush1.msra.mxu0 0.0
    %3215 = vmatprep.subr.mxu0 0.0
    %3216 = vmatpush1.msra.mxu0 0.0
    %3217 = vmatprep.subr.mxu0 0.0
    %3218 = vmatpush1.msra.mxu0 0.0
    %3219 = vmatprep.subr.mxu0 0.0
    %3220 = vmatpush1.msra.mxu0 0.0
    %3221 = vmatprep.subr.mxu0 0.0
    %3222 = vmatpush1.msra.mxu0 0.0
    %3223 = vmatprep.subr.mxu0 0.0
    %3224 = vmatpush1.msra.mxu0 0.0
    %3225 = vmatprep.subr.mxu0 0.0
    %3226 = vmatpush1.msra.mxu0 0.0
    %3227 = vmatprep.subr.mxu0 0.0
    %3228 = vmatpush1.msra.mxu0 0.0
    %3229 = vmatprep.subr.mxu0 0.0
    %3230 = vmatpush1.msra.mxu0 0.0
    %3231 = vmatprep.subr.mxu0 0.0
    %3232 = vmatpush1.msra.mxu0 0.0
    %3233 = vmatprep.subr.mxu0 0.0
    %3234 = vmatpush1.msra.mxu0 0.0
    %3235 = vmatprep.subr.mxu0 0.0
    %3236 = vmatpush1.msra.mxu0 0.0
    %3237 = vmatprep.subr.mxu0 0.0
    %3238 = vmatpush1.msra.mxu0 0.0
    %3239 = vmatprep.subr.mxu0 0.0
    %3240 = vmatpush1.msra.mxu0 0.0
    %3241 = vmatprep.subr.mxu0 0.0
    %3242 = vmatpush1.msra.mxu0 0.0
    %3243 = vmatprep.subr.mxu0 0.0
    %3244 = vmatpush1.msra.mxu0 0.0
    %3245 = vmatprep.subr.mxu0 0.0
    %3246 = vmatpush1.msra.mxu0 0.0
    %3247 = vmatprep.subr.mxu0 0.0
    %3248 = vmatpush1.msra.mxu0 0.0
    %3249 = vmatprep.subr.mxu0 0.0
    %3250 = vmatpush1.msra.mxu0 0.0
    %3251 = vmatprep.subr.mxu0 0.0
    %3252 = vmatpush1.msra.mxu0 0.0
    %3253 = vmatprep.subr.mxu0 0.0
    %3254 = vmatpush1.msra.mxu0 0.0
    %3255 = vmatprep.mubr.f32.mxu0 0.0
    %v3256 = vand.u32 %v3185, 4294901760
    %v3257 = vsub.f32 %v3185, %v3256
    %v3258 = vand.u32 %v3257, 4294901760
    %v3259 = vsub.f32 %v3257, %v3258
    %v3260 = vand.u32 %v3259, 4294901760
    %3261 = vmatmul.mubr.f32.gmra.mrb[0].mxu0 %v3260
    %v3262 = vpop.f32.mrb[0].mxu0
    %v3263 = vadd.f32 0.0, %v3262
    %v3264 = vpop.f32.mrb[0].mxu0
    %3265 = vdwg.mxu0
    %3266 = vmatprep.subr.mxu0 0.0
    %v3267 = vand.u32 %v588, 4294901760
    %v3268 = vsub.f32 %v588, %v3267
    %v3269 = vand.u32 %v3268, 4294901760
    %v3270 = vsub.f32 %v3268, %v3269
    %v3271 = vand.u32 %v3270, 4294901760
    %3272 = vmatpush1.msra.mxu0 %v3271
    %3273 = vmatprep.subr.mxu0 0.0
    %v3274 = vand.u32 %v589, 4294901760
    %v3275 = vsub.f32 %v589, %v3274
    %v3276 = vand.u32 %v3275, 4294901760
    %v3277 = vsub.f32 %v3275, %v3276
    %v3278 = vand.u32 %v3277, 4294901760
    %3279 = vmatpush1.msra.mxu0 %v3278
    %3280 = vmatprep.subr.mxu0 0.0
    %v3281 = vand.u32 %v590, 4294901760
    %v3282 = vsub.f32 %v590, %v3281
    %v3283 = vand.u32 %v3282, 4294901760
    %v3284 = vsub.f32 %v3282, %v3283
    %v3285 = vand.u32 %v3284, 4294901760
    %3286 = vmatpush1.msra.mxu0 %v3285
    %3287 = vmatprep.subr.mxu0 0.0
    %v3288 = vand.u32 %v591, 4294901760
    %v3289 = vsub.f32 %v591, %v3288
    %v3290 = vand.u32 %v3289, 4294901760
    %v3291 = vsub.f32 %v3289, %v3290
    %v3292 = vand.u32 %v3291, 4294901760
    %3293 = vmatpush1.msra.mxu0 %v3292
    %3294 = vmatprep.subr.mxu0 0.0
    %3295 = vmatpush1.msra.mxu0 0.0
    %3296 = vmatprep.subr.mxu0 0.0
    %3297 = vmatpush1.msra.mxu0 0.0
    %3298 = vmatprep.subr.mxu0 0.0
    %3299 = vmatpush1.msra.mxu0 0.0
    %3300 = vmatprep.subr.mxu0 0.0
    %3301 = vmatpush1.msra.mxu0 0.0
    %3302 = vmatprep.subr.mxu0 0.0
    %3303 = vmatpush1.msra.mxu0 0.0
    %3304 = vmatprep.subr.mxu0 0.0
    %3305 = vmatpush1.msra.mxu0 0.0
    %3306 = vmatprep.subr.mxu0 0.0
    %3307 = vmatpush1.msra.mxu0 0.0
    %3308 = vmatprep.subr.mxu0 0.0
    %3309 = vmatpush1.msra.mxu0 0.0
    %3310 = vmatprep.subr.mxu0 0.0
    %3311 = vmatpush1.msra.mxu0 0.0
    %3312 = vmatprep.subr.mxu0 0.0
    %3313 = vmatpush1.msra.mxu0 0.0
    %3314 = vmatprep.subr.mxu0 0.0
    %3315 = vmatpush1.msra.mxu0 0.0
    %3316 = vmatprep.subr.mxu0 0.0
    %3317 = vmatpush1.msra.mxu0 0.0
    %3318 = vmatprep.subr.mxu0 0.0
    %3319 = vmatpush1.msra.mxu0 0.0
    %3320 = vmatprep.subr.mxu0 0.0
    %3321 = vmatpush1.msra.mxu0 0.0
    %3322 = vmatprep.subr.mxu0 0.0
    %3323 = vmatpush1.msra.mxu0 0.0
    %3324 = vmatprep.subr.mxu0 0.0
    %3325 = vmatpush1.msra.mxu0 0.0
    %3326 = vmatprep.subr.mxu0 0.0
    %3327 = vmatpush1.msra.mxu0 0.0
    %3328 = vmatprep.subr.mxu0 0.0
    %3329 = vmatpush1.msra.mxu0 0.0
    %3330 = vmatprep.subr.mxu0 0.0
    %3331 = vmatpush1.msra.mxu0 0.0
    %3332 = vmatprep.subr.mxu0 0.0
    %3333 = vmatpush1.msra.mxu0 0.0
    %3334 = vmatprep.subr.mxu0 0.0
    %3335 = vmatpush1.msra.mxu0 0.0
    %3336 = vmatprep.subr.mxu0 0.0
    %3337 = vmatpush1.msra.mxu0 0.0
    %3338 = vmatprep.subr.mxu0 0.0
    %3339 = vmatpush1.msra.mxu0 0.0
    %3340 = vmatprep.subr.mxu0 0.0
    %3341 = vmatpush1.msra.mxu0 0.0
    %3342 = vmatprep.subr.mxu0 0.0
    %3343 = vmatpush1.msra.mxu0 0.0
    %3344 = vmatprep.subr.mxu0 0.0
    %3345 = vmatpush1.msra.mxu0 0.0
    %3346 = vmatprep.subr.mxu0 0.0
    %3347 = vmatpush1.msra.mxu0 0.0
    %3348 = vmatprep.subr.mxu0 0.0
    %3349 = vmatpush1.msra.mxu0 0.0
    %3350 = vmatprep.mubr.f32.mxu0 0.0
    %v3351 = vand.u32 %v3185, 4294901760
    %3352 = vmatmul.mubr.f32.gmra.mrb[0].mxu0 %v3351
    %v3353 = vpop.f32.mrb[0].mxu0
    %v3354 = vadd.f32 %v3263, %v3353
    %v3355 = vpop.f32.mrb[0].mxu0
    %3356 = vdwg.mxu0
    %3357 = vmatprep.subr.mxu0 0.0
    %v3358 = vand.u32 %v588, 4294901760
    %v3359 = vsub.f32 %v588, %v3358
    %3360 = vmatpush1.msra.mxu0 %v3359
    %3361 = vmatprep.subr.mxu0 0.0
    %v3362 = vand.u32 %v589, 4294901760
    %v3363 = vsub.f32 %v589, %v3362
    %3364 = vmatpush1.msra.mxu0 %v3363
    %3365 = vmatprep.subr.mxu0 0.0
    %v3366 = vand.u32 %v590, 4294901760
    %v3367 = vsub.f32 %v590, %v3366
    %3368 = vmatpush1.msra.mxu0 %v3367
    %3369 = vmatprep.subr.mxu0 0.0
    %v3370 = vand.u32 %v591, 4294901760
    %v3371 = vsub.f32 %v591, %v3370
    %3372 = vmatpush1.msra.mxu0 %v3371
    %3373 = vmatprep.subr.mxu0 0.0
    %3374 = vmatpush1.msra.mxu0 0.0
    %3375 = vmatprep.subr.mxu0 0.0
    %3376 = vmatpush1.msra.mxu0 0.0
    %3377 = vmatprep.subr.mxu0 0.0
    %3378 = vmatpush1.msra.mxu0 0.0
    %3379 = vmatprep.subr.mxu0 0.0
    %3380 = vmatpush1.msra.mxu0 0.0
    %3381 = vmatprep.subr.mxu0 0.0
    %3382 = vmatpush1.msra.mxu0 0.0
    %3383 = vmatprep.subr.mxu0 0.0
    %3384 = vmatpush1.msra.mxu0 0.0
    %3385 = vmatprep.subr.mxu0 0.0
    %3386 = vmatpush1.msra.mxu0 0.0
    %3387 = vmatprep.subr.mxu0 0.0
    %3388 = vmatpush1.msra.mxu0 0.0
    %3389 = vmatprep.subr.mxu0 0.0
    %3390 = vmatpush1.msra.mxu0 0.0
    %3391 = vmatprep.subr.mxu0 0.0
    %3392 = vmatpush1.msra.mxu0 0.0
    %3393 = vmatprep.subr.mxu0 0.0
    %3394 = vmatpush1.msra.mxu0 0.0
    %3395 = vmatprep.subr.mxu0 0.0
    %3396 = vmatpush1.msra.mxu0 0.0
    %3397 = vmatprep.subr.mxu0 0.0
    %3398 = vmatpush1.msra.mxu0 0.0
    %3399 = vmatprep.subr.mxu0 0.0
    %3400 = vmatpush1.msra.mxu0 0.0
    %3401 = vmatprep.subr.mxu0 0.0
    %3402 = vmatpush1.msra.mxu0 0.0
    %3403 = vmatprep.subr.mxu0 0.0
    %3404 = vmatpush1.msra.mxu0 0.0
    %3405 = vmatprep.subr.mxu0 0.0
    %3406 = vmatpush1.msra.mxu0 0.0
    %3407 = vmatprep.subr.mxu0 0.0
    %3408 = vmatpush1.msra.mxu0 0.0
    %3409 = vmatprep.subr.mxu0 0.0
    %3410 = vmatpush1.msra.mxu0 0.0
    %3411 = vmatprep.subr.mxu0 0.0
    %3412 = vmatpush1.msra.mxu0 0.0
    %3413 = vmatprep.subr.mxu0 0.0
    %3414 = vmatpush1.msra.mxu0 0.0
    %3415 = vmatprep.subr.mxu0 0.0
    %3416 = vmatpush1.msra.mxu0 0.0
    %3417 = vmatprep.subr.mxu0 0.0
    %3418 = vmatpush1.msra.mxu0 0.0
    %3419 = vmatprep.subr.mxu0 0.0
    %3420 = vmatpush1.msra.mxu0 0.0
    %3421 = vmatprep.subr.mxu0 0.0
    %3422 = vmatpush1.msra.mxu0 0.0
    %3423 = vmatprep.subr.mxu0 0.0
    %3424 = vmatpush1.msra.mxu0 0.0
    %3425 = vmatprep.subr.mxu0 0.0
    %3426 = vmatpush1.msra.mxu0 0.0
    %3427 = vmatprep.subr.mxu0 0.0
    %3428 = vmatpush1.msra.mxu0 0.0
    %3429 = vmatprep.mubr.f32.mxu0 0.0
    %v3430 = vand.u32 %v3185, 4294901760
    %v3431 = vsub.f32 %v3185, %v3430
    %3432 = vmatmul.mubr.f32.gmra.mrb[0].mxu0 %v3431
    %v3433 = vpop.f32.mrb[0].mxu0
    %v3434 = vadd.f32 %v3354, %v3433
    %v3435 = vpop.f32.mrb[0].mxu0
    %3436 = vdwg.mxu0
    %3437 = vmatprep.subr.mxu0 0.0
    %v3438 = vand.u32 %v588, 4294901760
    %3439 = vmatpush1.msra.mxu0 %v3438
    %3440 = vmatprep.subr.mxu0 0.0
    %v3441 = vand.u32 %v589, 4294901760
    %3442 = vmatpush1.msra.mxu0 %v3441
    %3443 = vmatprep.subr.mxu0 0.0
    %v3444 = vand.u32 %v590, 4294901760
    %3445 = vmatpush1.msra.mxu0 %v3444
    %3446 = vmatprep.subr.mxu0 0.0
    %v3447 = vand.u32 %v591, 4294901760
    %3448 = vmatpush1.msra.mxu0 %v3447
    %3449 = vmatprep.subr.mxu0 0.0
    %3450 = vmatpush1.msra.mxu0 0.0
    %3451 = vmatprep.subr.mxu0 0.0
    %3452 = vmatpush1.msra.mxu0 0.0
    %3453 = vmatprep.subr.mxu0 0.0
    %3454 = vmatpush1.msra.mxu0 0.0
    %3455 = vmatprep.subr.mxu0 0.0
    %3456 = vmatpush1.msra.mxu0 0.0
    %3457 = vmatprep.subr.mxu0 0.0
    %3458 = vmatpush1.msra.mxu0 0.0
    %3459 = vmatprep.subr.mxu0 0.0
    %3460 = vmatpush1.msra.mxu0 0.0
    %3461 = vmatprep.subr.mxu0 0.0
    %3462 = vmatpush1.msra.mxu0 0.0
    %3463 = vmatprep.subr.mxu0 0.0
    %3464 = vmatpush1.msra.mxu0 0.0
    %3465 = vmatprep.subr.mxu0 0.0
    %3466 = vmatpush1.msra.mxu0 0.0
    %3467 = vmatprep.subr.mxu0 0.0
    %3468 = vmatpush1.msra.mxu0 0.0
    %3469 = vmatprep.subr.mxu0 0.0
    %3470 = vmatpush1.msra.mxu0 0.0
    %3471 = vmatprep.subr.mxu0 0.0
    %3472 = vmatpush1.msra.mxu0 0.0
    %3473 = vmatprep.subr.mxu0 0.0
    %3474 = vmatpush1.msra.mxu0 0.0
    %3475 = vmatprep.subr.mxu0 0.0
    %3476 = vmatpush1.msra.mxu0 0.0
    %3477 = vmatprep.subr.mxu0 0.0
    %3478 = vmatpush1.msra.mxu0 0.0
    %3479 = vmatprep.subr.mxu0 0.0
    %3480 = vmatpush1.msra.mxu0 0.0
    %3481 = vmatprep.subr.mxu0 0.0
    %3482 = vmatpush1.msra.mxu0 0.0
    %3483 = vmatprep.subr.mxu0 0.0
    %3484 = vmatpush1.msra.mxu0 0.0
    %3485 = vmatprep.subr.mxu0 0.0
    %3486 = vmatpush1.msra.mxu0 0.0
    %3487 = vmatprep.subr.mxu0 0.0
    %3488 = vmatpush1.msra.mxu0 0.0
    %3489 = vmatprep.subr.mxu0 0.0
    %3490 = vmatpush1.msra.mxu0 0.0
    %3491 = vmatprep.subr.mxu0 0.0
    %3492 = vmatpush1.msra.mxu0 0.0
    %3493 = vmatprep.subr.mxu0 0.0
    %3494 = vmatpush1.msra.mxu0 0.0
    %3495 = vmatprep.subr.mxu0 0.0
    %3496 = vmatpush1.msra.mxu0 0.0
    %3497 = vmatprep.subr.mxu0 0.0
    %3498 = vmatpush1.msra.mxu0 0.0
    %3499 = vmatprep.subr.mxu0 0.0
    %3500 = vmatpush1.msra.mxu0 0.0
    %3501 = vmatprep.subr.mxu0 0.0
    %3502 = vmatpush1.msra.mxu0 0.0
    %3503 = vmatprep.subr.mxu0 0.0
    %3504 = vmatpush1.msra.mxu0 0.0
    %3505 = vmatprep.mubr.f32.mxu0 0.0
    %v3506 = vand.u32 %v3185, 4294901760
    %v3507 = vsub.f32 %v3185, %v3506
    %v3508 = vand.u32 %v3507, 4294901760
    %3509 = vmatmul.mubr.f32.gmra.mrb[0].mxu0 %v3508
    %v3510 = vpop.f32.mrb[0].mxu0
    %v3511 = vadd.f32 %v3434, %v3510
    %v3512 = vpop.f32.mrb[0].mxu0
    %3513 = vdwg.mxu0
    %3514 = vmatprep.subr.mxu0 0.0
    %v3515 = vand.u32 %v588, 4294901760
    %v3516 = vsub.f32 %v588, %v3515
    %v3517 = vand.u32 %v3516, 4294901760
    %3518 = vmatpush1.msra.mxu0 %v3517
    %3519 = vmatprep.subr.mxu0 0.0
    %v3520 = vand.u32 %v589, 4294901760
    %v3521 = vsub.f32 %v589, %v3520
    %v3522 = vand.u32 %v3521, 4294901760
    %3523 = vmatpush1.msra.mxu0 %v3522
    %3524 = vmatprep.subr.mxu0 0.0
    %v3525 = vand.u32 %v590, 4294901760
    %v3526 = vsub.f32 %v590, %v3525
    %v3527 = vand.u32 %v3526, 4294901760
    %3528 = vmatpush1.msra.mxu0 %v3527
    %3529 = vmatprep.subr.mxu0 0.0
    %v3530 = vand.u32 %v591, 4294901760
    %v3531 = vsub.f32 %v591, %v3530
    %v3532 = vand.u32 %v3531, 4294901760
    %3533 = vmatpush1.msra.mxu0 %v3532
    %3534 = vmatprep.subr.mxu0 0.0
    %3535 = vmatpush1.msra.mxu0 0.0
    %3536 = vmatprep.subr.mxu0 0.0
    %3537 = vmatpush1.msra.mxu0 0.0
    %3538 = vmatprep.subr.mxu0 0.0
    %3539 = vmatpush1.msra.mxu0 0.0
    %3540 = vmatprep.subr.mxu0 0.0
    %3541 = vmatpush1.msra.mxu0 0.0
    %3542 = vmatprep.subr.mxu0 0.0
    %3543 = vmatpush1.msra.mxu0 0.0
    %3544 = vmatprep.subr.mxu0 0.0
    %3545 = vmatpush1.msra.mxu0 0.0
    %3546 = vmatprep.subr.mxu0 0.0
    %3547 = vmatpush1.msra.mxu0 0.0
    %3548 = vmatprep.subr.mxu0 0.0
    %3549 = vmatpush1.msra.mxu0 0.0
    %3550 = vmatprep.subr.mxu0 0.0
    %3551 = vmatpush1.msra.mxu0 0.0
    %3552 = vmatprep.subr.mxu0 0.0
    %3553 = vmatpush1.msra.mxu0 0.0
    %3554 = vmatprep.subr.mxu0 0.0
    %3555 = vmatpush1.msra.mxu0 0.0
    %3556 = vmatprep.subr.mxu0 0.0
    %3557 = vmatpush1.msra.mxu0 0.0
    %3558 = vmatprep.subr.mxu0 0.0
    %3559 = vmatpush1.msra.mxu0 0.0
    %3560 = vmatprep.subr.mxu0 0.0
    %3561 = vmatpush1.msra.mxu0 0.0
    %3562 = vmatprep.subr.mxu0 0.0
    %3563 = vmatpush1.msra.mxu0 0.0
    %3564 = vmatprep.subr.mxu0 0.0
    %3565 = vmatpush1.msra.mxu0 0.0
    %3566 = vmatprep.subr.mxu0 0.0
    %3567 = vmatpush1.msra.mxu0 0.0
    %3568 = vmatprep.subr.mxu0 0.0
    %3569 = vmatpush1.msra.mxu0 0.0
    %3570 = vmatprep.subr.mxu0 0.0
    %3571 = vmatpush1.msra.mxu0 0.0
    %3572 = vmatprep.subr.mxu0 0.0
    %3573 = vmatpush1.msra.mxu0 0.0
    %3574 = vmatprep.subr.mxu0 0.0
    %3575 = vmatpush1.msra.mxu0 0.0
    %3576 = vmatprep.subr.mxu0 0.0
    %3577 = vmatpush1.msra.mxu0 0.0
    %3578 = vmatprep.subr.mxu0 0.0
    %3579 = vmatpush1.msra.mxu0 0.0
    %3580 = vmatprep.subr.mxu0 0.0
    %3581 = vmatpush1.msra.mxu0 0.0
    %3582 = vmatprep.subr.mxu0 0.0
    %3583 = vmatpush1.msra.mxu0 0.0
    %3584 = vmatprep.subr.mxu0 0.0
    %3585 = vmatpush1.msra.mxu0 0.0
    %3586 = vmatprep.subr.mxu0 0.0
    %3587 = vmatpush1.msra.mxu0 0.0
    %3588 = vmatprep.subr.mxu0 0.0
    %3589 = vmatpush1.msra.mxu0 0.0
    %3590 = vmatprep.mubr.f32.mxu0 0.0
    %v3591 = vand.u32 %v3185, 4294901760
    %3592 = vmatmul.mubr.f32.gmra.mrb[0].mxu0 %v3591
    %v3593 = vpop.f32.mrb[0].mxu0
    %v3594 = vadd.f32 %v3511, %v3593
    %v3595 = vpop.f32.mrb[0].mxu0
    %3596 = vdwg.mxu0
    %3597 = vmatprep.subr.mxu0 0.0
    %v3598 = vand.u32 %v588, 4294901760
    %3599 = vmatpush1.msra.mxu0 %v3598
    %3600 = vmatprep.subr.mxu0 0.0
    %v3601 = vand.u32 %v589, 4294901760
    %3602 = vmatpush1.msra.mxu0 %v3601
    %3603 = vmatprep.subr.mxu0 0.0
    %v3604 = vand.u32 %v590, 4294901760
    %3605 = vmatpush1.msra.mxu0 %v3604
    %3606 = vmatprep.subr.mxu0 0.0
    %v3607 = vand.u32 %v591, 4294901760
    %3608 = vmatpush1.msra.mxu0 %v3607
    %3609 = vmatprep.subr.mxu0 0.0
    %3610 = vmatpush1.msra.mxu0 0.0
    %3611 = vmatprep.subr.mxu0 0.0
    %3612 = vmatpush1.msra.mxu0 0.0
    %3613 = vmatprep.subr.mxu0 0.0
    %3614 = vmatpush1.msra.mxu0 0.0
    %3615 = vmatprep.subr.mxu0 0.0
    %3616 = vmatpush1.msra.mxu0 0.0
    %3617 = vmatprep.subr.mxu0 0.0
    %3618 = vmatpush1.msra.mxu0 0.0
    %3619 = vmatprep.subr.mxu0 0.0
    %3620 = vmatpush1.msra.mxu0 0.0
    %3621 = vmatprep.subr.mxu0 0.0
    %3622 = vmatpush1.msra.mxu0 0.0
    %3623 = vmatprep.subr.mxu0 0.0
    %3624 = vmatpush1.msra.mxu0 0.0
    %3625 = vmatprep.subr.mxu0 0.0
    %3626 = vmatpush1.msra.mxu0 0.0
    %3627 = vmatprep.subr.mxu0 0.0
    %3628 = vmatpush1.msra.mxu0 0.0
    %3629 = vmatprep.subr.mxu0 0.0
    %3630 = vmatpush1.msra.mxu0 0.0
    %3631 = vmatprep.subr.mxu0 0.0
    %3632 = vmatpush1.msra.mxu0 0.0
    %3633 = vmatprep.subr.mxu0 0.0
    %3634 = vmatpush1.msra.mxu0 0.0
    %3635 = vmatprep.subr.mxu0 0.0
    %3636 = vmatpush1.msra.mxu0 0.0
    %3637 = vmatprep.subr.mxu0 0.0
    %3638 = vmatpush1.msra.mxu0 0.0
    %3639 = vmatprep.subr.mxu0 0.0
    %3640 = vmatpush1.msra.mxu0 0.0
    %3641 = vmatprep.subr.mxu0 0.0
    %3642 = vmatpush1.msra.mxu0 0.0
    %3643 = vmatprep.subr.mxu0 0.0
    %3644 = vmatpush1.msra.mxu0 0.0
    %3645 = vmatprep.subr.mxu0 0.0
    %3646 = vmatpush1.msra.mxu0 0.0
    %3647 = vmatprep.subr.mxu0 0.0
    %3648 = vmatpush1.msra.mxu0 0.0
    %3649 = vmatprep.subr.mxu0 0.0
    %3650 = vmatpush1.msra.mxu0 0.0
    %3651 = vmatprep.subr.mxu0 0.0
    %3652 = vmatpush1.msra.mxu0 0.0
    %3653 = vmatprep.subr.mxu0 0.0
    %3654 = vmatpush1.msra.mxu0 0.0
    %3655 = vmatprep.subr.mxu0 0.0
    %3656 = vmatpush1.msra.mxu0 0.0
    %3657 = vmatprep.subr.mxu0 0.0
    %3658 = vmatpush1.msra.mxu0 0.0
    %3659 = vmatprep.subr.mxu0 0.0
    %3660 = vmatpush1.msra.mxu0 0.0
    %3661 = vmatprep.subr.mxu0 0.0
    %3662 = vmatpush1.msra.mxu0 0.0
    %3663 = vmatprep.subr.mxu0 0.0
    %3664 = vmatpush1.msra.mxu0 0.0
    %3665 = vmatprep.mubr.f32.mxu0 0.0
    %v3666 = vand.u32 %v3185, 4294901760
    %3667 = vmatmul.mubr.f32.gmra.mrb[0].mxu0 %v3666
    %v3668 = vpop.f32.mrb[0].mxu0
    %v3669 = vadd.f32 %v3594, %v3668
    %v3670 = vpop.f32.mrb[0].mxu0
    %3671 = vdwg.mxu0
    %v3672 = vadd.f32 %v3184, %v3669
    %v3673 = vmul.f32 %v3672, 0.5
    %v3674 = vtanh.pop %v3673
    %v3675 = vadd.f32 %v3674, 1.0
    %v3676 = vmul.f32 %v3675, 0.5
    %v3677 = vtanh.pop %v3672
    %v3678 = vsel %vm596, %v3677, %v3676
    %v3679 = vmul.f32 %v3678, %v3172
    %3681 = vrot.lane.b32.xlu0 %v3678, 64
    %v3682 = vpop.permute.xlu0 %3681
    %v3684 = vmul.f32 %v3678, %v3682
    %3686 = vrot.lane.b32.xlu0 %v3684, 32
    %v3687 = vpop.permute.xlu0 %3686
    %v3689 = vadd.f32 %v3679, %v3687
    %v3690 = vtanh.pop %v3689
    %3692 = vrot.lane.b32.xlu0 %v3690, 64
    %v3693 = vpop.permute.xlu0 %3692
    %v3695 = vmul.f32 %v3678, %v3693
    %3697 = vrot.lane.b32.xlu0 %v3695, 32
    %v3698 = vpop.permute.xlu0 %3697
    %3700 = vst.msk [vmem:[#allocation3 + $0xa] sm:$0x3] %vm1114, %v3698
    %v3701 = vld [vmem:[#allocation2 + $0xc] sm:$0x3]
    %v3702 = vsel %vm51, %v3698, 0
    %3704 = vmatprep.subr.mxu0 0.0
    %v3705 = vand.u32 %v588, 4294901760
    %3706 = vmatpush1.msra.mxu0 %v3705
    %3707 = vmatprep.subr.mxu0 0.0
    %v3708 = vand.u32 %v589, 4294901760
    %3709 = vmatpush1.msra.mxu0 %v3708
    %3710 = vmatprep.subr.mxu0 0.0
    %v3711 = vand.u32 %v590, 4294901760
    %3712 = vmatpush1.msra.mxu0 %v3711
    %3713 = vmatprep.subr.mxu0 0.0
    %v3714 = vand.u32 %v591, 4294901760
    %3715 = vmatpush1.msra.mxu0 %v3714
    %3716 = vmatprep.subr.mxu0 0.0
    %3717 = vmatpush1.msra.mxu0 0.0
    %3718 = vmatprep.subr.mxu0 0.0
    %3719 = vmatpush1.msra.mxu0 0.0
    %3720 = vmatprep.subr.mxu0 0.0
    %3721 = vmatpush1.msra.mxu0 0.0
    %3722 = vmatprep.subr.mxu0 0.0
    %3723 = vmatpush1.msra.mxu0 0.0
    %3724 = vmatprep.subr.mxu0 0.0
    %3725 = vmatpush1.msra.mxu0 0.0
    %3726 = vmatprep.subr.mxu0 0.0
    %3727 = vmatpush1.msra.mxu0 0.0
    %3728 = vmatprep.subr.mxu0 0.0
    %3729 = vmatpush1.msra.mxu0 0.0
    %3730 = vmatprep.subr.mxu0 0.0
    %3731 = vmatpush1.msra.mxu0 0.0
    %3732 = vmatprep.subr.mxu0 0.0
    %3733 = vmatpush1.msra.mxu0 0.0
    %3734 = vmatprep.subr.mxu0 0.0
    %3735 = vmatpush1.msra.mxu0 0.0
    %3736 = vmatprep.subr.mxu0 0.0
    %3737 = vmatpush1.msra.mxu0 0.0
    %3738 = vmatprep.subr.mxu0 0.0
    %3739 = vmatpush1.msra.mxu0 0.0
    %3740 = vmatprep.subr.mxu0 0.0
    %3741 = vmatpush1.msra.mxu0 0.0
    %3742 = vmatprep.subr.mxu0 0.0
    %3743 = vmatpush1.msra.mxu0 0.0
    %3744 = vmatprep.subr.mxu0 0.0
    %3745 = vmatpush1.msra.mxu0 0.0
    %3746 = vmatprep.subr.mxu0 0.0
    %3747 = vmatpush1.msra.mxu0 0.0
    %3748 = vmatprep.subr.mxu0 0.0
    %3749 = vmatpush1.msra.mxu0 0.0
    %3750 = vmatprep.subr.mxu0 0.0
    %3751 = vmatpush1.msra.mxu0 0.0
    %3752 = vmatprep.subr.mxu0 0.0
    %3753 = vmatpush1.msra.mxu0 0.0
    %3754 = vmatprep.subr.mxu0 0.0
    %3755 = vmatpush1.msra.mxu0 0.0
    %3756 = vmatprep.subr.mxu0 0.0
    %3757 = vmatpush1.msra.mxu0 0.0
    %3758 = vmatprep.subr.mxu0 0.0
    %3759 = vmatpush1.msra.mxu0 0.0
    %3760 = vmatprep.subr.mxu0 0.0
    %3761 = vmatpush1.msra.mxu0 0.0
    %3762 = vmatprep.subr.mxu0 0.0
    %3763 = vmatpush1.msra.mxu0 0.0
    %3764 = vmatprep.subr.mxu0 0.0
    %3765 = vmatpush1.msra.mxu0 0.0
    %3766 = vmatprep.subr.mxu0 0.0
    %3767 = vmatpush1.msra.mxu0 0.0
    %3768 = vmatprep.subr.mxu0 0.0
    %3769 = vmatpush1.msra.mxu0 0.0
    %3770 = vmatprep.subr.mxu0 0.0
    %3771 = vmatpush1.msra.mxu0 0.0
    %3772 = vmatprep.mubr.f32.mxu0 0.0
    %v3773 = vand.u32 %v3702, 4294901760
    %v3774 = vsub.f32 %v3702, %v3773
    %v3775 = vand.u32 %v3774, 4294901760
    %v3776 = vsub.f32 %v3774, %v3775
    %v3777 = vand.u32 %v3776, 4294901760
    %3778 = vmatmul.mubr.f32.gmra.mrb[0].mxu0 %v3777
    %v3779 = vpop.f32.mrb[0].mxu0
    %v3780 = vadd.f32 0.0, %v3779
    %v3781 = vpop.f32.mrb[0].mxu0
    %3782 = vdwg.mxu0
    %3783 = vmatprep.subr.mxu0 0.0
    %v3784 = vand.u32 %v588, 4294901760
    %v3785 = vsub.f32 %v588, %v3784
    %v3786 = vand.u32 %v3785, 4294901760
    %v3787 = vsub.f32 %v3785, %v3786
    %v3788 = vand.u32 %v3787, 4294901760
    %3789 = vmatpush1.msra.mxu0 %v3788
    %3790 = vmatprep.subr.mxu0 0.0
    %v3791 = vand.u32 %v589, 4294901760
    %v3792 = vsub.f32 %v589, %v3791
    %v3793 = vand.u32 %v3792, 4294901760
    %v3794 = vsub.f32 %v3792, %v3793
    %v3795 = vand.u32 %v3794, 4294901760
    %3796 = vmatpush1.msra.mxu0 %v3795
    %3797 = vmatprep.subr.mxu0 0.0
    %v3798 = vand.u32 %v590, 4294901760
    %v3799 = vsub.f32 %v590, %v3798
    %v3800 = vand.u32 %v3799, 4294901760
    %v3801 = vsub.f32 %v3799, %v3800
    %v3802 = vand.u32 %v3801, 4294901760
    %3803 = vmatpush1.msra.mxu0 %v3802
    %3804 = vmatprep.subr.mxu0 0.0
    %v3805 = vand.u32 %v591, 4294901760
    %v3806 = vsub.f32 %v591, %v3805
    %v3807 = vand.u32 %v3806, 4294901760
    %v3808 = vsub.f32 %v3806, %v3807
    %v3809 = vand.u32 %v3808, 4294901760
    %3810 = vmatpush1.msra.mxu0 %v3809
    %3811 = vmatprep.subr.mxu0 0.0
    %3812 = vmatpush1.msra.mxu0 0.0
    %3813 = vmatprep.subr.mxu0 0.0
    %3814 = vmatpush1.msra.mxu0 0.0
    %3815 = vmatprep.subr.mxu0 0.0
    %3816 = vmatpush1.msra.mxu0 0.0
    %3817 = vmatprep.subr.mxu0 0.0
    %3818 = vmatpush1.msra.mxu0 0.0
    %3819 = vmatprep.subr.mxu0 0.0
    %3820 = vmatpush1.msra.mxu0 0.0
    %3821 = vmatprep.subr.mxu0 0.0
    %3822 = vmatpush1.msra.mxu0 0.0
    %3823 = vmatprep.subr.mxu0 0.0
    %3824 = vmatpush1.msra.mxu0 0.0
    %3825 = vmatprep.subr.mxu0 0.0
    %3826 = vmatpush1.msra.mxu0 0.0
    %3827 = vmatprep.subr.mxu0 0.0
    %3828 = vmatpush1.msra.mxu0 0.0
    %3829 = vmatprep.subr.mxu0 0.0
    %3830 = vmatpush1.msra.mxu0 0.0
    %3831 = vmatprep.subr.mxu0 0.0
    %3832 = vmatpush1.msra.mxu0 0.0
    %3833 = vmatprep.subr.mxu0 0.0
    %3834 = vmatpush1.msra.mxu0 0.0
    %3835 = vmatprep.subr.mxu0 0.0
    %3836 = vmatpush1.msra.mxu0 0.0
    %3837 = vmatprep.subr.mxu0 0.0
    %3838 = vmatpush1.msra.mxu0 0.0
    %3839 = vmatprep.subr.mxu0 0.0
    %3840 = vmatpush1.msra.mxu0 0.0
    %3841 = vmatprep.subr.mxu0 0.0
    %3842 = vmatpush1.msra.mxu0 0.0
    %3843 = vmatprep.subr.mxu0 0.0
    %3844 = vmatpush1.msra.mxu0 0.0
    %3845 = vmatprep.subr.mxu0 0.0
    %3846 = vmatpush1.msra.mxu0 0.0
    %3847 = vmatprep.subr.mxu0 0.0
    %3848 = vmatpush1.msra.mxu0 0.0
    %3849 = vmatprep.subr.mxu0 0.0
    %3850 = vmatpush1.msra.mxu0 0.0
    %3851 = vmatprep.subr.mxu0 0.0
    %3852 = vmatpush1.msra.mxu0 0.0
    %3853 = vmatprep.subr.mxu0 0.0
    %3854 = vmatpush1.msra.mxu0 0.0
    %3855 = vmatprep.subr.mxu0 0.0
    %3856 = vmatpush1.msra.mxu0 0.0
    %3857 = vmatprep.subr.mxu0 0.0
    %3858 = vmatpush1.msra.mxu0 0.0
    %3859 = vmatprep.subr.mxu0 0.0
    %3860 = vmatpush1.msra.mxu0 0.0
    %3861 = vmatprep.subr.mxu0 0.0
    %3862 = vmatpush1.msra.mxu0 0.0
    %3863 = vmatprep.subr.mxu0 0.0
    %3864 = vmatpush1.msra.mxu0 0.0
    %3865 = vmatprep.subr.mxu0 0.0
    %3866 = vmatpush1.msra.mxu0 0.0
    %3867 = vmatprep.mubr.f32.mxu0 0.0
    %v3868 = vand.u32 %v3702, 4294901760
    %3869 = vmatmul.mubr.f32.gmra.mrb[0].mxu0 %v3868
    %v3870 = vpop.f32.mrb[0].mxu0
    %v3871 = vadd.f32 %v3780, %v3870
    %v3872 = vpop.f32.mrb[0].mxu0
    %3873 = vdwg.mxu0
    %3874 = vmatprep.subr.mxu0 0.0
    %v3875 = vand.u32 %v588, 4294901760
    %v3876 = vsub.f32 %v588, %v3875
    %3877 = vmatpush1.msra.mxu0 %v3876
    %3878 = vmatprep.subr.mxu0 0.0
    %v3879 = vand.u32 %v589, 4294901760
    %v3880 = vsub.f32 %v589, %v3879
    %3881 = vmatpush1.msra.mxu0 %v3880
    %3882 = vmatprep.subr.mxu0 0.0
    %v3883 = vand.u32 %v590, 4294901760
    %v3884 = vsub.f32 %v590, %v3883
    %3885 = vmatpush1.msra.mxu0 %v3884
    %3886 = vmatprep.subr.mxu0 0.0
    %v3887 = vand.u32 %v591, 4294901760
    %v3888 = vsub.f32 %v591, %v3887
    %3889 = vmatpush1.msra.mxu0 %v3888
    %3890 = vmatprep.subr.mxu0 0.0
    %3891 = vmatpush1.msra.mxu0 0.0
    %3892 = vmatprep.subr.mxu0 0.0
    %3893 = vmatpush1.msra.mxu0 0.0
    %3894 = vmatprep.subr.mxu0 0.0
    %3895 = vmatpush1.msra.mxu0 0.0
    %3896 = vmatprep.subr.mxu0 0.0
    %3897 = vmatpush1.msra.mxu0 0.0
    %3898 = vmatprep.subr.mxu0 0.0
    %3899 = vmatpush1.msra.mxu0 0.0
    %3900 = vmatprep.subr.mxu0 0.0
    %3901 = vmatpush1.msra.mxu0 0.0
    %3902 = vmatprep.subr.mxu0 0.0
    %3903 = vmatpush1.msra.mxu0 0.0
    %3904 = vmatprep.subr.mxu0 0.0
    %3905 = vmatpush1.msra.mxu0 0.0
    %3906 = vmatprep.subr.mxu0 0.0
    %3907 = vmatpush1.msra.mxu0 0.0
    %3908 = vmatprep.subr.mxu0 0.0
    %3909 = vmatpush1.msra.mxu0 0.0
    %3910 = vmatprep.subr.mxu0 0.0
    %3911 = vmatpush1.msra.mxu0 0.0
    %3912 = vmatprep.subr.mxu0 0.0
    %3913 = vmatpush1.msra.mxu0 0.0
    %3914 = vmatprep.subr.mxu0 0.0
    %3915 = vmatpush1.msra.mxu0 0.0
    %3916 = vmatprep.subr.mxu0 0.0
    %3917 = vmatpush1.msra.mxu0 0.0
    %3918 = vmatprep.subr.mxu0 0.0
    %3919 = vmatpush1.msra.mxu0 0.0
    %3920 = vmatprep.subr.mxu0 0.0
    %3921 = vmatpush1.msra.mxu0 0.0
    %3922 = vmatprep.subr.mxu0 0.0
    %3923 = vmatpush1.msra.mxu0 0.0
    %3924 = vmatprep.subr.mxu0 0.0
    %3925 = vmatpush1.msra.mxu0 0.0
    %3926 = vmatprep.subr.mxu0 0.0
    %3927 = vmatpush1.msra.mxu0 0.0
    %3928 = vmatprep.subr.mxu0 0.0
    %3929 = vmatpush1.msra.mxu0 0.0
    %3930 = vmatprep.subr.mxu0 0.0
    %3931 = vmatpush1.msra.mxu0 0.0
    %3932 = vmatprep.subr.mxu0 0.0
    %3933 = vmatpush1.msra.mxu0 0.0
    %3934 = vmatprep.subr.mxu0 0.0
    %3935 = vmatpush1.msra.mxu0 0.0
    %3936 = vmatprep.subr.mxu0 0.0
    %3937 = vmatpush1.msra.mxu0 0.0
    %3938 = vmatprep.subr.mxu0 0.0
    %3939 = vmatpush1.msra.mxu0 0.0
    %3940 = vmatprep.subr.mxu0 0.0
    %3941 = vmatpush1.msra.mxu0 0.0
    %3942 = vmatprep.subr.mxu0 0.0
    %3943 = vmatpush1.msra.mxu0 0.0
    %3944 = vmatprep.subr.mxu0 0.0
    %3945 = vmatpush1.msra.mxu0 0.0
    %3946 = vmatprep.mubr.f32.mxu0 0.0
    %v3947 = vand.u32 %v3702, 4294901760
    %v3948 = vsub.f32 %v3702, %v3947
    %3949 = vmatmul.mubr.f32.gmra.mrb[0].mxu0 %v3948
    %v3950 = vpop.f32.mrb[0].mxu0
    %v3951 = vadd.f32 %v3871, %v3950
    %v3952 = vpop.f32.mrb[0].mxu0
    %3953 = vdwg.mxu0
    %3954 = vmatprep.subr.mxu0 0.0
    %v3955 = vand.u32 %v588, 4294901760
    %3956 = vmatpush1.msra.mxu0 %v3955
    %3957 = vmatprep.subr.mxu0 0.0
    %v3958 = vand.u32 %v589, 4294901760
    %3959 = vmatpush1.msra.mxu0 %v3958
    %3960 = vmatprep.subr.mxu0 0.0
    %v3961 = vand.u32 %v590, 4294901760
    %3962 = vmatpush1.msra.mxu0 %v3961
    %3963 = vmatprep.subr.mxu0 0.0
    %v3964 = vand.u32 %v591, 4294901760
    %3965 = vmatpush1.msra.mxu0 %v3964
    %3966 = vmatprep.subr.mxu0 0.0
    %3967 = vmatpush1.msra.mxu0 0.0
    %3968 = vmatprep.subr.mxu0 0.0
    %3969 = vmatpush1.msra.mxu0 0.0
    %3970 = vmatprep.subr.mxu0 0.0
    %3971 = vmatpush1.msra.mxu0 0.0
    %3972 = vmatprep.subr.mxu0 0.0
    %3973 = vmatpush1.msra.mxu0 0.0
    %3974 = vmatprep.subr.mxu0 0.0
    %3975 = vmatpush1.msra.mxu0 0.0
    %3976 = vmatprep.subr.mxu0 0.0
    %3977 = vmatpush1.msra.mxu0 0.0
    %3978 = vmatprep.subr.mxu0 0.0
    %3979 = vmatpush1.msra.mxu0 0.0
    %3980 = vmatprep.subr.mxu0 0.0
    %3981 = vmatpush1.msra.mxu0 0.0
    %3982 = vmatprep.subr.mxu0 0.0
    %3983 = vmatpush1.msra.mxu0 0.0
    %3984 = vmatprep.subr.mxu0 0.0
    %3985 = vmatpush1.msra.mxu0 0.0
    %3986 = vmatprep.subr.mxu0 0.0
    %3987 = vmatpush1.msra.mxu0 0.0
    %3988 = vmatprep.subr.mxu0 0.0
    %3989 = vmatpush1.msra.mxu0 0.0
    %3990 = vmatprep.subr.mxu0 0.0
    %3991 = vmatpush1.msra.mxu0 0.0
    %3992 = vmatprep.subr.mxu0 0.0
    %3993 = vmatpush1.msra.mxu0 0.0
    %3994 = vmatprep.subr.mxu0 0.0
    %3995 = vmatpush1.msra.mxu0 0.0
    %3996 = vmatprep.subr.mxu0 0.0
    %3997 = vmatpush1.msra.mxu0 0.0
    %3998 = vmatprep.subr.mxu0 0.0
    %3999 = vmatpush1.msra.mxu0 0.0
    %4000 = vmatprep.subr.mxu0 0.0
    %4001 = vmatpush1.msra.mxu0 0.0
    %4002 = vmatprep.subr.mxu0 0.0
    %4003 = vmatpush1.msra.mxu0 0.0
    %4004 = vmatprep.subr.mxu0 0.0
    %4005 = vmatpush1.msra.mxu0 0.0
    %4006 = vmatprep.subr.mxu0 0.0
    %4007 = vmatpush1.msra.mxu0 0.0
    %4008 = vmatprep.subr.mxu0 0.0
    %4009 = vmatpush1.msra.mxu0 0.0
    %4010 = vmatprep.subr.mxu0 0.0
    %4011 = vmatpush1.msra.mxu0 0.0
    %4012 = vmatprep.subr.mxu0 0.0
    %4013 = vmatpush1.msra.mxu0 0.0
    %4014 = vmatprep.subr.mxu0 0.0
    %4015 = vmatpush1.msra.mxu0 0.0
    %4016 = vmatprep.subr.mxu0 0.0
    %4017 = vmatpush1.msra.mxu0 0.0
    %4018 = vmatprep.subr.mxu0 0.0
    %4019 = vmatpush1.msra.mxu0 0.0
    %4020 = vmatprep.subr.mxu0 0.0
    %4021 = vmatpush1.msra.mxu0 0.0
    %4022 = vmatprep.mubr.f32.mxu0 0.0
    %v4023 = vand.u32 %v3702, 4294901760
    %v4024 = vsub.f32 %v3702, %v4023
    %v4025 = vand.u32 %v4024, 4294901760
    %4026 = vmatmul.mubr.f32.gmra.mrb[0].mxu0 %v4025
    %v4027 = vpop.f32.mrb[0].mxu0
    %v4028 = vadd.f32 %v3951, %v4027
    %v4029 = vpop.f32.mrb[0].mxu0
    %4030 = vdwg.mxu0
    %4031 = vmatprep.subr.mxu0 0.0
    %v4032 = vand.u32 %v588, 4294901760
    %v4033 = vsub.f32 %v588, %v4032
    %v4034 = vand.u32 %v4033, 4294901760
    %4035 = vmatpush1.msra.mxu0 %v4034
    %4036 = vmatprep.subr.mxu0 0.0
    %v4037 = vand.u32 %v589, 4294901760
    %v4038 = vsub.f32 %v589, %v4037
    %v4039 = vand.u32 %v4038, 4294901760
    %4040 = vmatpush1.msra.mxu0 %v4039
    %4041 = vmatprep.subr.mxu0 0.0
    %v4042 = vand.u32 %v590, 4294901760
    %v4043 = vsub.f32 %v590, %v4042
    %v4044 = vand.u32 %v4043, 4294901760
    %4045 = vmatpush1.msra.mxu0 %v4044
    %4046 = vmatprep.subr.mxu0 0.0
    %v4047 = vand.u32 %v591, 4294901760
    %v4048 = vsub.f32 %v591, %v4047
    %v4049 = vand.u32 %v4048, 4294901760
    %4050 = vmatpush1.msra.mxu0 %v4049
    %4051 = vmatprep.subr.mxu0 0.0
    %4052 = vmatpush1.msra.mxu0 0.0
    %4053 = vmatprep.subr.mxu0 0.0
    %4054 = vmatpush1.msra.mxu0 0.0
    %4055 = vmatprep.subr.mxu0 0.0
    %4056 = vmatpush1.msra.mxu0 0.0
    %4057 = vmatprep.subr.mxu0 0.0
    %4058 = vmatpush1.msra.mxu0 0.0
    %4059 = vmatprep.subr.mxu0 0.0
    %4060 = vmatpush1.msra.mxu0 0.0
    %4061 = vmatprep.subr.mxu0 0.0
    %4062 = vmatpush1.msra.mxu0 0.0
    %4063 = vmatprep.subr.mxu0 0.0
    %4064 = vmatpush1.msra.mxu0 0.0
    %4065 = vmatprep.subr.mxu0 0.0
    %4066 = vmatpush1.msra.mxu0 0.0
    %4067 = vmatprep.subr.mxu0 0.0
    %4068 = vmatpush1.msra.mxu0 0.0
    %4069 = vmatprep.subr.mxu0 0.0
    %4070 = vmatpush1.msra.mxu0 0.0
    %4071 = vmatprep.subr.mxu0 0.0
    %4072 = vmatpush1.msra.mxu0 0.0
    %4073 = vmatprep.subr.mxu0 0.0
    %4074 = vmatpush1.msra.mxu0 0.0
    %4075 = vmatprep.subr.mxu0 0.0
    %4076 = vmatpush1.msra.mxu0 0.0
    %4077 = vmatprep.subr.mxu0 0.0
    %4078 = vmatpush1.msra.mxu0 0.0
    %4079 = vmatprep.subr.mxu0 0.0
    %4080 = vmatpush1.msra.mxu0 0.0
    %4081 = vmatprep.subr.mxu0 0.0
    %4082 = vmatpush1.msra.mxu0 0.0
    %4083 = vmatprep.subr.mxu0 0.0
    %4084 = vmatpush1.msra.mxu0 0.0
    %4085 = vmatprep.subr.mxu0 0.0
    %4086 = vmatpush1.msra.mxu0 0.0
    %4087 = vmatprep.subr.mxu0 0.0
    %4088 = vmatpush1.msra.mxu0 0.0
    %4089 = vmatprep.subr.mxu0 0.0
    %4090 = vmatpush1.msra.mxu0 0.0
    %4091 = vmatprep.subr.mxu0 0.0
    %4092 = vmatpush1.msra.mxu0 0.0
    %4093 = vmatprep.subr.mxu0 0.0
    %4094 = vmatpush1.msra.mxu0 0.0
    %4095 = vmatprep.subr.mxu0 0.0
    %4096 = vmatpush1.msra.mxu0 0.0
    %4097 = vmatprep.subr.mxu0 0.0
    %4098 = vmatpush1.msra.mxu0 0.0
    %4099 = vmatprep.subr.mxu0 0.0
    %4100 = vmatpush1.msra.mxu0 0.0
    %4101 = vmatprep.subr.mxu0 0.0
    %4102 = vmatpush1.msra.mxu0 0.0
    %4103 = vmatprep.subr.mxu0 0.0
    %4104 = vmatpush1.msra.mxu0 0.0
    %4105 = vmatprep.subr.mxu0 0.0
    %4106 = vmatpush1.msra.mxu0 0.0
    %4107 = vmatprep.mubr.f32.mxu0 0.0
    %v4108 = vand.u32 %v3702, 4294901760
    %4109 = vmatmul.mubr.f32.gmra.mrb[0].mxu0 %v4108
    %v4110 = vpop.f32.mrb[0].mxu0
    %v4111 = vadd.f32 %v4028, %v4110
    %v4112 = vpop.f32.mrb[0].mxu0
    %4113 = vdwg.mxu0
    %4114 = vmatprep.subr.mxu0 0.0
    %v4115 = vand.u32 %v588, 4294901760
    %4116 = vmatpush1.msra.mxu0 %v4115
    %4117 = vmatprep.subr.mxu0 0.0
    %v4118 = vand.u32 %v589, 4294901760
    %4119 = vmatpush1.msra.mxu0 %v4118
    %4120 = vmatprep.subr.mxu0 0.0
    %v4121 = vand.u32 %v590, 4294901760
    %4122 = vmatpush1.msra.mxu0 %v4121
    %4123 = vmatprep.subr.mxu0 0.0
    %v4124 = vand.u32 %v591, 4294901760
    %4125 = vmatpush1.msra.mxu0 %v4124
    %4126 = vmatprep.subr.mxu0 0.0
    %4127 = vmatpush1.msra.mxu0 0.0
    %4128 = vmatprep.subr.mxu0 0.0
    %4129 = vmatpush1.msra.mxu0 0.0
    %4130 = vmatprep.subr.mxu0 0.0
    %4131 = vmatpush1.msra.mxu0 0.0
    %4132 = vmatprep.subr.mxu0 0.0
    %4133 = vmatpush1.msra.mxu0 0.0
    %4134 = vmatprep.subr.mxu0 0.0
    %4135 = vmatpush1.msra.mxu0 0.0
    %4136 = vmatprep.subr.mxu0 0.0
    %4137 = vmatpush1.msra.mxu0 0.0
    %4138 = vmatprep.subr.mxu0 0.0
    %4139 = vmatpush1.msra.mxu0 0.0
    %4140 = vmatprep.subr.mxu0 0.0
    %4141 = vmatpush1.msra.mxu0 0.0
    %4142 = vmatprep.subr.mxu0 0.0
    %4143 = vmatpush1.msra.mxu0 0.0
    %4144 = vmatprep.subr.mxu0 0.0
    %4145 = vmatpush1.msra.mxu0 0.0
    %4146 = vmatprep.subr.mxu0 0.0
    %4147 = vmatpush1.msra.mxu0 0.0
    %4148 = vmatprep.subr.mxu0 0.0
    %4149 = vmatpush1.msra.mxu0 0.0
    %4150 = vmatprep.subr.mxu0 0.0
    %4151 = vmatpush1.msra.mxu0 0.0
    %4152 = vmatprep.subr.mxu0 0.0
    %4153 = vmatpush1.msra.mxu0 0.0
    %4154 = vmatprep.subr.mxu0 0.0
    %4155 = vmatpush1.msra.mxu0 0.0
    %4156 = vmatprep.subr.mxu0 0.0
    %4157 = vmatpush1.msra.mxu0 0.0
    %4158 = vmatprep.subr.mxu0 0.0
    %4159 = vmatpush1.msra.mxu0 0.0
    %4160 = vmatprep.subr.mxu0 0.0
    %4161 = vmatpush1.msra.mxu0 0.0
    %4162 = vmatprep.subr.mxu0 0.0
    %4163 = vmatpush1.msra.mxu0 0.0
    %4164 = vmatprep.subr.mxu0 0.0
    %4165 = vmatpush1.msra.mxu0 0.0
    %4166 = vmatprep.subr.mxu0 0.0
    %4167 = vmatpush1.msra.mxu0 0.0
    %4168 = vmatprep.subr.mxu0 0.0
    %4169 = vmatpush1.msra.mxu0 0.0
    %4170 = vmatprep.subr.mxu0 0.0
    %4171 = vmatpush1.msra.mxu0 0.0
    %4172 = vmatprep.subr.mxu0 0.0
    %4173 = vmatpush1.msra.mxu0 0.0
    %4174 = vmatprep.subr.mxu0 0.0
    %4175 = vmatpush1.msra.mxu0 0.0
    %4176 = vmatprep.subr.mxu0 0.0
    %4177 = vmatpush1.msra.mxu0 0.0
    %4178 = vmatprep.subr.mxu0 0.0
    %4179 = vmatpush1.msra.mxu0 0.0
    %4180 = vmatprep.subr.mxu0 0.0
    %4181 = vmatpush1.msra.mxu0 0.0
    %4182 = vmatprep.mubr.f32.mxu0 0.0
    %v4183 = vand.u32 %v3702, 4294901760
    %4184 = vmatmul.mubr.f32.gmra.mrb[0].mxu0 %v4183
    %v4185 = vpop.f32.mrb[0].mxu0
    %v4186 = vadd.f32 %v4111, %v4185
    %v4187 = vpop.f32.mrb[0].mxu0
    %4188 = vdwg.mxu0
    %v4189 = vadd.f32 %v3701, %v4186
    %v4190 = vmul.f32 %v4189, 0.5
    %v4191 = vtanh.pop %v4190
    %v4192 = vadd.f32 %v4191, 1.0
    %v4193 = vmul.f32 %v4192, 0.5
    %v4194 = vtanh.pop %v4189
    %v4195 = vsel %vm596, %v4194, %v4193
    %v4196 = vmul.f32 %v4195, %v3689
    %4198 = vrot.lane.b32.xlu0 %v4195, 64
    %v4199 = vpop.permute.xlu0 %4198
    %v4201 = vmul.f32 %v4195, %v4199
    %4203 = vrot.lane.b32.xlu0 %v4201, 32
    %v4204 = vpop.permute.xlu0 %4203
    %v4206 = vadd.f32 %v4196, %v4204
    %v4207 = vtanh.pop %v4206
    %4209 = vrot.lane.b32.xlu0 %v4207, 64
    %v4210 = vpop.permute.xlu0 %4209
    %v4212 = vmul.f32 %v4195, %v4210
    %4214 = vrot.lane.b32.xlu0 %v4212, 32
    %v4215 = vpop.permute.xlu0 %4214
    %4217 = vst.msk [vmem:[#allocation3 + $0xc] sm:$0x3] %vm1114, %v4215
    %v4218 = vld [vmem:[#allocation2 + $0xe] sm:$0x3]
    %v4219 = vsel %vm51, %v4215, 0
    %4221 = vmatprep.subr.mxu0 0.0
    %v4222 = vand.u32 %v588, 4294901760
    %4223 = vmatpush1.msra.mxu0 %v4222
    %4224 = vmatprep.subr.mxu0 0.0
    %v4225 = vand.u32 %v589, 4294901760
    %4226 = vmatpush1.msra.mxu0 %v4225
    %4227 = vmatprep.subr.mxu0 0.0
    %v4228 = vand.u32 %v590, 4294901760
    %4229 = vmatpush1.msra.mxu0 %v4228
    %4230 = vmatprep.subr.mxu0 0.0
    %v4231 = vand.u32 %v591, 4294901760
    %4232 = vmatpush1.msra.mxu0 %v4231
    %4233 = vmatprep.subr.mxu0 0.0
    %4234 = vmatpush1.msra.mxu0 0.0
    %4235 = vmatprep.subr.mxu0 0.0
    %4236 = vmatpush1.msra.mxu0 0.0
    %4237 = vmatprep.subr.mxu0 0.0
    %4238 = vmatpush1.msra.mxu0 0.0
    %4239 = vmatprep.subr.mxu0 0.0
    %4240 = vmatpush1.msra.mxu0 0.0
    %4241 = vmatprep.subr.mxu0 0.0
    %4242 = vmatpush1.msra.mxu0 0.0
    %4243 = vmatprep.subr.mxu0 0.0
    %4244 = vmatpush1.msra.mxu0 0.0
    %4245 = vmatprep.subr.mxu0 0.0
    %4246 = vmatpush1.msra.mxu0 0.0
    %4247 = vmatprep.subr.mxu0 0.0
    %4248 = vmatpush1.msra.mxu0 0.0
    %4249 = vmatprep.subr.mxu0 0.0
    %4250 = vmatpush1.msra.mxu0 0.0
    %4251 = vmatprep.subr.mxu0 0.0
    %4252 = vmatpush1.msra.mxu0 0.0
    %4253 = vmatprep.subr.mxu0 0.0
    %4254 = vmatpush1.msra.mxu0 0.0
    %4255 = vmatprep.subr.mxu0 0.0
    %4256 = vmatpush1.msra.mxu0 0.0
    %4257 = vmatprep.subr.mxu0 0.0
    %4258 = vmatpush1.msra.mxu0 0.0
    %4259 = vmatprep.subr.mxu0 0.0
    %4260 = vmatpush1.msra.mxu0 0.0
    %4261 = vmatprep.subr.mxu0 0.0
    %4262 = vmatpush1.msra.mxu0 0.0
    %4263 = vmatprep.subr.mxu0 0.0
    %4264 = vmatpush1.msra.mxu0 0.0
    %4265 = vmatprep.subr.mxu0 0.0
    %4266 = vmatpush1.msra.mxu0 0.0
    %4267 = vmatprep.subr.mxu0 0.0
    %4268 = vmatpush1.msra.mxu0 0.0
    %4269 = vmatprep.subr.mxu0 0.0
    %4270 = vmatpush1.msra.mxu0 0.0
    %4271 = vmatprep.subr.mxu0 0.0
    %4272 = vmatpush1.msra.mxu0 0.0
    %4273 = vmatprep.subr.mxu0 0.0
    %4274 = vmatpush1.msra.mxu0 0.0
    %4275 = vmatprep.subr.mxu0 0.0
    %4276 = vmatpush1.msra.mxu0 0.0
    %4277 = vmatprep.subr.mxu0 0.0
    %4278 = vmatpush1.msra.mxu0 0.0
    %4279 = vmatprep.subr.mxu0 0.0
    %4280 = vmatpush1.msra.mxu0 0.0
    %4281 = vmatprep.subr.mxu0 0.0
    %4282 = vmatpush1.msra.mxu0 0.0
    %4283 = vmatprep.subr.mxu0 0.0
    %4284 = vmatpush1.msra.mxu0 0.0
    %4285 = vmatprep.subr.mxu0 0.0
    %4286 = vmatpush1.msra.mxu0 0.0
    %4287 = vmatprep.subr.mxu0 0.0
    %4288 = vmatpush1.msra.mxu0 0.0
    %4289 = vmatprep.mubr.f32.mxu0 0.0
    %v4290 = vand.u32 %v4219, 4294901760
    %v4291 = vsub.f32 %v4219, %v4290
    %v4292 = vand.u32 %v4291, 4294901760
    %v4293 = vsub.f32 %v4291, %v4292
    %v4294 = vand.u32 %v4293, 4294901760
    %4295 = vmatmul.mubr.f32.gmra.mrb[0].mxu0 %v4294
    %v4296 = vpop.f32.mrb[0].mxu0
    %v4297 = vadd.f32 0.0, %v4296
    %v4298 = vpop.f32.mrb[0].mxu0
    %4299 = vdwg.mxu0
    %4300 = vmatprep.subr.mxu0 0.0
    %v4301 = vand.u32 %v588, 4294901760
    %v4302 = vsub.f32 %v588, %v4301
    %v4303 = vand.u32 %v4302, 4294901760
    %v4304 = vsub.f32 %v4302, %v4303
    %v4305 = vand.u32 %v4304, 4294901760
    %4306 = vmatpush1.msra.mxu0 %v4305
    %4307 = vmatprep.subr.mxu0 0.0
    %v4308 = vand.u32 %v589, 4294901760
    %v4309 = vsub.f32 %v589, %v4308
    %v4310 = vand.u32 %v4309, 4294901760
    %v4311 = vsub.f32 %v4309, %v4310
    %v4312 = vand.u32 %v4311, 4294901760
    %4313 = vmatpush1.msra.mxu0 %v4312
    %4314 = vmatprep.subr.mxu0 0.0
    %v4315 = vand.u32 %v590, 4294901760
    %v4316 = vsub.f32 %v590, %v4315
    %v4317 = vand.u32 %v4316, 4294901760
    %v4318 = vsub.f32 %v4316, %v4317
    %v4319 = vand.u32 %v4318, 4294901760
    %4320 = vmatpush1.msra.mxu0 %v4319
    %4321 = vmatprep.subr.mxu0 0.0
    %v4322 = vand.u32 %v591, 4294901760
    %v4323 = vsub.f32 %v591, %v4322
    %v4324 = vand.u32 %v4323, 4294901760
    %v4325 = vsub.f32 %v4323, %v4324
    %v4326 = vand.u32 %v4325, 4294901760
    %4327 = vmatpush1.msra.mxu0 %v4326
    %4328 = vmatprep.subr.mxu0 0.0
    %4329 = vmatpush1.msra.mxu0 0.0
    %4330 = vmatprep.subr.mxu0 0.0
    %4331 = vmatpush1.msra.mxu0 0.0
    %4332 = vmatprep.subr.mxu0 0.0
    %4333 = vmatpush1.msra.mxu0 0.0
    %4334 = vmatprep.subr.mxu0 0.0
    %4335 = vmatpush1.msra.mxu0 0.0
    %4336 = vmatprep.subr.mxu0 0.0
    %4337 = vmatpush1.msra.mxu0 0.0
    %4338 = vmatprep.subr.mxu0 0.0
    %4339 = vmatpush1.msra.mxu0 0.0
    %4340 = vmatprep.subr.mxu0 0.0
    %4341 = vmatpush1.msra.mxu0 0.0
    %4342 = vmatprep.subr.mxu0 0.0
    %4343 = vmatpush1.msra.mxu0 0.0
    %4344 = vmatprep.subr.mxu0 0.0
    %4345 = vmatpush1.msra.mxu0 0.0
    %4346 = vmatprep.subr.mxu0 0.0
    %4347 = vmatpush1.msra.mxu0 0.0
    %4348 = vmatprep.subr.mxu0 0.0
    %4349 = vmatpush1.msra.mxu0 0.0
    %4350 = vmatprep.subr.mxu0 0.0
    %4351 = vmatpush1.msra.mxu0 0.0
    %4352 = vmatprep.subr.mxu0 0.0
    %4353 = vmatpush1.msra.mxu0 0.0
    %4354 = vmatprep.subr.mxu0 0.0
    %4355 = vmatpush1.msra.mxu0 0.0
    %4356 = vmatprep.subr.mxu0 0.0
    %4357 = vmatpush1.msra.mxu0 0.0
    %4358 = vmatprep.subr.mxu0 0.0
    %4359 = vmatpush1.msra.mxu0 0.0
    %4360 = vmatprep.subr.mxu0 0.0
    %4361 = vmatpush1.msra.mxu0 0.0
    %4362 = vmatprep.subr.mxu0 0.0
    %4363 = vmatpush1.msra.mxu0 0.0
    %4364 = vmatprep.subr.mxu0 0.0
    %4365 = vmatpush1.msra.mxu0 0.0
    %4366 = vmatprep.subr.mxu0 0.0
    %4367 = vmatpush1.msra.mxu0 0.0
    %4368 = vmatprep.subr.mxu0 0.0
    %4369 = vmatpush1.msra.mxu0 0.0
    %4370 = vmatprep.subr.mxu0 0.0
    %4371 = vmatpush1.msra.mxu0 0.0
    %4372 = vmatprep.subr.mxu0 0.0
    %4373 = vmatpush1.msra.mxu0 0.0
    %4374 = vmatprep.subr.mxu0 0.0
    %4375 = vmatpush1.msra.mxu0 0.0
    %4376 = vmatprep.subr.mxu0 0.0
    %4377 = vmatpush1.msra.mxu0 0.0
    %4378 = vmatprep.subr.mxu0 0.0
    %4379 = vmatpush1.msra.mxu0 0.0
    %4380 = vmatprep.subr.mxu0 0.0
    %4381 = vmatpush1.msra.mxu0 0.0
    %4382 = vmatprep.subr.mxu0 0.0
    %4383 = vmatpush1.msra.mxu0 0.0
    %4384 = vmatprep.mubr.f32.mxu0 0.0
    %v4385 = vand.u32 %v4219, 4294901760
    %4386 = vmatmul.mubr.f32.gmra.mrb[0].mxu0 %v4385
    %v4387 = vpop.f32.mrb[0].mxu0
    %v4388 = vadd.f32 %v4297, %v4387
    %v4389 = vpop.f32.mrb[0].mxu0
    %4390 = vdwg.mxu0
    %4391 = vmatprep.subr.mxu0 0.0
    %v4392 = vand.u32 %v588, 4294901760
    %v4393 = vsub.f32 %v588, %v4392
    %4394 = vmatpush1.msra.mxu0 %v4393
    %4395 = vmatprep.subr.mxu0 0.0
    %v4396 = vand.u32 %v589, 4294901760
    %v4397 = vsub.f32 %v589, %v4396
    %4398 = vmatpush1.msra.mxu0 %v4397
    %4399 = vmatprep.subr.mxu0 0.0
    %v4400 = vand.u32 %v590, 4294901760
    %v4401 = vsub.f32 %v590, %v4400
    %4402 = vmatpush1.msra.mxu0 %v4401
    %4403 = vmatprep.subr.mxu0 0.0
    %v4404 = vand.u32 %v591, 4294901760
    %v4405 = vsub.f32 %v591, %v4404
    %4406 = vmatpush1.msra.mxu0 %v4405
    %4407 = vmatprep.subr.mxu0 0.0
    %4408 = vmatpush1.msra.mxu0 0.0
    %4409 = vmatprep.subr.mxu0 0.0
    %4410 = vmatpush1.msra.mxu0 0.0
    %4411 = vmatprep.subr.mxu0 0.0
    %4412 = vmatpush1.msra.mxu0 0.0
    %4413 = vmatprep.subr.mxu0 0.0
    %4414 = vmatpush1.msra.mxu0 0.0
    %4415 = vmatprep.subr.mxu0 0.0
    %4416 = vmatpush1.msra.mxu0 0.0
    %4417 = vmatprep.subr.mxu0 0.0
    %4418 = vmatpush1.msra.mxu0 0.0
    %4419 = vmatprep.subr.mxu0 0.0
    %4420 = vmatpush1.msra.mxu0 0.0
    %4421 = vmatprep.subr.mxu0 0.0
    %4422 = vmatpush1.msra.mxu0 0.0
    %4423 = vmatprep.subr.mxu0 0.0
    %4424 = vmatpush1.msra.mxu0 0.0
    %4425 = vmatprep.subr.mxu0 0.0
    %4426 = vmatpush1.msra.mxu0 0.0
    %4427 = vmatprep.subr.mxu0 0.0
    %4428 = vmatpush1.msra.mxu0 0.0
    %4429 = vmatprep.subr.mxu0 0.0
    %4430 = vmatpush1.msra.mxu0 0.0
    %4431 = vmatprep.subr.mxu0 0.0
    %4432 = vmatpush1.msra.mxu0 0.0
    %4433 = vmatprep.subr.mxu0 0.0
    %4434 = vmatpush1.msra.mxu0 0.0
    %4435 = vmatprep.subr.mxu0 0.0
    %4436 = vmatpush1.msra.mxu0 0.0
    %4437 = vmatprep.subr.mxu0 0.0
    %4438 = vmatpush1.msra.mxu0 0.0
    %4439 = vmatprep.subr.mxu0 0.0
    %4440 = vmatpush1.msra.mxu0 0.0
    %4441 = vmatprep.subr.mxu0 0.0
    %4442 = vmatpush1.msra.mxu0 0.0
    %4443 = vmatprep.subr.mxu0 0.0
    %4444 = vmatpush1.msra.mxu0 0.0
    %4445 = vmatprep.subr.mxu0 0.0
    %4446 = vmatpush1.msra.mxu0 0.0
    %4447 = vmatprep.subr.mxu0 0.0
    %4448 = vmatpush1.msra.mxu0 0.0
    %4449 = vmatprep.subr.mxu0 0.0
    %4450 = vmatpush1.msra.mxu0 0.0
    %4451 = vmatprep.subr.mxu0 0.0
    %4452 = vmatpush1.msra.mxu0 0.0
    %4453 = vmatprep.subr.mxu0 0.0
    %4454 = vmatpush1.msra.mxu0 0.0
    %4455 = vmatprep.subr.mxu0 0.0
    %4456 = vmatpush1.msra.mxu0 0.0
    %4457 = vmatprep.subr.mxu0 0.0
    %4458 = vmatpush1.msra.mxu0 0.0
    %4459 = vmatprep.subr.mxu0 0.0
    %4460 = vmatpush1.msra.mxu0 0.0
    %4461 = vmatprep.subr.mxu0 0.0
    %4462 = vmatpush1.msra.mxu0 0.0
    %4463 = vmatprep.mubr.f32.mxu0 0.0
    %v4464 = vand.u32 %v4219, 4294901760
    %v4465 = vsub.f32 %v4219, %v4464
    %4466 = vmatmul.mubr.f32.gmra.mrb[0].mxu0 %v4465
    %v4467 = vpop.f32.mrb[0].mxu0
    %v4468 = vadd.f32 %v4388, %v4467
    %v4469 = vpop.f32.mrb[0].mxu0
    %4470 = vdwg.mxu0
    %4471 = vmatprep.subr.mxu0 0.0
    %v4472 = vand.u32 %v588, 4294901760
    %4473 = vmatpush1.msra.mxu0 %v4472
    %4474 = vmatprep.subr.mxu0 0.0
    %v4475 = vand.u32 %v589, 4294901760
    %4476 = vmatpush1.msra.mxu0 %v4475
    %4477 = vmatprep.subr.mxu0 0.0
    %v4478 = vand.u32 %v590, 4294901760
    %4479 = vmatpush1.msra.mxu0 %v4478
    %4480 = vmatprep.subr.mxu0 0.0
    %v4481 = vand.u32 %v591, 4294901760
    %4482 = vmatpush1.msra.mxu0 %v4481
    %4483 = vmatprep.subr.mxu0 0.0
    %4484 = vmatpush1.msra.mxu0 0.0
    %4485 = vmatprep.subr.mxu0 0.0
    %4486 = vmatpush1.msra.mxu0 0.0
    %4487 = vmatprep.subr.mxu0 0.0
    %4488 = vmatpush1.msra.mxu0 0.0
    %4489 = vmatprep.subr.mxu0 0.0
    %4490 = vmatpush1.msra.mxu0 0.0
    %4491 = vmatprep.subr.mxu0 0.0
    %4492 = vmatpush1.msra.mxu0 0.0
    %4493 = vmatprep.subr.mxu0 0.0
    %4494 = vmatpush1.msra.mxu0 0.0
    %4495 = vmatprep.subr.mxu0 0.0
    %4496 = vmatpush1.msra.mxu0 0.0
    %4497 = vmatprep.subr.mxu0 0.0
    %4498 = vmatpush1.msra.mxu0 0.0
    %4499 = vmatprep.subr.mxu0 0.0
    %4500 = vmatpush1.msra.mxu0 0.0
    %4501 = vmatprep.subr.mxu0 0.0
    %4502 = vmatpush1.msra.mxu0 0.0
    %4503 = vmatprep.subr.mxu0 0.0
    %4504 = vmatpush1.msra.mxu0 0.0
    %4505 = vmatprep.subr.mxu0 0.0
    %4506 = vmatpush1.msra.mxu0 0.0
    %4507 = vmatprep.subr.mxu0 0.0
    %4508 = vmatpush1.msra.mxu0 0.0
    %4509 = vmatprep.subr.mxu0 0.0
    %4510 = vmatpush1.msra.mxu0 0.0
    %4511 = vmatprep.subr.mxu0 0.0
    %4512 = vmatpush1.msra.mxu0 0.0
    %4513 = vmatprep.subr.mxu0 0.0
    %4514 = vmatpush1.msra.mxu0 0.0
    %4515 = vmatprep.subr.mxu0 0.0
    %4516 = vmatpush1.msra.mxu0 0.0
    %4517 = vmatprep.subr.mxu0 0.0
    %4518 = vmatpush1.msra.mxu0 0.0
    %4519 = vmatprep.subr.mxu0 0.0
    %4520 = vmatpush1.msra.mxu0 0.0
    %4521 = vmatprep.subr.mxu0 0.0
    %4522 = vmatpush1.msra.mxu0 0.0
    %4523 = vmatprep.subr.mxu0 0.0
    %4524 = vmatpush1.msra.mxu0 0.0
    %4525 = vmatprep.subr.mxu0 0.0
    %4526 = vmatpush1.msra.mxu0 0.0
    %4527 = vmatprep.subr.mxu0 0.0
    %4528 = vmatpush1.msra.mxu0 0.0
    %4529 = vmatprep.subr.mxu0 0.0
    %4530 = vmatpush1.msra.mxu0 0.0
    %4531 = vmatprep.subr.mxu0 0.0
    %4532 = vmatpush1.msra.mxu0 0.0
    %4533 = vmatprep.subr.mxu0 0.0
    %4534 = vmatpush1.msra.mxu0 0.0
    %4535 = vmatprep.subr.mxu0 0.0
    %4536 = vmatpush1.msra.mxu0 0.0
    %4537 = vmatprep.subr.mxu0 0.0
    %4538 = vmatpush1.msra.mxu0 0.0
    %4539 = vmatprep.mubr.f32.mxu0 0.0
    %v4540 = vand.u32 %v4219, 4294901760
    %v4541 = vsub.f32 %v4219, %v4540
    %v4542 = vand.u32 %v4541, 4294901760
    %4543 = vmatmul.mubr.f32.gmra.mrb[0].mxu0 %v4542
    %v4544 = vpop.f32.mrb[0].mxu0
    %v4545 = vadd.f32 %v4468, %v4544
    %v4546 = vpop.f32.mrb[0].mxu0
    %4547 = vdwg.mxu0
    %4548 = vmatprep.subr.mxu0 0.0
    %v4549 = vand.u32 %v588, 4294901760
    %v4550 = vsub.f32 %v588, %v4549
    %v4551 = vand.u32 %v4550, 4294901760
    %4552 = vmatpush1.msra.mxu0 %v4551
    %4553 = vmatprep.subr.mxu0 0.0
    %v4554 = vand.u32 %v589, 4294901760
    %v4555 = vsub.f32 %v589, %v4554
    %v4556 = vand.u32 %v4555, 4294901760
    %4557 = vmatpush1.msra.mxu0 %v4556
    %4558 = vmatprep.subr.mxu0 0.0
    %v4559 = vand.u32 %v590, 4294901760
    %v4560 = vsub.f32 %v590, %v4559
    %v4561 = vand.u32 %v4560, 4294901760
    %4562 = vmatpush1.msra.mxu0 %v4561
    %4563 = vmatprep.subr.mxu0 0.0
    %v4564 = vand.u32 %v591, 4294901760
    %v4565 = vsub.f32 %v591, %v4564
    %v4566 = vand.u32 %v4565, 4294901760
    %4567 = vmatpush1.msra.mxu0 %v4566
    %4568 = vmatprep.subr.mxu0 0.0
    %4569 = vmatpush1.msra.mxu0 0.0
    %4570 = vmatprep.subr.mxu0 0.0
    %4571 = vmatpush1.msra.mxu0 0.0
    %4572 = vmatprep.subr.mxu0 0.0
    %4573 = vmatpush1.msra.mxu0 0.0
    %4574 = vmatprep.subr.mxu0 0.0
    %4575 = vmatpush1.msra.mxu0 0.0
    %4576 = vmatprep.subr.mxu0 0.0
    %4577 = vmatpush1.msra.mxu0 0.0
    %4578 = vmatprep.subr.mxu0 0.0
    %4579 = vmatpush1.msra.mxu0 0.0
    %4580 = vmatprep.subr.mxu0 0.0
    %4581 = vmatpush1.msra.mxu0 0.0
    %4582 = vmatprep.subr.mxu0 0.0
    %4583 = vmatpush1.msra.mxu0 0.0
    %4584 = vmatprep.subr.mxu0 0.0
    %4585 = vmatpush1.msra.mxu0 0.0
    %4586 = vmatprep.subr.mxu0 0.0
    %4587 = vmatpush1.msra.mxu0 0.0
    %4588 = vmatprep.subr.mxu0 0.0
    %4589 = vmatpush1.msra.mxu0 0.0
    %4590 = vmatprep.subr.mxu0 0.0
    %4591 = vmatpush1.msra.mxu0 0.0
    %4592 = vmatprep.subr.mxu0 0.0
    %4593 = vmatpush1.msra.mxu0 0.0
    %4594 = vmatprep.subr.mxu0 0.0
    %4595 = vmatpush1.msra.mxu0 0.0
    %4596 = vmatprep.subr.mxu0 0.0
    %4597 = vmatpush1.msra.mxu0 0.0
    %4598 = vmatprep.subr.mxu0 0.0
    %4599 = vmatpush1.msra.mxu0 0.0
    %4600 = vmatprep.subr.mxu0 0.0
    %4601 = vmatpush1.msra.mxu0 0.0
    %4602 = vmatprep.subr.mxu0 0.0
    %4603 = vmatpush1.msra.mxu0 0.0
    %4604 = vmatprep.subr.mxu0 0.0
    %4605 = vmatpush1.msra.mxu0 0.0
    %4606 = vmatprep.subr.mxu0 0.0
    %4607 = vmatpush1.msra.mxu0 0.0
    %4608 = vmatprep.subr.mxu0 0.0
    %4609 = vmatpush1.msra.mxu0 0.0
    %4610 = vmatprep.subr.mxu0 0.0
    %4611 = vmatpush1.msra.mxu0 0.0
    %4612 = vmatprep.subr.mxu0 0.0
    %4613 = vmatpush1.msra.mxu0 0.0
    %4614 = vmatprep.subr.mxu0 0.0
    %4615 = vmatpush1.msra.mxu0 0.0
    %4616 = vmatprep.subr.mxu0 0.0
    %4617 = vmatpush1.msra.mxu0 0.0
    %4618 = vmatprep.subr.mxu0 0.0
    %4619 = vmatpush1.msra.mxu0 0.0
    %4620 = vmatprep.subr.mxu0 0.0
    %4621 = vmatpush1.msra.mxu0 0.0
    %4622 = vmatprep.subr.mxu0 0.0
    %4623 = vmatpush1.msra.mxu0 0.0
    %4624 = vmatprep.mubr.f32.mxu0 0.0
    %v4625 = vand.u32 %v4219, 4294901760
    %4626 = vmatmul.mubr.f32.gmra.mrb[0].mxu0 %v4625
    %v4627 = vpop.f32.mrb[0].mxu0
    %v4628 = vadd.f32 %v4545, %v4627
    %v4629 = vpop.f32.mrb[0].mxu0
    %4630 = vdwg.mxu0
    %4631 = vmatprep.subr.mxu0 0.0
    %v4632 = vand.u32 %v588, 4294901760
    %4633 = vmatpush1.msra.mxu0 %v4632
    %4634 = vmatprep.subr.mxu0 0.0
    %v4635 = vand.u32 %v589, 4294901760
    %4636 = vmatpush1.msra.mxu0 %v4635
    %4637 = vmatprep.subr.mxu0 0.0
    %v4638 = vand.u32 %v590, 4294901760
    %4639 = vmatpush1.msra.mxu0 %v4638
    %4640 = vmatprep.subr.mxu0 0.0
    %v4641 = vand.u32 %v591, 4294901760
    %4642 = vmatpush1.msra.mxu0 %v4641
    %4643 = vmatprep.subr.mxu0 0.0
    %4644 = vmatpush1.msra.mxu0 0.0
    %4645 = vmatprep.subr.mxu0 0.0
    %4646 = vmatpush1.msra.mxu0 0.0
    %4647 = vmatprep.subr.mxu0 0.0
    %4648 = vmatpush1.msra.mxu0 0.0
    %4649 = vmatprep.subr.mxu0 0.0
    %4650 = vmatpush1.msra.mxu0 0.0
    %4651 = vmatprep.subr.mxu0 0.0
    %4652 = vmatpush1.msra.mxu0 0.0
    %4653 = vmatprep.subr.mxu0 0.0
    %4654 = vmatpush1.msra.mxu0 0.0
    %4655 = vmatprep.subr.mxu0 0.0
    %4656 = vmatpush1.msra.mxu0 0.0
    %4657 = vmatprep.subr.mxu0 0.0
    %4658 = vmatpush1.msra.mxu0 0.0
    %4659 = vmatprep.subr.mxu0 0.0
    %4660 = vmatpush1.msra.mxu0 0.0
    %4661 = vmatprep.subr.mxu0 0.0
    %4662 = vmatpush1.msra.mxu0 0.0
    %4663 = vmatprep.subr.mxu0 0.0
    %4664 = vmatpush1.msra.mxu0 0.0
    %4665 = vmatprep.subr.mxu0 0.0
    %4666 = vmatpush1.msra.mxu0 0.0
    %4667 = vmatprep.subr.mxu0 0.0
    %4668 = vmatpush1.msra.mxu0 0.0
    %4669 = vmatprep.subr.mxu0 0.0
    %4670 = vmatpush1.msra.mxu0 0.0
    %4671 = vmatprep.subr.mxu0 0.0
    %4672 = vmatpush1.msra.mxu0 0.0
    %4673 = vmatprep.subr.mxu0 0.0
    %4674 = vmatpush1.msra.mxu0 0.0
    %4675 = vmatprep.subr.mxu0 0.0
    %4676 = vmatpush1.msra.mxu0 0.0
    %4677 = vmatprep.subr.mxu0 0.0
    %4678 = vmatpush1.msra.mxu0 0.0
    %4679 = vmatprep.subr.mxu0 0.0
    %4680 = vmatpush1.msra.mxu0 0.0
    %4681 = vmatprep.subr.mxu0 0.0
    %4682 = vmatpush1.msra.mxu0 0.0
    %4683 = vmatprep.subr.mxu0 0.0
    %4684 = vmatpush1.msra.mxu0 0.0
    %4685 = vmatprep.subr.mxu0 0.0
    %4686 = vmatpush1.msra.mxu0 0.0
    %4687 = vmatprep.subr.mxu0 0.0
    %4688 = vmatpush1.msra.mxu0 0.0
    %4689 = vmatprep.subr.mxu0 0.0
    %4690 = vmatpush1.msra.mxu0 0.0
    %4691 = vmatprep.subr.mxu0 0.0
    %4692 = vmatpush1.msra.mxu0 0.0
    %4693 = vmatprep.subr.mxu0 0.0
    %4694 = vmatpush1.msra.mxu0 0.0
    %4695 = vmatprep.subr.mxu0 0.0
    %4696 = vmatpush1.msra.mxu0 0.0
    %4697 = vmatprep.subr.mxu0 0.0
    %4698 = vmatpush1.msra.mxu0 0.0
    %4699 = vmatprep.mubr.f32.mxu0 0.0
    %v4700 = vand.u32 %v4219, 4294901760
    %4701 = vmatmul.mubr.f32.gmra.mrb[0].mxu0 %v4700
    %v4702 = vpop.f32.mrb[0].mxu0
    %v4703 = vadd.f32 %v4628, %v4702
    %v4704 = vpop.f32.mrb[0].mxu0
    %4705 = vdwg.mxu0
    %v4706 = vadd.f32 %v4218, %v4703
    %v4707 = vmul.f32 %v4706, 0.5
    %v4708 = vtanh.pop %v4707
    %v4709 = vadd.f32 %v4708, 1.0
    %v4710 = vmul.f32 %v4709, 0.5
    %v4711 = vtanh.pop %v4706
    %v4712 = vsel %vm596, %v4711, %v4710
    %v4713 = vmul.f32 %v4712, %v4206
    %4715 = vrot.lane.b32.xlu0 %v4712, 64
    %v4716 = vpop.permute.xlu0 %4715
    %v4718 = vmul.f32 %v4712, %v4716
    %4720 = vrot.lane.b32.xlu0 %v4718, 32
    %v4721 = vpop.permute.xlu0 %4720
    %v4723 = vadd.f32 %v4713, %v4721
    %v4724 = vtanh.pop %v4723
    %4726 = vrot.lane.b32.xlu0 %v4724, 64
    %v4727 = vpop.permute.xlu0 %4726
    %v4729 = vmul.f32 %v4712, %v4727
    %4731 = vrot.lane.b32.xlu0 %v4729, 32
    %v4732 = vpop.permute.xlu0 %4731
    %4734 = vst.msk [vmem:[#allocation3 + $0xe] sm:$0x3] %vm1114, %v4732
    %v4735 = vld [vmem:[#allocation3] sm:$0xff]
    %v4736 = vld [vmem:[#allocation3 + $0x8] sm:$0xff]
    %v4737 = vld [vmem:[%s4] sm:$0xff]
    %v4738 = vld [vmem:[%s4 + $0x8] sm:$0xff]
    %v4739 = vld [vmem:[%s4 + $0x10] sm:$0xff]
    %v4740 = vld [vmem:[%s4 + $0x18] sm:$0xff]
    %v4741 = vld [vmem:[%s5] sm:$0x1]
    %v4743 = vlaneseq
    %v4744 = vshrl.u32 %v4743, 7
    %v4745 = vsub.s32 0, %v4744
    %v4746 = vrot.slane %v4741, %v4745
    %v4749 = vsel %vm51, %v4735, 0
    %v4752 = vsel %vm51, %v4736, 0
    %4754 = vmatprep.subr.mxu0 0.0
    %v4755 = vand.u32 %v4737, 4294901760
    %4756 = vmatpush1.msra.mxu0 %v4755
    %4757 = vmatprep.subr.mxu0 0.0
    %v4758 = vand.u32 %v4738, 4294901760
    %4759 = vmatpush1.msra.mxu0 %v4758
    %4760 = vmatprep.subr.mxu0 0.0
    %v4761 = vand.u32 %v4739, 4294901760
    %4762 = vmatpush1.msra.mxu0 %v4761
    %4763 = vmatprep.subr.mxu0 0.0
    %v4764 = vand.u32 %v4740, 4294901760
    %4765 = vmatpush1.msra.mxu0 %v4764
    %4766 = vmatprep.subr.mxu0 0.0
    %4767 = vmatpush1.msra.mxu0 0.0
    %4768 = vmatprep.subr.mxu0 0.0
    %4769 = vmatpush1.msra.mxu0 0.0
    %4770 = vmatprep.subr.mxu0 0.0
    %4771 = vmatpush1.msra.mxu0 0.0
    %4772 = vmatprep.subr.mxu0 0.0
    %4773 = vmatpush1.msra.mxu0 0.0
    %4774 = vmatprep.subr.mxu0 0.0
    %4775 = vmatpush1.msra.mxu0 0.0
    %4776 = vmatprep.subr.mxu0 0.0
    %4777 = vmatpush1.msra.mxu0 0.0
    %4778 = vmatprep.subr.mxu0 0.0
    %4779 = vmatpush1.msra.mxu0 0.0
    %4780 = vmatprep.subr.mxu0 0.0
    %4781 = vmatpush1.msra.mxu0 0.0
    %4782 = vmatprep.subr.mxu0 0.0
    %4783 = vmatpush1.msra.mxu0 0.0
    %4784 = vmatprep.subr.mxu0 0.0
    %4785 = vmatpush1.msra.mxu0 0.0
    %4786 = vmatprep.subr.mxu0 0.0
    %4787 = vmatpush1.msra.mxu0 0.0
    %4788 = vmatprep.subr.mxu0 0.0
    %4789 = vmatpush1.msra.mxu0 0.0
    %4790 = vmatprep.subr.mxu0 0.0
    %4791 = vmatpush1.msra.mxu0 0.0
    %4792 = vmatprep.subr.mxu0 0.0
    %4793 = vmatpush1.msra.mxu0 0.0
    %4794 = vmatprep.subr.mxu0 0.0
    %4795 = vmatpush1.msra.mxu0 0.0
    %4796 = vmatprep.subr.mxu0 0.0
    %4797 = vmatpush1.msra.mxu0 0.0
    %4798 = vmatprep.subr.mxu0 0.0
    %4799 = vmatpush1.msra.mxu0 0.0
    %4800 = vmatprep.subr.mxu0 0.0
    %4801 = vmatpush1.msra.mxu0 0.0
    %4802 = vmatprep.subr.mxu0 0.0
    %4803 = vmatpush1.msra.mxu0 0.0
    %4804 = vmatprep.subr.mxu0 0.0
    %4805 = vmatpush1.msra.mxu0 0.0
    %4806 = vmatprep.subr.mxu0 0.0
    %4807 = vmatpush1.msra.mxu0 0.0
    %4808 = vmatprep.subr.mxu0 0.0
    %4809 = vmatpush1.msra.mxu0 0.0
    %4810 = vmatprep.subr.mxu0 0.0
    %4811 = vmatpush1.msra.mxu0 0.0
    %4812 = vmatprep.subr.mxu0 0.0
    %4813 = vmatpush1.msra.mxu0 0.0
    %4814 = vmatprep.subr.mxu0 0.0
    %4815 = vmatpush1.msra.mxu0 0.0
    %4816 = vmatprep.subr.mxu0 0.0
    %4817 = vmatpush1.msra.mxu0 0.0
    %4818 = vmatprep.subr.mxu0 0.0
    %4819 = vmatpush1.msra.mxu0 0.0
    %4820 = vmatprep.subr.mxu0 0.0
    %4821 = vmatpush1.msra.mxu0 0.0
    %4822 = vmatprep.mubr.f32.mxu0 0.0
    %v4823 = vand.u32 %v4749, 4294901760
    %v4824 = vsub.f32 %v4749, %v4823
    %v4825 = vand.u32 %v4824, 4294901760
    %v4826 = vsub.f32 %v4824, %v4825
    %v4827 = vand.u32 %v4826, 4294901760
    %4828 = vmatmul.mubr.f32.gmra.mrb[0].mxu0 %v4827
    %v4829 = vpop.f32.mrb[0].mxu0
    %v4830 = vadd.f32 %v4746, %v4829
    %v4831 = vpop.f32.mrb[0].mxu0
    %4832 = vmatprep.mubr.f32.mxu0 0.0
    %v4833 = vand.u32 %v4752, 4294901760
    %v4834 = vsub.f32 %v4752, %v4833
    %v4835 = vand.u32 %v4834, 4294901760
    %v4836 = vsub.f32 %v4834, %v4835
    %v4837 = vand.u32 %v4836, 4294901760
    %4838 = vmatmul.mubr.f32.gmra.mrb[0].mxu0 %v4837
    %v4839 = vpop.f32.mrb[0].mxu0
    %v4840 = vadd.f32 %v4746, %v4839
    %v4841 = vpop.f32.mrb[0].mxu0
    %4842 = vdwg.mxu0
    %4843 = vmatprep.subr.mxu0 0.0
    %v4844 = vand.u32 %v4737, 4294901760
    %v4845 = vsub.f32 %v4737, %v4844
    %v4846 = vand.u32 %v4845, 4294901760
    %v4847 = vsub.f32 %v4845, %v4846
    %v4848 = vand.u32 %v4847, 4294901760
    %4849 = vmatpush1.msra.mxu0 %v4848
    %4850 = vmatprep.subr.mxu0 0.0
    %v4851 = vand.u32 %v4738, 4294901760
    %v4852 = vsub.f32 %v4738, %v4851
    %v4853 = vand.u32 %v4852, 4294901760
    %v4854 = vsub.f32 %v4852, %v4853
    %v4855 = vand.u32 %v4854, 4294901760
    %4856 = vmatpush1.msra.mxu0 %v4855
    %4857 = vmatprep.subr.mxu0 0.0
    %v4858 = vand.u32 %v4739, 4294901760
    %v4859 = vsub.f32 %v4739, %v4858
    %v4860 = vand.u32 %v4859, 4294901760
    %v4861 = vsub.f32 %v4859, %v4860
    %v4862 = vand.u32 %v4861, 4294901760
    %4863 = vmatpush1.msra.mxu0 %v4862
    %4864 = vmatprep.subr.mxu0 0.0
    %v4865 = vand.u32 %v4740, 4294901760
    %v4866 = vsub.f32 %v4740, %v4865
    %v4867 = vand.u32 %v4866, 4294901760
    %v4868 = vsub.f32 %v4866, %v4867
    %v4869 = vand.u32 %v4868, 4294901760
    %4870 = vmatpush1.msra.mxu0 %v4869
    %4871 = vmatprep.subr.mxu0 0.0
    %4872 = vmatpush1.msra.mxu0 0.0
    %4873 = vmatprep.subr.mxu0 0.0
    %4874 = vmatpush1.msra.mxu0 0.0
    %4875 = vmatprep.subr.mxu0 0.0
    %4876 = vmatpush1.msra.mxu0 0.0
    %4877 = vmatprep.subr.mxu0 0.0
    %4878 = vmatpush1.msra.mxu0 0.0
    %4879 = vmatprep.subr.mxu0 0.0
    %4880 = vmatpush1.msra.mxu0 0.0
    %4881 = vmatprep.subr.mxu0 0.0
    %4882 = vmatpush1.msra.mxu0 0.0
    %4883 = vmatprep.subr.mxu0 0.0
    %4884 = vmatpush1.msra.mxu0 0.0
    %4885 = vmatprep.subr.mxu0 0.0
    %4886 = vmatpush1.msra.mxu0 0.0
    %4887 = vmatprep.subr.mxu0 0.0
    %4888 = vmatpush1.msra.mxu0 0.0
    %4889 = vmatprep.subr.mxu0 0.0
    %4890 = vmatpush1.msra.mxu0 0.0
    %4891 = vmatprep.subr.mxu0 0.0
    %4892 = vmatpush1.msra.mxu0 0.0
    %4893 = vmatprep.subr.mxu0 0.0
    %4894 = vmatpush1.msra.mxu0 0.0
    %4895 = vmatprep.subr.mxu0 0.0
    %4896 = vmatpush1.msra.mxu0 0.0
    %4897 = vmatprep.subr.mxu0 0.0
    %4898 = vmatpush1.msra.mxu0 0.0
    %4899 = vmatprep.subr.mxu0 0.0
    %4900 = vmatpush1.msra.mxu0 0.0
    %4901 = vmatprep.subr.mxu0 0.0
    %4902 = vmatpush1.msra.mxu0 0.0
    %4903 = vmatprep.subr.mxu0 0.0
    %4904 = vmatpush1.msra.mxu0 0.0
    %4905 = vmatprep.subr.mxu0 0.0
    %4906 = vmatpush1.msra.mxu0 0.0
    %4907 = vmatprep.subr.mxu0 0.0
    %4908 = vmatpush1.msra.mxu0 0.0
    %4909 = vmatprep.subr.mxu0 0.0
    %4910 = vmatpush1.msra.mxu0 0.0
    %4911 = vmatprep.subr.mxu0 0.0
    %4912 = vmatpush1.msra.mxu0 0.0
    %4913 = vmatprep.subr.mxu0 0.0
    %4914 = vmatpush1.msra.mxu0 0.0
    %4915 = vmatprep.subr.mxu0 0.0
    %4916 = vmatpush1.msra.mxu0 0.0
    %4917 = vmatprep.subr.mxu0 0.0
    %4918 = vmatpush1.msra.mxu0 0.0
    %4919 = vmatprep.subr.mxu0 0.0
    %4920 = vmatpush1.msra.mxu0 0.0
    %4921 = vmatprep.subr.mxu0 0.0
    %4922 = vmatpush1.msra.mxu0 0.0
    %4923 = vmatprep.subr.mxu0 0.0
    %4924 = vmatpush1.msra.mxu0 0.0
    %4925 = vmatprep.subr.mxu0 0.0
    %4926 = vmatpush1.msra.mxu0 0.0
    %4927 = vmatprep.mubr.f32.mxu0 0.0
    %v4928 = vand.u32 %v4749, 4294901760
    %4929 = vmatmul.mubr.f32.gmra.mrb[0].mxu0 %v4928
    %v4930 = vpop.f32.mrb[0].mxu0
    %v4931 = vadd.f32 %v4830, %v4930
    %v4932 = vpop.f32.mrb[0].mxu0
    %4933 = vmatprep.mubr.f32.mxu0 0.0
    %v4934 = vand.u32 %v4752, 4294901760
    %4935 = vmatmul.mubr.f32.gmra.mrb[0].mxu0 %v4934
    %v4936 = vpop.f32.mrb[0].mxu0
    %v4937 = vadd.f32 %v4840, %v4936
    %v4938 = vpop.f32.mrb[0].mxu0
    %4939 = vdwg.mxu0
    %4940 = vmatprep.subr.mxu0 0.0
    %v4941 = vand.u32 %v4737, 4294901760
    %v4942 = vsub.f32 %v4737, %v4941
    %4943 = vmatpush1.msra.mxu0 %v4942
    %4944 = vmatprep.subr.mxu0 0.0
    %v4945 = vand.u32 %v4738, 4294901760
    %v4946 = vsub.f32 %v4738, %v4945
    %4947 = vmatpush1.msra.mxu0 %v4946
    %4948 = vmatprep.subr.mxu0 0.0
    %v4949 = vand.u32 %v4739, 4294901760
    %v4950 = vsub.f32 %v4739, %v4949
    %4951 = vmatpush1.msra.mxu0 %v4950
    %4952 = vmatprep.subr.mxu0 0.0
    %v4953 = vand.u32 %v4740, 4294901760
    %v4954 = vsub.f32 %v4740, %v4953
    %4955 = vmatpush1.msra.mxu0 %v4954
    %4956 = vmatprep.subr.mxu0 0.0
    %4957 = vmatpush1.msra.mxu0 0.0
    %4958 = vmatprep.subr.mxu0 0.0
    %4959 = vmatpush1.msra.mxu0 0.0
    %4960 = vmatprep.subr.mxu0 0.0
    %4961 = vmatpush1.msra.mxu0 0.0
    %4962 = vmatprep.subr.mxu0 0.0
    %4963 = vmatpush1.msra.mxu0 0.0
    %4964 = vmatprep.subr.mxu0 0.0
    %4965 = vmatpush1.msra.mxu0 0.0
    %4966 = vmatprep.subr.mxu0 0.0
    %4967 = vmatpush1.msra.mxu0 0.0
    %4968 = vmatprep.subr.mxu0 0.0
    %4969 = vmatpush1.msra.mxu0 0.0
    %4970 = vmatprep.subr.mxu0 0.0
    %4971 = vmatpush1.msra.mxu0 0.0
    %4972 = vmatprep.subr.mxu0 0.0
    %4973 = vmatpush1.msra.mxu0 0.0
    %4974 = vmatprep.subr.mxu0 0.0
    %4975 = vmatpush1.msra.mxu0 0.0
    %4976 = vmatprep.subr.mxu0 0.0
    %4977 = vmatpush1.msra.mxu0 0.0
    %4978 = vmatprep.subr.mxu0 0.0
    %4979 = vmatpush1.msra.mxu0 0.0
    %4980 = vmatprep.subr.mxu0 0.0
    %4981 = vmatpush1.msra.mxu0 0.0
    %4982 = vmatprep.subr.mxu0 0.0
    %4983 = vmatpush1.msra.mxu0 0.0
    %4984 = vmatprep.subr.mxu0 0.0
    %4985 = vmatpush1.msra.mxu0 0.0
    %4986 = vmatprep.subr.mxu0 0.0
    %4987 = vmatpush1.msra.mxu0 0.0
    %4988 = vmatprep.subr.mxu0 0.0
    %4989 = vmatpush1.msra.mxu0 0.0
    %4990 = vmatprep.subr.mxu0 0.0
    %4991 = vmatpush1.msra.mxu0 0.0
    %4992 = vmatprep.subr.mxu0 0.0
    %4993 = vmatpush1.msra.mxu0 0.0
    %4994 = vmatprep.subr.mxu0 0.0
    %4995 = vmatpush1.msra.mxu0 0.0
    %4996 = vmatprep.subr.mxu0 0.0
    %4997 = vmatpush1.msra.mxu0 0.0
    %4998 = vmatprep.subr.mxu0 0.0
    %4999 = vmatpush1.msra.mxu0 0.0
    %5000 = vmatprep.subr.mxu0 0.0
    %5001 = vmatpush1.msra.mxu0 0.0
    %5002 = vmatprep.subr.mxu0 0.0
    %5003 = vmatpush1.msra.mxu0 0.0
    %5004 = vmatprep.subr.mxu0 0.0
    %5005 = vmatpush1.msra.mxu0 0.0
    %5006 = vmatprep.subr.mxu0 0.0
    %5007 = vmatpush1.msra.mxu0 0.0
    %5008 = vmatprep.subr.mxu0 0.0
    %5009 = vmatpush1.msra.mxu0 0.0
    %5010 = vmatprep.subr.mxu0 0.0
    %5011 = vmatpush1.msra.mxu0 0.0
    %5012 = vmatprep.mubr.f32.mxu0 0.0
    %v5013 = vand.u32 %v4749, 4294901760
    %v5014 = vsub.f32 %v4749, %v5013
    %5015 = vmatmul.mubr.f32.gmra.mrb[0].mxu0 %v5014
    %v5016 = vpop.f32.mrb[0].mxu0
    %v5017 = vadd.f32 %v4931, %v5016
    %v5018 = vpop.f32.mrb[0].mxu0
    %5019 = vmatprep.mubr.f32.mxu0 0.0
    %v5020 = vand.u32 %v4752, 4294901760
    %v5021 = vsub.f32 %v4752, %v5020
    %5022 = vmatmul.mubr.f32.gmra.mrb[0].mxu0 %v5021
    %v5023 = vpop.f32.mrb[0].mxu0
    %v5024 = vadd.f32 %v4937, %v5023
    %v5025 = vpop.f32.mrb[0].mxu0
    %5026 = vdwg.mxu0
    %5027 = vmatprep.subr.mxu0 0.0
    %v5028 = vand.u32 %v4737, 4294901760
    %5029 = vmatpush1.msra.mxu0 %v5028
    %5030 = vmatprep.subr.mxu0 0.0
    %v5031 = vand.u32 %v4738, 4294901760
    %5032 = vmatpush1.msra.mxu0 %v5031
    %5033 = vmatprep.subr.mxu0 0.0
    %v5034 = vand.u32 %v4739, 4294901760
    %5035 = vmatpush1.msra.mxu0 %v5034
    %5036 = vmatprep.subr.mxu0 0.0
    %v5037 = vand.u32 %v4740, 4294901760
    %5038 = vmatpush1.msra.mxu0 %v5037
    %5039 = vmatprep.subr.mxu0 0.0
    %5040 = vmatpush1.msra.mxu0 0.0
    %5041 = vmatprep.subr.mxu0 0.0
    %5042 = vmatpush1.msra.mxu0 0.0
    %5043 = vmatprep.subr.mxu0 0.0
    %5044 = vmatpush1.msra.mxu0 0.0
    %5045 = vmatprep.subr.mxu0 0.0
    %5046 = vmatpush1.msra.mxu0 0.0
    %5047 = vmatprep.subr.mxu0 0.0
    %5048 = vmatpush1.msra.mxu0 0.0
    %5049 = vmatprep.subr.mxu0 0.0
    %5050 = vmatpush1.msra.mxu0 0.0
    %5051 = vmatprep.subr.mxu0 0.0
    %5052 = vmatpush1.msra.mxu0 0.0
    %5053 = vmatprep.subr.mxu0 0.0
    %5054 = vmatpush1.msra.mxu0 0.0
    %5055 = vmatprep.subr.mxu0 0.0
    %5056 = vmatpush1.msra.mxu0 0.0
    %5057 = vmatprep.subr.mxu0 0.0
    %5058 = vmatpush1.msra.mxu0 0.0
    %5059 = vmatprep.subr.mxu0 0.0
    %5060 = vmatpush1.msra.mxu0 0.0
    %5061 = vmatprep.subr.mxu0 0.0
    %5062 = vmatpush1.msra.mxu0 0.0
    %5063 = vmatprep.subr.mxu0 0.0
    %5064 = vmatpush1.msra.mxu0 0.0
    %5065 = vmatprep.subr.mxu0 0.0
    %5066 = vmatpush1.msra.mxu0 0.0
    %5067 = vmatprep.subr.mxu0 0.0
    %5068 = vmatpush1.msra.mxu0 0.0
    %5069 = vmatprep.subr.mxu0 0.0
    %5070 = vmatpush1.msra.mxu0 0.0
    %5071 = vmatprep.subr.mxu0 0.0
    %5072 = vmatpush1.msra.mxu0 0.0
    %5073 = vmatprep.subr.mxu0 0.0
    %5074 = vmatpush1.msra.mxu0 0.0
    %5075 = vmatprep.subr.mxu0 0.0
    %5076 = vmatpush1.msra.mxu0 0.0
    %5077 = vmatprep.subr.mxu0 0.0
    %5078 = vmatpush1.msra.mxu0 0.0
    %5079 = vmatprep.subr.mxu0 0.0
    %5080 = vmatpush1.msra.mxu0 0.0
    %5081 = vmatprep.subr.mxu0 0.0
    %5082 = vmatpush1.msra.mxu0 0.0
    %5083 = vmatprep.subr.mxu0 0.0
    %5084 = vmatpush1.msra.mxu0 0.0
    %5085 = vmatprep.subr.mxu0 0.0
    %5086 = vmatpush1.msra.mxu0 0.0
    %5087 = vmatprep.subr.mxu0 0.0
    %5088 = vmatpush1.msra.mxu0 0.0
    %5089 = vmatprep.subr.mxu0 0.0
    %5090 = vmatpush1.msra.mxu0 0.0
    %5091 = vmatprep.subr.mxu0 0.0
    %5092 = vmatpush1.msra.mxu0 0.0
    %5093 = vmatprep.subr.mxu0 0.0
    %5094 = vmatpush1.msra.mxu0 0.0
    %5095 = vmatprep.mubr.f32.mxu0 0.0
    %v5096 = vand.u32 %v4749, 4294901760
    %v5097 = vsub.f32 %v4749, %v5096
    %v5098 = vand.u32 %v5097, 4294901760
    %5099 = vmatmul.mubr.f32.gmra.mrb[0].mxu0 %v5098
    %v5100 = vpop.f32.mrb[0].mxu0
    %v5101 = vadd.f32 %v5017, %v5100
    %v5102 = vpop.f32.mrb[0].mxu0
    %5103 = vmatprep.mubr.f32.mxu0 0.0
    %v5104 = vand.u32 %v4752, 4294901760
    %v5105 = vsub.f32 %v4752, %v5104
    %v5106 = vand.u32 %v5105, 4294901760
    %5107 = vmatmul.mubr.f32.gmra.mrb[0].mxu0 %v5106
    %v5108 = vpop.f32.mrb[0].mxu0
    %v5109 = vadd.f32 %v5024, %v5108
    %v5110 = vpop.f32.mrb[0].mxu0
    %5111 = vdwg.mxu0
    %5112 = vmatprep.subr.mxu0 0.0
    %v5113 = vand.u32 %v4737, 4294901760
    %v5114 = vsub.f32 %v4737, %v5113
    %v5115 = vand.u32 %v5114, 4294901760
    %5116 = vmatpush1.msra.mxu0 %v5115
    %5117 = vmatprep.subr.mxu0 0.0
    %v5118 = vand.u32 %v4738, 4294901760
    %v5119 = vsub.f32 %v4738, %v5118
    %v5120 = vand.u32 %v5119, 4294901760
    %5121 = vmatpush1.msra.mxu0 %v5120
    %5122 = vmatprep.subr.mxu0 0.0
    %v5123 = vand.u32 %v4739, 4294901760
    %v5124 = vsub.f32 %v4739, %v5123
    %v5125 = vand.u32 %v5124, 4294901760
    %5126 = vmatpush1.msra.mxu0 %v5125
    %5127 = vmatprep.subr.mxu0 0.0
    %v5128 = vand.u32 %v4740, 4294901760
    %v5129 = vsub.f32 %v4740, %v5128
    %v5130 = vand.u32 %v5129, 4294901760
    %5131 = vmatpush1.msra.mxu0 %v5130
    %5132 = vmatprep.subr.mxu0 0.0
    %5133 = vmatpush1.msra.mxu0 0.0
    %5134 = vmatprep.subr.mxu0 0.0
    %5135 = vmatpush1.msra.mxu0 0.0
    %5136 = vmatprep.subr.mxu0 0.0
    %5137 = vmatpush1.msra.mxu0 0.0
    %5138 = vmatprep.subr.mxu0 0.0
    %5139 = vmatpush1.msra.mxu0 0.0
    %5140 = vmatprep.subr.mxu0 0.0
    %5141 = vmatpush1.msra.mxu0 0.0
    %5142 = vmatprep.subr.mxu0 0.0
    %5143 = vmatpush1.msra.mxu0 0.0
    %5144 = vmatprep.subr.mxu0 0.0
    %5145 = vmatpush1.msra.mxu0 0.0
    %5146 = vmatprep.subr.mxu0 0.0
    %5147 = vmatpush1.msra.mxu0 0.0
    %5148 = vmatprep.subr.mxu0 0.0
    %5149 = vmatpush1.msra.mxu0 0.0
    %5150 = vmatprep.subr.mxu0 0.0
    %5151 = vmatpush1.msra.mxu0 0.0
    %5152 = vmatprep.subr.mxu0 0.0
    %5153 = vmatpush1.msra.mxu0 0.0
    %5154 = vmatprep.subr.mxu0 0.0
    %5155 = vmatpush1.msra.mxu0 0.0
    %5156 = vmatprep.subr.mxu0 0.0
    %5157 = vmatpush1.msra.mxu0 0.0
    %5158 = vmatprep.subr.mxu0 0.0
    %5159 = vmatpush1.msra.mxu0 0.0
    %5160 = vmatprep.subr.mxu0 0.0
    %5161 = vmatpush1.msra.mxu0 0.0
    %5162 = vmatprep.subr.mxu0 0.0
    %5163 = vmatpush1.msra.mxu0 0.0
    %5164 = vmatprep.subr.mxu0 0.0
    %5165 = vmatpush1.msra.mxu0 0.0
    %5166 = vmatprep.subr.mxu0 0.0
    %5167 = vmatpush1.msra.mxu0 0.0
    %5168 = vmatprep.subr.mxu0 0.0
    %5169 = vmatpush1.msra.mxu0 0.0
    %5170 = vmatprep.subr.mxu0 0.0
    %5171 = vmatpush1.msra.mxu0 0.0
    %5172 = vmatprep.subr.mxu0 0.0
    %5173 = vmatpush1.msra.mxu0 0.0
    %5174 = vmatprep.subr.mxu0 0.0
    %5175 = vmatpush1.msra.mxu0 0.0
    %5176 = vmatprep.subr.mxu0 0.0
    %5177 = vmatpush1.msra.mxu0 0.0
    %5178 = vmatprep.subr.mxu0 0.0
    %5179 = vmatpush1.msra.mxu0 0.0
    %5180 = vmatprep.subr.mxu0 0.0
    %5181 = vmatpush1.msra.mxu0 0.0
    %5182 = vmatprep.subr.mxu0 0.0
    %5183 = vmatpush1.msra.mxu0 0.0
    %5184 = vmatprep.subr.mxu0 0.0
    %5185 = vmatpush1.msra.mxu0 0.0
    %5186 = vmatprep.subr.mxu0 0.0
    %5187 = vmatpush1.msra.mxu0 0.0
    %5188 = vmatprep.mubr.f32.mxu0 0.0
    %v5189 = vand.u32 %v4749, 4294901760
    %5190 = vmatmul.mubr.f32.gmra.mrb[0].mxu0 %v5189
    %v5191 = vpop.f32.mrb[0].mxu0
    %v5192 = vadd.f32 %v5101, %v5191
    %v5193 = vpop.f32.mrb[0].mxu0
    %5194 = vmatprep.mubr.f32.mxu0 0.0
    %v5195 = vand.u32 %v4752, 4294901760
    %5196 = vmatmul.mubr.f32.gmra.mrb[0].mxu0 %v5195
    %v5197 = vpop.f32.mrb[0].mxu0
    %v5198 = vadd.f32 %v5109, %v5197
    %v5199 = vpop.f32.mrb[0].mxu0
    %5200 = vdwg.mxu0
    %5201 = vmatprep.subr.mxu0 0.0
    %v5202 = vand.u32 %v4737, 4294901760
    %5203 = vmatpush1.msra.mxu0 %v5202
    %5204 = vmatprep.subr.mxu0 0.0
    %v5205 = vand.u32 %v4738, 4294901760
    %5206 = vmatpush1.msra.mxu0 %v5205
    %5207 = vmatprep.subr.mxu0 0.0
    %v5208 = vand.u32 %v4739, 4294901760
    %5209 = vmatpush1.msra.mxu0 %v5208
    %5210 = vmatprep.subr.mxu0 0.0
    %v5211 = vand.u32 %v4740, 4294901760
    %5212 = vmatpush1.msra.mxu0 %v5211
    %5213 = vmatprep.subr.mxu0 0.0
    %5214 = vmatpush1.msra.mxu0 0.0
    %5215 = vmatprep.subr.mxu0 0.0
    %5216 = vmatpush1.msra.mxu0 0.0
    %5217 = vmatprep.subr.mxu0 0.0
    %5218 = vmatpush1.msra.mxu0 0.0
    %5219 = vmatprep.subr.mxu0 0.0
    %5220 = vmatpush1.msra.mxu0 0.0
    %5221 = vmatprep.subr.mxu0 0.0
    %5222 = vmatpush1.msra.mxu0 0.0
    %5223 = vmatprep.subr.mxu0 0.0
    %5224 = vmatpush1.msra.mxu0 0.0
    %5225 = vmatprep.subr.mxu0 0.0
    %5226 = vmatpush1.msra.mxu0 0.0
    %5227 = vmatprep.subr.mxu0 0.0
    %5228 = vmatpush1.msra.mxu0 0.0
    %5229 = vmatprep.subr.mxu0 0.0
    %5230 = vmatpush1.msra.mxu0 0.0
    %5231 = vmatprep.subr.mxu0 0.0
    %5232 = vmatpush1.msra.mxu0 0.0
    %5233 = vmatprep.subr.mxu0 0.0
    %5234 = vmatpush1.msra.mxu0 0.0
    %5235 = vmatprep.subr.mxu0 0.0
    %5236 = vmatpush1.msra.mxu0 0.0
    %5237 = vmatprep.subr.mxu0 0.0
    %5238 = vmatpush1.msra.mxu0 0.0
    %5239 = vmatprep.subr.mxu0 0.0
    %5240 = vmatpush1.msra.mxu0 0.0
    %5241 = vmatprep.subr.mxu0 0.0
    %5242 = vmatpush1.msra.mxu0 0.0
    %5243 = vmatprep.subr.mxu0 0.0
    %5244 = vmatpush1.msra.mxu0 0.0
    %5245 = vmatprep.subr.mxu0 0.0
    %5246 = vmatpush1.msra.mxu0 0.0
    %5247 = vmatprep.subr.mxu0 0.0
    %5248 = vmatpush1.msra.mxu0 0.0
    %5249 = vmatprep.subr.mxu0 0.0
    %5250 = vmatpush1.msra.mxu0 0.0
    %5251 = vmatprep.subr.mxu0 0.0
    %5252 = vmatpush1.msra.mxu0 0.0
    %5253 = vmatprep.subr.mxu0 0.0
    %5254 = vmatpush1.msra.mxu0 0.0
    %5255 = vmatprep.subr.mxu0 0.0
    %5256 = vmatpush1.msra.mxu0 0.0
    %5257 = vmatprep.subr.mxu0 0.0
    %5258 = vmatpush1.msra.mxu0 0.0
    %5259 = vmatprep.subr.mxu0 0.0
    %5260 = vmatpush1.msra.mxu0 0.0
    %5261 = vmatprep.subr.mxu0 0.0
    %5262 = vmatpush1.msra.mxu0 0.0
    %5263 = vmatprep.subr.mxu0 0.0
    %5264 = vmatpush1.msra.mxu0 0.0
    %5265 = vmatprep.subr.mxu0 0.0
    %5266 = vmatpush1.msra.mxu0 0.0
    %5267 = vmatprep.subr.mxu0 0.0
    %5268 = vmatpush1.msra.mxu0 0.0
    %5269 = vmatprep.mubr.f32.mxu0 0.0
    %v5270 = vand.u32 %v4749, 4294901760
    %5271 = vmatmul.mubr.f32.gmra.mrb[0].mxu0 %v5270
    %v5272 = vpop.f32.mrb[0].mxu0
    %v5273 = vadd.f32 %v5192, %v5272
    %v5274 = vpop.f32.mrb[0].mxu0
    %5275 = vmatprep.mubr.f32.mxu0 0.0
    %v5276 = vand.u32 %v4752, 4294901760
    %5277 = vmatmul.mubr.f32.gmra.mrb[0].mxu0 %v5276
    %v5278 = vpop.f32.mrb[0].mxu0
    %v5279 = vadd.f32 %v5198, %v5278
    %v5280 = vpop.f32.mrb[0].mxu0
    %5281 = vdwg.mxu0
    %vm5282 = vcmask 130048
    %5283 = vst.msk [vmem:[#allocation7] sm:$0xff] %vm5282, %v5273
    %5284 = vst.msk [vmem:[#allocation7 + $0x8] sm:$0xff] %vm5282, %v5279
    // Predicated region
    $region30: #{decoder_block_apply.1} parent=1 // pred_check
      _
    $region31: #{decoder_block_apply.1} parent=1 // pred_check_branch
      %5286 = sbr.rel (0) target = $region33
    $region32: #{decoder_block_apply.1} parent=1 // pred_region
      %s5288 = ssub.s32 256, 256
      %5289 = vsyncadd [#allocation6], %s5288
      %s5290 = sshll.u32 [#allocation7], 4
      %s5291 = int_to_ptr.vmem [resolvable:$true] %s5290
      %5296 = dma.vmem_to_hbm [thread:$0]  %s5291, 256, %s6, [#allocation6], 128, 128, 8
    $region33: #{decoder_block_apply.1} parent=1 // pred_fallthru
      _
    // Predicated region
    $region34: #{decoder_block_apply.1} parent=1 // pred_check
      _
    $region35: #{decoder_block_apply.1} parent=1 // pred_check_branch
      %5298 = sbr.rel (0) target = $region37
    $region36: #{decoder_block_apply.1} parent=1 // pred_region
      %5299 = dma.done [#allocation6], 256
    $region37: #{decoder_block_apply.1} parent=1 // pred_fallthru
      _
    %5300 = vsyncpa [#allocation5], 1
    %5301 = vsyncpa [#allocation6], 1

</llo_original>
